<compile_context>
chip_gen: v6e
topology: v6e:2x2x1
jax: 0.10.0
libtpu: 0.0.40
codegen_flags: <defaults>
</compile_context>

<pallas_src>
import jax
import jax.numpy as jnp
from jax.experimental import pallas as pl
from jax.experimental.pallas import tpu as pltpu

# ----- config consistent with the module (TransformerArgs / BaseConfig) -----
DICT_SIZE = 64      # BaseConfig.dict_size
D_MODEL   = 32      # transformer_args.d_model
N_HEADS   = 4
D_HEAD    = D_MODEL // N_HEADS
D_FF      = 64
N_BLOCKS  = 2       # transformer_args.num_blocks
SEQ       = 8       # transformer_args.max_input_seq
BATCH     = 2
LN_EPS    = 1e-5
NEG_INF   = -1e30
ATTN_SCALE = 1.0 / (D_HEAD ** 0.5)


# ----------------------------- fused Pallas kernel -----------------------------

def _fused_lm_kernel(x_ref,
                     ln1_g_ref, ln1_b_ref, w_qkv_ref, b_qkv_ref,
                     wo_ref, bo_ref, ln2_g_ref, ln2_b_ref,
                     w1_ref, b1_ref, w2_ref, b2_ref,
                     w_out_ref, b_out_ref,
                     o_ref,
                     qkv_scr, attn_scr):
    """One batch element per grid step; the whole forward stays in VMEM/vregs."""
    x = x_ref[...].astype(jnp.float32)                         # [S, D]

    # Causal mask: built once, reused by every head and every block.
    row = jax.lax.broadcasted_iota(jnp.int32, (SEQ, SEQ), 0)
    col = jax.lax.broadcasted_iota(jnp.int32, (SEQ, SEQ), 1)
    causal = col <= row

    def layer_norm(h, g, b):
        mean = jnp.mean(h, axis=-1, keepdims=True)
        var = jnp.mean(jnp.square(h - mean), axis=-1, keepdims=True)
        return (h - mean) * jax.lax.rsqrt(var + LN_EPS) * g + b

    for blk in range(N_BLOCKS):                                 # static unroll (2 blocks)
        # ---- self-attention sub-layer (pre-norm) ----
        h = layer_norm(x, ln1_g_ref[blk], ln1_b_ref[blk])       # [S, D]
        # Fused QKV: one lane-dense [S, D] x [D, 3D] matmul.
        qkv_scr[...] = (jnp.dot(h, w_qkv_ref[blk],
                                preferred_element_type=jnp.float32)
                        + b_qkv_ref[blk])                       # [S, 3D]

        for hd in range(N_HEADS):                               # static unroll (4 heads)
            lo = hd * D_HEAD
            q = qkv_scr[:, lo:lo + D_HEAD]                      # [S, Dh]
            k = qkv_scr[:, D_MODEL + lo:D_MODEL + lo + D_HEAD]
            v = qkv_scr[:, 2 * D_MODEL + lo:2 * D_MODEL + lo + D_HEAD]
            # scores = q @ k^T (contract last dims, no explicit transpose)
            s = jax.lax.dot_general(q, k, (((1,), (1,)), ((), ())),
                                    preferred_element_type=jnp.float32) * ATTN_SCALE
            s = jnp.where(causal, s, NEG_INF)                   # causal mask
            m = jnp.max(s, axis=-1, keepdims=True)
            p = jnp.exp(s - m)
            p = p / jnp.sum(p, axis=-1, keepdims=True)
            attn_scr[:, lo:lo + D_HEAD] = jnp.dot(
                p, v, preferred_element_type=jnp.float32)

        x = x + jnp.dot(attn_scr[...], wo_ref[blk],
                        preferred_element_type=jnp.float32) + bo_ref[blk]

        # ---- feed-forward sub-layer (pre-norm) ----
        h = layer_norm(x, ln2_g_ref[blk], ln2_b_ref[blk])
        h = jnp.dot(h, w1_ref[blk], preferred_element_type=jnp.float32) + b1_ref[blk]
        h = jnp.maximum(h, 0.0)                                 # ReLU
        x = x + jnp.dot(h, w2_ref[blk], preferred_element_type=jnp.float32) + b2_ref[blk]

    # ---- output head on the last token (Linear + Softmax) ----
    attn_scr[...] = x                                           # reuse scratch: ref-slice last row
    last = attn_scr[SEQ - 1:SEQ, :]                             # [1, D]
    logits = jnp.dot(last, w_out_ref[...],
                     preferred_element_type=jnp.float32) + b_out_ref[...]
    m = jnp.max(logits, axis=-1, keepdims=True)
    e = jnp.exp(logits - m)
    o_ref[...] = (e / jnp.sum(e, axis=-1, keepdims=True)).astype(o_ref.dtype)


def _resident_spec(a):
    """Whole-array block with a constant index map -> weight stays resident in VMEM."""
    ndim = a.ndim
    return pl.BlockSpec(a.shape, lambda b: (0,) * ndim)


def roodecat_lm_forward(params, tokens):
    # tokens=True path: embedding lookup (gather) stays in plain JAX/XLA glue.
    x = jnp.take(params['embedding'], tokens.astype(jnp.int32), axis=0)   # [B, S, D]
    B, S, D = x.shape
    blk = params['blocks']

    weight_args = (blk['ln1_g'], blk['ln1_b'], blk['w_qkv'], blk['b_qkv'],
                   blk['wo'], blk['bo'], blk['ln2_g'], blk['ln2_b'],
                   blk['w1'], blk['b1'], blk['w2'], blk['b2'],
                   params['w_out'], params['b_out'])

    probs = pl.pallas_call(
        _fused_lm_kernel,
        out_shape=jax.ShapeDtypeStruct((B, 1, DICT_SIZE), x.dtype),
        grid=(B,),
        in_specs=[pl.BlockSpec((None, S, D), lambda b: (b, 0, 0))]
                 + [_resident_spec(a) for a in weight_args],
        out_specs=pl.BlockSpec((None, 1, DICT_SIZE), lambda b: (b, 0, 0)),
        scratch_shapes=[pltpu.VMEM((SEQ, 3 * D_MODEL), jnp.float32),
                        pltpu.VMEM((SEQ, D_MODEL), jnp.float32)],
        compiler_params=pltpu.CompilerParams(
            dimension_semantics=("parallel",)),
    )(x, *weight_args)
    return probs.reshape(B, DICT_SIZE)


# ----------------------------- params & reference -----------------------------

def init_params(key):
    def dense(k, din, dout):
        return jax.random.normal(k, (din, dout), jnp.float32) * 0.02

    key, k_emb, k_out = jax.random.split(key, 3)
    params = {
        'embedding': jax.random.normal(k_emb, (DICT_SIZE, D_MODEL), jnp.float32) * 0.02,
        'w_out': dense(k_out, D_MODEL, DICT_SIZE),
        'b_out': jnp.zeros((1, DICT_SIZE), jnp.float32),
    }

    w_qkv, wo, w1, w2 = [], [], [], []
    for _ in range(N_BLOCKS):
        key, kq, kk, kv, ko, k1, k2 = jax.random.split(key, 7)
        w_qkv.append(jnp.concatenate(
            [dense(kq, D_MODEL, D_MODEL),
             dense(kk, D_MODEL, D_MODEL),
             dense(kv, D_MODEL, D_MODEL)], axis=1))            # fused [D, 3D]
        wo.append(dense(ko, D_MODEL, D_MODEL))
        w1.append(dense(k1, D_MODEL, D_FF))
        w2.append(dense(k2, D_FF, D_MODEL))

    params['blocks'] = {
        'ln1_g': jnp.ones((N_BLOCKS, 1, D_MODEL), jnp.float32),
        'ln1_b': jnp.zeros((N_BLOCKS, 1, D_MODEL), jnp.float32),
        'w_qkv': jnp.stack(w_qkv),
        'b_qkv': jnp.zeros((N_BLOCKS, 1, 3 * D_MODEL), jnp.float32),
        'wo': jnp.stack(wo),
        'bo': jnp.zeros((N_BLOCKS, 1, D_MODEL), jnp.float32),
        'ln2_g': jnp.ones((N_BLOCKS, 1, D_MODEL), jnp.float32),
        'ln2_b': jnp.zeros((N_BLOCKS, 1, D_MODEL), jnp.float32),
        'w1': jnp.stack(w1),
        'b1': jnp.zeros((N_BLOCKS, 1, D_FF), jnp.float32),
        'w2': jnp.stack(w2),
        'b2': jnp.zeros((N_BLOCKS, 1, D_MODEL), jnp.float32),
    }
    return params


def _reference_forward(params, tokens):
    """Pure-JAX reference of the same forward pass (for correctness check)."""
    hp = jax.lax.Precision.HIGHEST
    x = jnp.take(params['embedding'], tokens.astype(jnp.int32), axis=0)   # [B,S,D]
    B, S, D = x.shape
    blk = params['blocks']
    mask = jnp.tril(jnp.ones((S, S), bool))

    def ln(h, g, b):
        mu = jnp.mean(h, axis=-1, keepdims=True)
        var = jnp.mean(jnp.square(h - mu), axis=-1, keepdims=True)
        return (h - mu) * jax.lax.rsqrt(var + LN_EPS) * g + b

    for i in range(N_BLOCKS):
        h = ln(x, blk['ln1_g'][i], blk['ln1_b'][i])
        qkv = jnp.einsum('bsd,de->bse', h, blk['w_qkv'][i], precision=hp) + blk['b_qkv'][i]
        q, k, v = jnp.split(qkv, 3, axis=-1)
        q = q.reshape(B, S, N_HEADS, D_HEAD).transpose(0, 2, 1, 3)
        k = k.reshape(B, S, N_HEADS, D_HEAD).transpose(0, 2, 1, 3)
        v = v.reshape(B, S, N_HEADS, D_HEAD).transpose(0, 2, 1, 3)
        s = jnp.einsum('bhqd,bhkd->bhqk', q, k, precision=hp) * ATTN_SCALE
        s = jnp.where(mask, s, NEG_INF)
        p = jax.nn.softmax(s, axis=-1)
        a = jnp.einsum('bhqk,bhkd->bhqd', p, v, precision=hp)
        a = a.transpose(0, 2, 1, 3).reshape(B, S, D)
        x = x + jnp.einsum('bsd,de->bse', a, blk['wo'][i], precision=hp) + blk['bo'][i]
        h = ln(x, blk['ln2_g'][i], blk['ln2_b'][i])
        h = jnp.maximum(
            jnp.einsum('bsd,df->bsf', h, blk['w1'][i], precision=hp) + blk['b1'][i], 0.0)
        x = x + jnp.einsum('bsf,fd->bsd', h, blk['w2'][i], precision=hp) + blk['b2'][i]

    logits = jnp.einsum('bd,dv->bv', x[:, -1, :], params['w_out'], precision=hp) + params['b_out']
    return jax.nn.softmax(logits, axis=-1)


# ----------------------------- main -----------------------------

if __name__ == "__main__":
    key = jax.random.PRNGKey(0)
    k_params, k_tok = jax.random.split(key)
    params = init_params(k_params)
    tokens = jax.random.randint(k_tok, (BATCH, SEQ), 0, DICT_SIZE, dtype=jnp.int32)

    fwd = jax.jit(roodecat_lm_forward)
    probs = jax.block_until_ready(fwd(params, tokens))

    assert probs.shape == (BATCH, DICT_SIZE)
    assert bool(jnp.all(jnp.isfinite(probs)))
    assert bool(jnp.allclose(jnp.sum(probs, axis=-1), 1.0, atol=1e-5))

    ref = _reference_forward(params, tokens)
    assert bool(jnp.allclose(probs, ref, atol=1e-3)), "mismatch vs. pure-JAX reference"

    print("KERNEL_OK")
</pallas_src>

<mosaic_0001>
module attributes {stable_mosaic.version = 11 : i64} {
  func.func @_fused_lm_kernel(%arg0: i32, %arg1: memref<1x8x32xf32, #tpu.memory_space<vmem>>, %arg2: memref<2x1x32xf32, #tpu.memory_space<vmem>>, %arg3: memref<2x1x32xf32, #tpu.memory_space<vmem>>, %arg4: memref<2x32x96xf32, #tpu.memory_space<vmem>>, %arg5: memref<2x1x96xf32, #tpu.memory_space<vmem>>, %arg6: memref<2x32x32xf32, #tpu.memory_space<vmem>>, %arg7: memref<2x1x32xf32, #tpu.memory_space<vmem>>, %arg8: memref<2x1x32xf32, #tpu.memory_space<vmem>>, %arg9: memref<2x1x32xf32, #tpu.memory_space<vmem>>, %arg10: memref<2x32x64xf32, #tpu.memory_space<vmem>>, %arg11: memref<2x1x64xf32, #tpu.memory_space<vmem>>, %arg12: memref<2x64x32xf32, #tpu.memory_space<vmem>>, %arg13: memref<2x1x32xf32, #tpu.memory_space<vmem>>, %arg14: memref<32x64xf32, #tpu.memory_space<vmem>>, %arg15: memref<1x64xf32, #tpu.memory_space<vmem>>, %arg16: memref<1x1x64xf32, #tpu.memory_space<vmem>>, %arg17: memref<8x96xf32, #tpu.memory_space<vmem>>, %arg18: memref<8x32xf32, #tpu.memory_space<vmem>>) attributes {dimension_semantics = [#tpu.dimension_semantics<parallel>], iteration_bounds = array<i64: 2>, scalar_prefetch = 0 : i64, scratch_operands = 2 : i64, tpu.core_type = #tpu.core_type<tc>, window_params = [{transform_indices = @transform_0, window_bounds = array<i64: 1, 8, 32>}, {pipeline_mode = #tpu.pipeline_mode<synchronous>, transform_indices = @transform_1, window_bounds = array<i64: 2, 1, 32>}, {pipeline_mode = #tpu.pipeline_mode<synchronous>, transform_indices = @transform_2, window_bounds = array<i64: 2, 1, 32>}, {pipeline_mode = #tpu.pipeline_mode<synchronous>, transform_indices = @transform_3, window_bounds = array<i64: 2, 32, 96>}, {pipeline_mode = #tpu.pipeline_mode<synchronous>, transform_indices = @transform_4, window_bounds = array<i64: 2, 1, 96>}, {pipeline_mode = #tpu.pipeline_mode<synchronous>, transform_indices = @transform_5, window_bounds = array<i64: 2, 32, 32>}, {pipeline_mode = #tpu.pipeline_mode<synchronous>, transform_indices = @transform_6, window_bounds = array<i64: 2, 1, 32>}, {pipeline_mode = #tpu.pipeline_mode<synchronous>, transform_indices = @transform_7, window_bounds = array<i64: 2, 1, 32>}, {pipeline_mode = #tpu.pipeline_mode<synchronous>, transform_indices = @transform_8, window_bounds = array<i64: 2, 1, 32>}, {pipeline_mode = #tpu.pipeline_mode<synchronous>, transform_indices = @transform_9, window_bounds = array<i64: 2, 32, 64>}, {pipeline_mode = #tpu.pipeline_mode<synchronous>, transform_indices = @transform_10, window_bounds = array<i64: 2, 1, 64>}, {pipeline_mode = #tpu.pipeline_mode<synchronous>, transform_indices = @transform_11, window_bounds = array<i64: 2, 64, 32>}, {pipeline_mode = #tpu.pipeline_mode<synchronous>, transform_indices = @transform_12, window_bounds = array<i64: 2, 1, 32>}, {pipeline_mode = #tpu.pipeline_mode<synchronous>, transform_indices = @transform_13, window_bounds = array<i64: 32, 64>}, {pipeline_mode = #tpu.pipeline_mode<synchronous>, transform_indices = @transform_14, window_bounds = array<i64: 1, 64>}, {transform_indices = @transform_15, window_bounds = array<i64: 1, 1, 64>}]} {
    %c0 = arith.constant 0 : index
    %c0_0 = arith.constant 0 : index
    %c0_1 = arith.constant 0 : index
    %0 = vector.load %arg1[%c0, %c0_0, %c0_1] : memref<1x8x32xf32, #tpu.memory_space<vmem>>, vector<1x8x32xf32>
    %1 = vector.shape_cast %0 : vector<1x8x32xf32> to vector<8x32xf32>
    %2 = tpu.iota {dimensions = array<i32: 0>} : vector<8x8xi32>
    %3 = tpu.iota {dimensions = array<i32: 1>} : vector<8x8xi32>
    %4 = arith.cmpi sle, %3, %2 : vector<8x8xi32>
    %c0_2 = arith.constant 0 : index
    %c0_3 = arith.constant 0 : index
    %c0_4 = arith.constant 0 : index
    %5 = vector.load %arg2[%c0_2, %c0_3, %c0_4] : memref<2x1x32xf32, #tpu.memory_space<vmem>>, vector<1x1x32xf32>
    %6 = vector.shape_cast %5 : vector<1x1x32xf32> to vector<1x32xf32>
    %c0_5 = arith.constant 0 : index
    %c0_6 = arith.constant 0 : index
    %c0_7 = arith.constant 0 : index
    %7 = vector.load %arg3[%c0_5, %c0_6, %c0_7] : memref<2x1x32xf32, #tpu.memory_space<vmem>>, vector<1x1x32xf32>
    %8 = vector.shape_cast %7 : vector<1x1x32xf32> to vector<1x32xf32>
    %cst = arith.constant dense<0.000000e+00> : vector<8xf32>
    %9 = vector.multi_reduction <add>, %1, %cst [1] : vector<8x32xf32> to vector<8xf32>
    %10 = vector.shape_cast %9 : vector<8xf32> to vector<8x1xf32>
    %cst_8 = arith.constant 3.200000e+01 : f32
    %11 = vector.broadcast %cst_8 : f32 to vector<8x1xf32>
    %12 = arith.divf %10, %11 : vector<8x1xf32>
    %13 = vector.broadcast %12 : vector<8x1xf32> to vector<8x32xf32>
    %14 = arith.subf %1, %13 : vector<8x32xf32>
    %15 = arith.mulf %14, %14 : vector<8x32xf32>
    %cst_9 = arith.constant dense<0.000000e+00> : vector<8xf32>
    %16 = vector.multi_reduction <add>, %15, %cst_9 [1] : vector<8x32xf32> to vector<8xf32>
    %17 = vector.shape_cast %16 : vector<8xf32> to vector<8x1xf32>
    %cst_10 = arith.constant 3.200000e+01 : f32
    %18 = vector.broadcast %cst_10 : f32 to vector<8x1xf32>
    %19 = arith.divf %17, %18 : vector<8x1xf32>
    %20 = vector.broadcast %12 : vector<8x1xf32> to vector<8x32xf32>
    %21 = arith.subf %1, %20 : vector<8x32xf32>
    %cst_11 = arith.constant 9.99999974E-6 : f32
    %22 = vector.broadcast %cst_11 : f32 to vector<8x1xf32>
    %23 = arith.addf %19, %22 : vector<8x1xf32>
    %24 = math.rsqrt %23 : vector<8x1xf32>
    %25 = vector.broadcast %24 : vector<8x1xf32> to vector<8x32xf32>
    %26 = arith.mulf %21, %25 : vector<8x32xf32>
    %27 = vector.broadcast %6 : vector<1x32xf32> to vector<8x32xf32>
    %28 = arith.mulf %26, %27 : vector<8x32xf32>
    %29 = vector.broadcast %8 : vector<1x32xf32> to vector<8x32xf32>
    %30 = arith.addf %28, %29 : vector<8x32xf32>
    %c0_12 = arith.constant 0 : index
    %c0_13 = arith.constant 0 : index
    %c0_14 = arith.constant 0 : index
    %31 = vector.load %arg4[%c0_12, %c0_13, %c0_14] : memref<2x32x96xf32, #tpu.memory_space<vmem>>, vector<1x32x96xf32>
    %32 = vector.shape_cast %31 : vector<1x32x96xf32> to vector<32x96xf32>
    %cst_15 = arith.constant dense<0.000000e+00> : vector<8x96xf32>
    %33 = tpu.matmul %30, %32, %cst_15 {dimension_numbers = #tpu.dot_dimension_numbers<[1], [0], [0], [1], [0, 0, 1, 1], [], []>} : vector<8x32xf32>, vector<32x96xf32>, vector<8x96xf32> -> vector<8x96xf32>
    %c0_16 = arith.constant 0 : index
    %c0_17 = arith.constant 0 : index
    %c0_18 = arith.constant 0 : index
    %34 = vector.load %arg5[%c0_16, %c0_17, %c0_18] : memref<2x1x96xf32, #tpu.memory_space<vmem>>, vector<1x1x96xf32>
    %35 = vector.shape_cast %34 : vector<1x1x96xf32> to vector<1x96xf32>
    %36 = vector.broadcast %35 : vector<1x96xf32> to vector<8x96xf32>
    %37 = arith.addf %33, %36 : vector<8x96xf32>
    %c0_19 = arith.constant 0 : index
    %c0_20 = arith.constant 0 : index
    %38 = vector.load %arg17[%c0_19, %c0_20] : memref<8x96xf32, #tpu.memory_space<vmem>>, vector<8x96xf32>
    tpu.vector_store %arg17[%c0_19, %c0_20], %37 {strides = array<i32>} : memref<8x96xf32, #tpu.memory_space<vmem>>, vector<8x96xf32>,
    %c0_21 = arith.constant 0 : index
    %c0_22 = arith.constant 0 : index
    %39 = vector.load %arg17[%c0_21, %c0_22] : memref<8x96xf32, #tpu.memory_space<vmem>>, vector<8x8xf32>
    %c0_23 = arith.constant 0 : index
    %c32 = arith.constant 32 : index
    %40 = vector.load %arg17[%c0_23, %c32] : memref<8x96xf32, #tpu.memory_space<vmem>>, vector<8x8xf32>
    %c0_24 = arith.constant 0 : index
    %c64 = arith.constant 64 : index
    %41 = vector.load %arg17[%c0_24, %c64] : memref<8x96xf32, #tpu.memory_space<vmem>>, vector<8x8xf32>
    %cst_25 = arith.constant dense<0.000000e+00> : vector<8x8xf32>
    %42 = tpu.matmul %39, %40, %cst_25 {dimension_numbers = #tpu.dot_dimension_numbers<[1], [1], [0], [0], [0, 0, 1, 0], [], []>} : vector<8x8xf32>, vector<8x8xf32>, vector<8x8xf32> -> vector<8x8xf32>
    %cst_26 = arith.constant 0.353553385 : f32
    %43 = vector.broadcast %cst_26 : f32 to vector<8x8xf32>
    %44 = arith.mulf %42, %43 : vector<8x8xf32>
    %cst_27 = arith.constant -1.000000e+30 : f32
    %45 = vector.broadcast %cst_27 : f32 to vector<8x8xf32>
    %46 = arith.select %4, %44, %45 : vector<8x8xi1>, vector<8x8xf32>
    %cst_28 = arith.constant dense<0xFF800000> : vector<8xf32>
    %47 = vector.multi_reduction <maximumf>, %46, %cst_28 [1] : vector<8x8xf32> to vector<8xf32>
    %48 = vector.shape_cast %47 : vector<8xf32> to vector<8x1xf32>
    %49 = vector.broadcast %48 : vector<8x1xf32> to vector<8x8xf32>
    %50 = arith.subf %46, %49 : vector<8x8xf32>
    %51 = math.exp %50 : vector<8x8xf32>
    %cst_29 = arith.constant dense<0.000000e+00> : vector<8xf32>
    %52 = vector.multi_reduction <add>, %51, %cst_29 [1] : vector<8x8xf32> to vector<8xf32>
    %53 = vector.shape_cast %52 : vector<8xf32> to vector<8x1xf32>
    %54 = vector.broadcast %53 : vector<8x1xf32> to vector<8x8xf32>
    %55 = arith.divf %51, %54 : vector<8x8xf32>
    %cst_30 = arith.constant dense<0.000000e+00> : vector<8x8xf32>
    %56 = tpu.matmul %55, %41, %cst_30 {dimension_numbers = #tpu.dot_dimension_numbers<[1], [0], [0], [1], [0, 0, 1, 1], [], []>} : vector<8x8xf32>, vector<8x8xf32>, vector<8x8xf32> -> vector<8x8xf32>
    %c0_31 = arith.constant 0 : index
    %c0_32 = arith.constant 0 : index
    %57 = vector.load %arg18[%c0_31, %c0_32] : memref<8x32xf32, #tpu.memory_space<vmem>>, vector<8x8xf32>
    tpu.vector_store %arg18[%c0_31, %c0_32], %56 {strides = array<i32>} : memref<8x32xf32, #tpu.memory_space<vmem>>, vector<8x8xf32>,
    %c0_33 = arith.constant 0 : index
    %c8 = arith.constant 8 : index
    %58 = vector.load %arg17[%c0_33, %c8] : memref<8x96xf32, #tpu.memory_space<vmem>>, vector<8x8xf32>
    %c0_34 = arith.constant 0 : index
    %c40 = arith.constant 40 : index
    %59 = vector.load %arg17[%c0_34, %c40] : memref<8x96xf32, #tpu.memory_space<vmem>>, vector<8x8xf32>
    %c0_35 = arith.constant 0 : index
    %c72 = arith.constant 72 : index
    %60 = vector.load %arg17[%c0_35, %c72] : memref<8x96xf32, #tpu.memory_space<vmem>>, vector<8x8xf32>
    %cst_36 = arith.constant dense<0.000000e+00> : vector<8x8xf32>
    %61 = tpu.matmul %58, %59, %cst_36 {dimension_numbers = #tpu.dot_dimension_numbers<[1], [1], [0], [0], [0, 0, 1, 0], [], []>} : vector<8x8xf32>, vector<8x8xf32>, vector<8x8xf32> -> vector<8x8xf32>
    %cst_37 = arith.constant 0.353553385 : f32
    %62 = vector.broadcast %cst_37 : f32 to vector<8x8xf32>
    %63 = arith.mulf %61, %62 : vector<8x8xf32>
    %cst_38 = arith.constant -1.000000e+30 : f32
    %64 = vector.broadcast %cst_38 : f32 to vector<8x8xf32>
    %65 = arith.select %4, %63, %64 : vector<8x8xi1>, vector<8x8xf32>
    %cst_39 = arith.constant dense<0xFF800000> : vector<8xf32>
    %66 = vector.multi_reduction <maximumf>, %65, %cst_39 [1] : vector<8x8xf32> to vector<8xf32>
    %67 = vector.shape_cast %66 : vector<8xf32> to vector<8x1xf32>
    %68 = vector.broadcast %67 : vector<8x1xf32> to vector<8x8xf32>
    %69 = arith.subf %65, %68 : vector<8x8xf32>
    %70 = math.exp %69 : vector<8x8xf32>
    %cst_40 = arith.constant dense<0.000000e+00> : vector<8xf32>
    %71 = vector.multi_reduction <add>, %70, %cst_40 [1] : vector<8x8xf32> to vector<8xf32>
    %72 = vector.shape_cast %71 : vector<8xf32> to vector<8x1xf32>
    %73 = vector.broadcast %72 : vector<8x1xf32> to vector<8x8xf32>
    %74 = arith.divf %70, %73 : vector<8x8xf32>
    %cst_41 = arith.constant dense<0.000000e+00> : vector<8x8xf32>
    %75 = tpu.matmul %74, %60, %cst_41 {dimension_numbers = #tpu.dot_dimension_numbers<[1], [0], [0], [1], [0, 0, 1, 1], [], []>} : vector<8x8xf32>, vector<8x8xf32>, vector<8x8xf32> -> vector<8x8xf32>
    %c0_42 = arith.constant 0 : index
    %c8_43 = arith.constant 8 : index
    %76 = vector.load %arg18[%c0_42, %c8_43] : memref<8x32xf32, #tpu.memory_space<vmem>>, vector<8x8xf32>
    tpu.vector_store %arg18[%c0_42, %c8_43], %75 {strides = array<i32>} : memref<8x32xf32, #tpu.memory_space<vmem>>, vector<8x8xf32>,
    %c0_44 = arith.constant 0 : index
    %c16 = arith.constant 16 : index
    %77 = vector.load %arg17[%c0_44, %c16] : memref<8x96xf32, #tpu.memory_space<vmem>>, vector<8x8xf32>
    %c0_45 = arith.constant 0 : index
    %c48 = arith.constant 48 : index
    %78 = vector.load %arg17[%c0_45, %c48] : memref<8x96xf32, #tpu.memory_space<vmem>>, vector<8x8xf32>
    %c0_46 = arith.constant 0 : index
    %c80 = arith.constant 80 : index
    %79 = vector.load %arg17[%c0_46, %c80] : memref<8x96xf32, #tpu.memory_space<vmem>>, vector<8x8xf32>
    %cst_47 = arith.constant dense<0.000000e+00> : vector<8x8xf32>
    %80 = tpu.matmul %77, %78, %cst_47 {dimension_numbers = #tpu.dot_dimension_numbers<[1], [1], [0], [0], [0, 0, 1, 0], [], []>} : vector<8x8xf32>, vector<8x8xf32>, vector<8x8xf32> -> vector<8x8xf32>
    %cst_48 = arith.constant 0.353553385 : f32
    %81 = vector.broadcast %cst_48 : f32 to vector<8x8xf32>
    %82 = arith.mulf %80, %81 : vector<8x8xf32>
    %cst_49 = arith.constant -1.000000e+30 : f32
    %83 = vector.broadcast %cst_49 : f32 to vector<8x8xf32>
    %84 = arith.select %4, %82, %83 : vector<8x8xi1>, vector<8x8xf32>
    %cst_50 = arith.constant dense<0xFF800000> : vector<8xf32>
    %85 = vector.multi_reduction <maximumf>, %84, %cst_50 [1] : vector<8x8xf32> to vector<8xf32>
    %86 = vector.shape_cast %85 : vector<8xf32> to vector<8x1xf32>
    %87 = vector.broadcast %86 : vector<8x1xf32> to vector<8x8xf32>
    %88 = arith.subf %84, %87 : vector<8x8xf32>
    %89 = math.exp %88 : vector<8x8xf32>
    %cst_51 = arith.constant dense<0.000000e+00> : vector<8xf32>
    %90 = vector.multi_reduction <add>, %89, %cst_51 [1] : vector<8x8xf32> to vector<8xf32>
    %91 = vector.shape_cast %90 : vector<8xf32> to vector<8x1xf32>
    %92 = vector.broadcast %91 : vector<8x1xf32> to vector<8x8xf32>
    %93 = arith.divf %89, %92 : vector<8x8xf32>
    %cst_52 = arith.constant dense<0.000000e+00> : vector<8x8xf32>
    %94 = tpu.matmul %93, %79, %cst_52 {dimension_numbers = #tpu.dot_dimension_numbers<[1], [0], [0], [1], [0, 0, 1, 1], [], []>} : vector<8x8xf32>, vector<8x8xf32>, vector<8x8xf32> -> vector<8x8xf32>
    %c0_53 = arith.constant 0 : index
    %c16_54 = arith.constant 16 : index
    %95 = vector.load %arg18[%c0_53, %c16_54] : memref<8x32xf32, #tpu.memory_space<vmem>>, vector<8x8xf32>
    tpu.vector_store %arg18[%c0_53, %c16_54], %94 {strides = array<i32>} : memref<8x32xf32, #tpu.memory_space<vmem>>, vector<8x8xf32>,
    %c0_55 = arith.constant 0 : index
    %c24 = arith.constant 24 : index
    %96 = vector.load %arg17[%c0_55, %c24] : memref<8x96xf32, #tpu.memory_space<vmem>>, vector<8x8xf32>
    %c0_56 = arith.constant 0 : index
    %c56 = arith.constant 56 : index
    %97 = vector.load %arg17[%c0_56, %c56] : memref<8x96xf32, #tpu.memory_space<vmem>>, vector<8x8xf32>
    %c0_57 = arith.constant 0 : index
    %c88 = arith.constant 88 : index
    %98 = vector.load %arg17[%c0_57, %c88] : memref<8x96xf32, #tpu.memory_space<vmem>>, vector<8x8xf32>
    %cst_58 = arith.constant dense<0.000000e+00> : vector<8x8xf32>
    %99 = tpu.matmul %96, %97, %cst_58 {dimension_numbers = #tpu.dot_dimension_numbers<[1], [1], [0], [0], [0, 0, 1, 0], [], []>} : vector<8x8xf32>, vector<8x8xf32>, vector<8x8xf32> -> vector<8x8xf32>
    %cst_59 = arith.constant 0.353553385 : f32
    %100 = vector.broadcast %cst_59 : f32 to vector<8x8xf32>
    %101 = arith.mulf %99, %100 : vector<8x8xf32>
    %cst_60 = arith.constant -1.000000e+30 : f32
    %102 = vector.broadcast %cst_60 : f32 to vector<8x8xf32>
    %103 = arith.select %4, %101, %102 : vector<8x8xi1>, vector<8x8xf32>
    %cst_61 = arith.constant dense<0xFF800000> : vector<8xf32>
    %104 = vector.multi_reduction <maximumf>, %103, %cst_61 [1] : vector<8x8xf32> to vector<8xf32>
    %105 = vector.shape_cast %104 : vector<8xf32> to vector<8x1xf32>
    %106 = vector.broadcast %105 : vector<8x1xf32> to vector<8x8xf32>
    %107 = arith.subf %103, %106 : vector<8x8xf32>
    %108 = math.exp %107 : vector<8x8xf32>
    %cst_62 = arith.constant dense<0.000000e+00> : vector<8xf32>
    %109 = vector.multi_reduction <add>, %108, %cst_62 [1] : vector<8x8xf32> to vector<8xf32>
    %110 = vector.shape_cast %109 : vector<8xf32> to vector<8x1xf32>
    %111 = vector.broadcast %110 : vector<8x1xf32> to vector<8x8xf32>
    %112 = arith.divf %108, %111 : vector<8x8xf32>
    %cst_63 = arith.constant dense<0.000000e+00> : vector<8x8xf32>
    %113 = tpu.matmul %112, %98, %cst_63 {dimension_numbers = #tpu.dot_dimension_numbers<[1], [0], [0], [1], [0, 0, 1, 1], [], []>} : vector<8x8xf32>, vector<8x8xf32>, vector<8x8xf32> -> vector<8x8xf32>
    %c0_64 = arith.constant 0 : index
    %c24_65 = arith.constant 24 : index
    %114 = vector.load %arg18[%c0_64, %c24_65] : memref<8x32xf32, #tpu.memory_space<vmem>>, vector<8x8xf32>
    tpu.vector_store %arg18[%c0_64, %c24_65], %113 {strides = array<i32>} : memref<8x32xf32, #tpu.memory_space<vmem>>, vector<8x8xf32>,
    %c0_66 = arith.constant 0 : index
    %c0_67 = arith.constant 0 : index
    %115 = vector.load %arg18[%c0_66, %c0_67] : memref<8x32xf32, #tpu.memory_space<vmem>>, vector<8x32xf32>
    %c0_68 = arith.constant 0 : index
    %c0_69 = arith.constant 0 : index
    %c0_70 = arith.constant 0 : index
    %116 = vector.load %arg6[%c0_68, %c0_69, %c0_70] : memref<2x32x32xf32, #tpu.memory_space<vmem>>, vector<1x32x32xf32>
    %117 = vector.shape_cast %116 : vector<1x32x32xf32> to vector<32x32xf32>
    %cst_71 = arith.constant dense<0.000000e+00> : vector<8x32xf32>
    %118 = tpu.matmul %115, %117, %cst_71 {dimension_numbers = #tpu.dot_dimension_numbers<[1], [0], [0], [1], [0, 0, 1, 1], [], []>} : vector<8x32xf32>, vector<32x32xf32>, vector<8x32xf32> -> vector<8x32xf32>
    %119 = arith.addf %1, %118 : vector<8x32xf32>
    %c0_72 = arith.constant 0 : index
    %c0_73 = arith.constant 0 : index
    %c0_74 = arith.constant 0 : index
    %120 = vector.load %arg7[%c0_72, %c0_73, %c0_74] : memref<2x1x32xf32, #tpu.memory_space<vmem>>, vector<1x1x32xf32>
    %121 = vector.shape_cast %120 : vector<1x1x32xf32> to vector<1x32xf32>
    %122 = vector.broadcast %121 : vector<1x32xf32> to vector<8x32xf32>
    %123 = arith.addf %119, %122 : vector<8x32xf32>
    %c0_75 = arith.constant 0 : index
    %c0_76 = arith.constant 0 : index
    %c0_77 = arith.constant 0 : index
    %124 = vector.load %arg8[%c0_75, %c0_76, %c0_77] : memref<2x1x32xf32, #tpu.memory_space<vmem>>, vector<1x1x32xf32>
    %125 = vector.shape_cast %124 : vector<1x1x32xf32> to vector<1x32xf32>
    %c0_78 = arith.constant 0 : index
    %c0_79 = arith.constant 0 : index
    %c0_80 = arith.constant 0 : index
    %126 = vector.load %arg9[%c0_78, %c0_79, %c0_80] : memref<2x1x32xf32, #tpu.memory_space<vmem>>, vector<1x1x32xf32>
    %127 = vector.shape_cast %126 : vector<1x1x32xf32> to vector<1x32xf32>
    %cst_81 = arith.constant dense<0.000000e+00> : vector<8xf32>
    %128 = vector.multi_reduction <add>, %123, %cst_81 [1] : vector<8x32xf32> to vector<8xf32>
    %129 = vector.shape_cast %128 : vector<8xf32> to vector<8x1xf32>
    %cst_82 = arith.constant 3.200000e+01 : f32
    %130 = vector.broadcast %cst_82 : f32 to vector<8x1xf32>
    %131 = arith.divf %129, %130 : vector<8x1xf32>
    %132 = vector.broadcast %131 : vector<8x1xf32> to vector<8x32xf32>
    %133 = arith.subf %123, %132 : vector<8x32xf32>
    %134 = arith.mulf %133, %133 : vector<8x32xf32>
    %cst_83 = arith.constant dense<0.000000e+00> : vector<8xf32>
    %135 = vector.multi_reduction <add>, %134, %cst_83 [1] : vector<8x32xf32> to vector<8xf32>
    %136 = vector.shape_cast %135 : vector<8xf32> to vector<8x1xf32>
    %cst_84 = arith.constant 3.200000e+01 : f32
    %137 = vector.broadcast %cst_84 : f32 to vector<8x1xf32>
    %138 = arith.divf %136, %137 : vector<8x1xf32>
    %139 = vector.broadcast %131 : vector<8x1xf32> to vector<8x32xf32>
    %140 = arith.subf %123, %139 : vector<8x32xf32>
    %cst_85 = arith.constant 9.99999974E-6 : f32
    %141 = vector.broadcast %cst_85 : f32 to vector<8x1xf32>
    %142 = arith.addf %138, %141 : vector<8x1xf32>
    %143 = math.rsqrt %142 : vector<8x1xf32>
    %144 = vector.broadcast %143 : vector<8x1xf32> to vector<8x32xf32>
    %145 = arith.mulf %140, %144 : vector<8x32xf32>
    %146 = vector.broadcast %125 : vector<1x32xf32> to vector<8x32xf32>
    %147 = arith.mulf %145, %146 : vector<8x32xf32>
    %148 = vector.broadcast %127 : vector<1x32xf32> to vector<8x32xf32>
    %149 = arith.addf %147, %148 : vector<8x32xf32>
    %c0_86 = arith.constant 0 : index
    %c0_87 = arith.constant 0 : index
    %c0_88 = arith.constant 0 : index
    %150 = vector.load %arg10[%c0_86, %c0_87, %c0_88] : memref<2x32x64xf32, #tpu.memory_space<vmem>>, vector<1x32x64xf32>
    %151 = vector.shape_cast %150 : vector<1x32x64xf32> to vector<32x64xf32>
    %cst_89 = arith.constant dense<0.000000e+00> : vector<8x64xf32>
    %152 = tpu.matmul %149, %151, %cst_89 {dimension_numbers = #tpu.dot_dimension_numbers<[1], [0], [0], [1], [0, 0, 1, 1], [], []>} : vector<8x32xf32>, vector<32x64xf32>, vector<8x64xf32> -> vector<8x64xf32>
    %c0_90 = arith.constant 0 : index
    %c0_91 = arith.constant 0 : index
    %c0_92 = arith.constant 0 : index
    %153 = vector.load %arg11[%c0_90, %c0_91, %c0_92] : memref<2x1x64xf32, #tpu.memory_space<vmem>>, vector<1x1x64xf32>
    %154 = vector.shape_cast %153 : vector<1x1x64xf32> to vector<1x64xf32>
    %155 = vector.broadcast %154 : vector<1x64xf32> to vector<8x64xf32>
    %156 = arith.addf %152, %155 : vector<8x64xf32>
    %cst_93 = arith.constant 0.000000e+00 : f32
    %157 = vector.broadcast %cst_93 : f32 to vector<8x64xf32>
    %158 = arith.maximumf %156, %157 : vector<8x64xf32>
    %c0_94 = arith.constant 0 : index
    %c0_95 = arith.constant 0 : index
    %c0_96 = arith.constant 0 : index
    %159 = vector.load %arg12[%c0_94, %c0_95, %c0_96] : memref<2x64x32xf32, #tpu.memory_space<vmem>>, vector<1x64x32xf32>
    %160 = vector.shape_cast %159 : vector<1x64x32xf32> to vector<64x32xf32>
    %cst_97 = arith.constant dense<0.000000e+00> : vector<8x32xf32>
    %161 = tpu.matmul %158, %160, %cst_97 {dimension_numbers = #tpu.dot_dimension_numbers<[1], [0], [0], [1], [0, 0, 1, 1], [], []>} : vector<8x64xf32>, vector<64x32xf32>, vector<8x32xf32> -> vector<8x32xf32>
    %162 = arith.addf %123, %161 : vector<8x32xf32>
    %c0_98 = arith.constant 0 : index
    %c0_99 = arith.constant 0 : index
    %c0_100 = arith.constant 0 : index
    %163 = vector.load %arg13[%c0_98, %c0_99, %c0_100] : memref<2x1x32xf32, #tpu.memory_space<vmem>>, vector<1x1x32xf32>
    %164 = vector.shape_cast %163 : vector<1x1x32xf32> to vector<1x32xf32>
    %165 = vector.broadcast %164 : vector<1x32xf32> to vector<8x32xf32>
    %166 = arith.addf %162, %165 : vector<8x32xf32>
    %c1 = arith.constant 1 : index
    %c0_101 = arith.constant 0 : index
    %c0_102 = arith.constant 0 : index
    %167 = vector.load %arg2[%c1, %c0_101, %c0_102] : memref<2x1x32xf32, #tpu.memory_space<vmem>>, vector<1x1x32xf32>
    %168 = vector.shape_cast %167 : vector<1x1x32xf32> to vector<1x32xf32>
    %c1_103 = arith.constant 1 : index
    %c0_104 = arith.constant 0 : index
    %c0_105 = arith.constant 0 : index
    %169 = vector.load %arg3[%c1_103, %c0_104, %c0_105] : memref<2x1x32xf32, #tpu.memory_space<vmem>>, vector<1x1x32xf32>
    %170 = vector.shape_cast %169 : vector<1x1x32xf32> to vector<1x32xf32>
    %cst_106 = arith.constant dense<0.000000e+00> : vector<8xf32>
    %171 = vector.multi_reduction <add>, %166, %cst_106 [1] : vector<8x32xf32> to vector<8xf32>
    %172 = vector.shape_cast %171 : vector<8xf32> to vector<8x1xf32>
    %cst_107 = arith.constant 3.200000e+01 : f32
    %173 = vector.broadcast %cst_107 : f32 to vector<8x1xf32>
    %174 = arith.divf %172, %173 : vector<8x1xf32>
    %175 = vector.broadcast %174 : vector<8x1xf32> to vector<8x32xf32>
    %176 = arith.subf %166, %175 : vector<8x32xf32>
    %177 = arith.mulf %176, %176 : vector<8x32xf32>
    %cst_108 = arith.constant dense<0.000000e+00> : vector<8xf32>
    %178 = vector.multi_reduction <add>, %177, %cst_108 [1] : vector<8x32xf32> to vector<8xf32>
    %179 = vector.shape_cast %178 : vector<8xf32> to vector<8x1xf32>
    %cst_109 = arith.constant 3.200000e+01 : f32
    %180 = vector.broadcast %cst_109 : f32 to vector<8x1xf32>
    %181 = arith.divf %179, %180 : vector<8x1xf32>
    %182 = vector.broadcast %174 : vector<8x1xf32> to vector<8x32xf32>
    %183 = arith.subf %166, %182 : vector<8x32xf32>
    %cst_110 = arith.constant 9.99999974E-6 : f32
    %184 = vector.broadcast %cst_110 : f32 to vector<8x1xf32>
    %185 = arith.addf %181, %184 : vector<8x1xf32>
    %186 = math.rsqrt %185 : vector<8x1xf32>
    %187 = vector.broadcast %186 : vector<8x1xf32> to vector<8x32xf32>
    %188 = arith.mulf %183, %187 : vector<8x32xf32>
    %189 = vector.broadcast %168 : vector<1x32xf32> to vector<8x32xf32>
    %190 = arith.mulf %188, %189 : vector<8x32xf32>
    %191 = vector.broadcast %170 : vector<1x32xf32> to vector<8x32xf32>
    %192 = arith.addf %190, %191 : vector<8x32xf32>
    %c1_111 = arith.constant 1 : index
    %c0_112 = arith.constant 0 : index
    %c0_113 = arith.constant 0 : index
    %193 = vector.load %arg4[%c1_111, %c0_112, %c0_113] : memref<2x32x96xf32, #tpu.memory_space<vmem>>, vector<1x32x96xf32>
    %194 = vector.shape_cast %193 : vector<1x32x96xf32> to vector<32x96xf32>
    %cst_114 = arith.constant dense<0.000000e+00> : vector<8x96xf32>
    %195 = tpu.matmul %192, %194, %cst_114 {dimension_numbers = #tpu.dot_dimension_numbers<[1], [0], [0], [1], [0, 0, 1, 1], [], []>} : vector<8x32xf32>, vector<32x96xf32>, vector<8x96xf32> -> vector<8x96xf32>
    %c1_115 = arith.constant 1 : index
    %c0_116 = arith.constant 0 : index
    %c0_117 = arith.constant 0 : index
    %196 = vector.load %arg5[%c1_115, %c0_116, %c0_117] : memref<2x1x96xf32, #tpu.memory_space<vmem>>, vector<1x1x96xf32>
    %197 = vector.shape_cast %196 : vector<1x1x96xf32> to vector<1x96xf32>
    %198 = vector.broadcast %197 : vector<1x96xf32> to vector<8x96xf32>
    %199 = arith.addf %195, %198 : vector<8x96xf32>
    %c0_118 = arith.constant 0 : index
    %c0_119 = arith.constant 0 : index
    %200 = vector.load %arg17[%c0_118, %c0_119] : memref<8x96xf32, #tpu.memory_space<vmem>>, vector<8x96xf32>
    tpu.vector_store %arg17[%c0_118, %c0_119], %199 {strides = array<i32>} : memref<8x96xf32, #tpu.memory_space<vmem>>, vector<8x96xf32>,
    %c0_120 = arith.constant 0 : index
    %c0_121 = arith.constant 0 : index
    %201 = vector.load %arg17[%c0_120, %c0_121] : memref<8x96xf32, #tpu.memory_space<vmem>>, vector<8x8xf32>
    %c0_122 = arith.constant 0 : index
    %c32_123 = arith.constant 32 : index
    %202 = vector.load %arg17[%c0_122, %c32_123] : memref<8x96xf32, #tpu.memory_space<vmem>>, vector<8x8xf32>
    %c0_124 = arith.constant 0 : index
    %c64_125 = arith.constant 64 : index
    %203 = vector.load %arg17[%c0_124, %c64_125] : memref<8x96xf32, #tpu.memory_space<vmem>>, vector<8x8xf32>
    %cst_126 = arith.constant dense<0.000000e+00> : vector<8x8xf32>
    %204 = tpu.matmul %201, %202, %cst_126 {dimension_numbers = #tpu.dot_dimension_numbers<[1], [1], [0], [0], [0, 0, 1, 0], [], []>} : vector<8x8xf32>, vector<8x8xf32>, vector<8x8xf32> -> vector<8x8xf32>
    %cst_127 = arith.constant 0.353553385 : f32
    %205 = vector.broadcast %cst_127 : f32 to vector<8x8xf32>
    %206 = arith.mulf %204, %205 : vector<8x8xf32>
    %cst_128 = arith.constant -1.000000e+30 : f32
    %207 = vector.broadcast %cst_128 : f32 to vector<8x8xf32>
    %208 = arith.select %4, %206, %207 : vector<8x8xi1>, vector<8x8xf32>
    %cst_129 = arith.constant dense<0xFF800000> : vector<8xf32>
    %209 = vector.multi_reduction <maximumf>, %208, %cst_129 [1] : vector<8x8xf32> to vector<8xf32>
    %210 = vector.shape_cast %209 : vector<8xf32> to vector<8x1xf32>
    %211 = vector.broadcast %210 : vector<8x1xf32> to vector<8x8xf32>
    %212 = arith.subf %208, %211 : vector<8x8xf32>
    %213 = math.exp %212 : vector<8x8xf32>
    %cst_130 = arith.constant dense<0.000000e+00> : vector<8xf32>
    %214 = vector.multi_reduction <add>, %213, %cst_130 [1] : vector<8x8xf32> to vector<8xf32>
    %215 = vector.shape_cast %214 : vector<8xf32> to vector<8x1xf32>
    %216 = vector.broadcast %215 : vector<8x1xf32> to vector<8x8xf32>
    %217 = arith.divf %213, %216 : vector<8x8xf32>
    %cst_131 = arith.constant dense<0.000000e+00> : vector<8x8xf32>
    %218 = tpu.matmul %217, %203, %cst_131 {dimension_numbers = #tpu.dot_dimension_numbers<[1], [0], [0], [1], [0, 0, 1, 1], [], []>} : vector<8x8xf32>, vector<8x8xf32>, vector<8x8xf32> -> vector<8x8xf32>
    %c0_132 = arith.constant 0 : index
    %c0_133 = arith.constant 0 : index
    %219 = vector.load %arg18[%c0_132, %c0_133] : memref<8x32xf32, #tpu.memory_space<vmem>>, vector<8x8xf32>
    tpu.vector_store %arg18[%c0_132, %c0_133], %218 {strides = array<i32>} : memref<8x32xf32, #tpu.memory_space<vmem>>, vector<8x8xf32>,
    %c0_134 = arith.constant 0 : index
    %c8_135 = arith.constant 8 : index
    %220 = vector.load %arg17[%c0_134, %c8_135] : memref<8x96xf32, #tpu.memory_space<vmem>>, vector<8x8xf32>
    %c0_136 = arith.constant 0 : index
    %c40_137 = arith.constant 40 : index
    %221 = vector.load %arg17[%c0_136, %c40_137] : memref<8x96xf32, #tpu.memory_space<vmem>>, vector<8x8xf32>
    %c0_138 = arith.constant 0 : index
    %c72_139 = arith.constant 72 : index
    %222 = vector.load %arg17[%c0_138, %c72_139] : memref<8x96xf32, #tpu.memory_space<vmem>>, vector<8x8xf32>
    %cst_140 = arith.constant dense<0.000000e+00> : vector<8x8xf32>
    %223 = tpu.matmul %220, %221, %cst_140 {dimension_numbers = #tpu.dot_dimension_numbers<[1], [1], [0], [0], [0, 0, 1, 0], [], []>} : vector<8x8xf32>, vector<8x8xf32>, vector<8x8xf32> -> vector<8x8xf32>
    %cst_141 = arith.constant 0.353553385 : f32
    %224 = vector.broadcast %cst_141 : f32 to vector<8x8xf32>
    %225 = arith.mulf %223, %224 : vector<8x8xf32>
    %cst_142 = arith.constant -1.000000e+30 : f32
    %226 = vector.broadcast %cst_142 : f32 to vector<8x8xf32>
    %227 = arith.select %4, %225, %226 : vector<8x8xi1>, vector<8x8xf32>
    %cst_143 = arith.constant dense<0xFF800000> : vector<8xf32>
    %228 = vector.multi_reduction <maximumf>, %227, %cst_143 [1] : vector<8x8xf32> to vector<8xf32>
    %229 = vector.shape_cast %228 : vector<8xf32> to vector<8x1xf32>
    %230 = vector.broadcast %229 : vector<8x1xf32> to vector<8x8xf32>
    %231 = arith.subf %227, %230 : vector<8x8xf32>
    %232 = math.exp %231 : vector<8x8xf32>
    %cst_144 = arith.constant dense<0.000000e+00> : vector<8xf32>
    %233 = vector.multi_reduction <add>, %232, %cst_144 [1] : vector<8x8xf32> to vector<8xf32>
    %234 = vector.shape_cast %233 : vector<8xf32> to vector<8x1xf32>
    %235 = vector.broadcast %234 : vector<8x1xf32> to vector<8x8xf32>
    %236 = arith.divf %232, %235 : vector<8x8xf32>
    %cst_145 = arith.constant dense<0.000000e+00> : vector<8x8xf32>
    %237 = tpu.matmul %236, %222, %cst_145 {dimension_numbers = #tpu.dot_dimension_numbers<[1], [0], [0], [1], [0, 0, 1, 1], [], []>} : vector<8x8xf32>, vector<8x8xf32>, vector<8x8xf32> -> vector<8x8xf32>
    %c0_146 = arith.constant 0 : index
    %c8_147 = arith.constant 8 : index
    %238 = vector.load %arg18[%c0_146, %c8_147] : memref<8x32xf32, #tpu.memory_space<vmem>>, vector<8x8xf32>
    tpu.vector_store %arg18[%c0_146, %c8_147], %237 {strides = array<i32>} : memref<8x32xf32, #tpu.memory_space<vmem>>, vector<8x8xf32>,
    %c0_148 = arith.constant 0 : index
    %c16_149 = arith.constant 16 : index
    %239 = vector.load %arg17[%c0_148, %c16_149] : memref<8x96xf32, #tpu.memory_space<vmem>>, vector<8x8xf32>
    %c0_150 = arith.constant 0 : index
    %c48_151 = arith.constant 48 : index
    %240 = vector.load %arg17[%c0_150, %c48_151] : memref<8x96xf32, #tpu.memory_space<vmem>>, vector<8x8xf32>
    %c0_152 = arith.constant 0 : index
    %c80_153 = arith.constant 80 : index
    %241 = vector.load %arg17[%c0_152, %c80_153] : memref<8x96xf32, #tpu.memory_space<vmem>>, vector<8x8xf32>
    %cst_154 = arith.constant dense<0.000000e+00> : vector<8x8xf32>
    %242 = tpu.matmul %239, %240, %cst_154 {dimension_numbers = #tpu.dot_dimension_numbers<[1], [1], [0], [0], [0, 0, 1, 0], [], []>} : vector<8x8xf32>, vector<8x8xf32>, vector<8x8xf32> -> vector<8x8xf32>
    %cst_155 = arith.constant 0.353553385 : f32
    %243 = vector.broadcast %cst_155 : f32 to vector<8x8xf32>
    %244 = arith.mulf %242, %243 : vector<8x8xf32>
    %cst_156 = arith.constant -1.000000e+30 : f32
    %245 = vector.broadcast %cst_156 : f32 to vector<8x8xf32>
    %246 = arith.select %4, %244, %245 : vector<8x8xi1>, vector<8x8xf32>
    %cst_157 = arith.constant dense<0xFF800000> : vector<8xf32>
    %247 = vector.multi_reduction <maximumf>, %246, %cst_157 [1] : vector<8x8xf32> to vector<8xf32>
    %248 = vector.shape_cast %247 : vector<8xf32> to vector<8x1xf32>
    %249 = vector.broadcast %248 : vector<8x1xf32> to vector<8x8xf32>
    %250 = arith.subf %246, %249 : vector<8x8xf32>
    %251 = math.exp %250 : vector<8x8xf32>
    %cst_158 = arith.constant dense<0.000000e+00> : vector<8xf32>
    %252 = vector.multi_reduction <add>, %251, %cst_158 [1] : vector<8x8xf32> to vector<8xf32>
    %253 = vector.shape_cast %252 : vector<8xf32> to vector<8x1xf32>
    %254 = vector.broadcast %253 : vector<8x1xf32> to vector<8x8xf32>
    %255 = arith.divf %251, %254 : vector<8x8xf32>
    %cst_159 = arith.constant dense<0.000000e+00> : vector<8x8xf32>
    %256 = tpu.matmul %255, %241, %cst_159 {dimension_numbers = #tpu.dot_dimension_numbers<[1], [0], [0], [1], [0, 0, 1, 1], [], []>} : vector<8x8xf32>, vector<8x8xf32>, vector<8x8xf32> -> vector<8x8xf32>
    %c0_160 = arith.constant 0 : index
    %c16_161 = arith.constant 16 : index
    %257 = vector.load %arg18[%c0_160, %c16_161] : memref<8x32xf32, #tpu.memory_space<vmem>>, vector<8x8xf32>
    tpu.vector_store %arg18[%c0_160, %c16_161], %256 {strides = array<i32>} : memref<8x32xf32, #tpu.memory_space<vmem>>, vector<8x8xf32>,
    %c0_162 = arith.constant 0 : index
    %c24_163 = arith.constant 24 : index
    %258 = vector.load %arg17[%c0_162, %c24_163] : memref<8x96xf32, #tpu.memory_space<vmem>>, vector<8x8xf32>
    %c0_164 = arith.constant 0 : index
    %c56_165 = arith.constant 56 : index
    %259 = vector.load %arg17[%c0_164, %c56_165] : memref<8x96xf32, #tpu.memory_space<vmem>>, vector<8x8xf32>
    %c0_166 = arith.constant 0 : index
    %c88_167 = arith.constant 88 : index
    %260 = vector.load %arg17[%c0_166, %c88_167] : memref<8x96xf32, #tpu.memory_space<vmem>>, vector<8x8xf32>
    %cst_168 = arith.constant dense<0.000000e+00> : vector<8x8xf32>
    %261 = tpu.matmul %258, %259, %cst_168 {dimension_numbers = #tpu.dot_dimension_numbers<[1], [1], [0], [0], [0, 0, 1, 0], [], []>} : vector<8x8xf32>, vector<8x8xf32>, vector<8x8xf32> -> vector<8x8xf32>
    %cst_169 = arith.constant 0.353553385 : f32
    %262 = vector.broadcast %cst_169 : f32 to vector<8x8xf32>
    %263 = arith.mulf %261, %262 : vector<8x8xf32>
    %cst_170 = arith.constant -1.000000e+30 : f32
    %264 = vector.broadcast %cst_170 : f32 to vector<8x8xf32>
    %265 = arith.select %4, %263, %264 : vector<8x8xi1>, vector<8x8xf32>
    %cst_171 = arith.constant dense<0xFF800000> : vector<8xf32>
    %266 = vector.multi_reduction <maximumf>, %265, %cst_171 [1] : vector<8x8xf32> to vector<8xf32>
    %267 = vector.shape_cast %266 : vector<8xf32> to vector<8x1xf32>
    %268 = vector.broadcast %267 : vector<8x1xf32> to vector<8x8xf32>
    %269 = arith.subf %265, %268 : vector<8x8xf32>
    %270 = math.exp %269 : vector<8x8xf32>
    %cst_172 = arith.constant dense<0.000000e+00> : vector<8xf32>
    %271 = vector.multi_reduction <add>, %270, %cst_172 [1] : vector<8x8xf32> to vector<8xf32>
    %272 = vector.shape_cast %271 : vector<8xf32> to vector<8x1xf32>
    %273 = vector.broadcast %272 : vector<8x1xf32> to vector<8x8xf32>
    %274 = arith.divf %270, %273 : vector<8x8xf32>
    %cst_173 = arith.constant dense<0.000000e+00> : vector<8x8xf32>
    %275 = tpu.matmul %274, %260, %cst_173 {dimension_numbers = #tpu.dot_dimension_numbers<[1], [0], [0], [1], [0, 0, 1, 1], [], []>} : vector<8x8xf32>, vector<8x8xf32>, vector<8x8xf32> -> vector<8x8xf32>
    %c0_174 = arith.constant 0 : index
    %c24_175 = arith.constant 24 : index
    %276 = vector.load %arg18[%c0_174, %c24_175] : memref<8x32xf32, #tpu.memory_space<vmem>>, vector<8x8xf32>
    tpu.vector_store %arg18[%c0_174, %c24_175], %275 {strides = array<i32>} : memref<8x32xf32, #tpu.memory_space<vmem>>, vector<8x8xf32>,
    %c0_176 = arith.constant 0 : index
    %c0_177 = arith.constant 0 : index
    %277 = vector.load %arg18[%c0_176, %c0_177] : memref<8x32xf32, #tpu.memory_space<vmem>>, vector<8x32xf32>
    %c1_178 = arith.constant 1 : index
    %c0_179 = arith.constant 0 : index
    %c0_180 = arith.constant 0 : index
    %278 = vector.load %arg6[%c1_178, %c0_179, %c0_180] : memref<2x32x32xf32, #tpu.memory_space<vmem>>, vector<1x32x32xf32>
    %279 = vector.shape_cast %278 : vector<1x32x32xf32> to vector<32x32xf32>
    %cst_181 = arith.constant dense<0.000000e+00> : vector<8x32xf32>
    %280 = tpu.matmul %277, %279, %cst_181 {dimension_numbers = #tpu.dot_dimension_numbers<[1], [0], [0], [1], [0, 0, 1, 1], [], []>} : vector<8x32xf32>, vector<32x32xf32>, vector<8x32xf32> -> vector<8x32xf32>
    %281 = arith.addf %166, %280 : vector<8x32xf32>
    %c1_182 = arith.constant 1 : index
    %c0_183 = arith.constant 0 : index
    %c0_184 = arith.constant 0 : index
    %282 = vector.load %arg7[%c1_182, %c0_183, %c0_184] : memref<2x1x32xf32, #tpu.memory_space<vmem>>, vector<1x1x32xf32>
    %283 = vector.shape_cast %282 : vector<1x1x32xf32> to vector<1x32xf32>
    %284 = vector.broadcast %283 : vector<1x32xf32> to vector<8x32xf32>
    %285 = arith.addf %281, %284 : vector<8x32xf32>
    %c1_185 = arith.constant 1 : index
    %c0_186 = arith.constant 0 : index
    %c0_187 = arith.constant 0 : index
    %286 = vector.load %arg8[%c1_185, %c0_186, %c0_187] : memref<2x1x32xf32, #tpu.memory_space<vmem>>, vector<1x1x32xf32>
    %287 = vector.shape_cast %286 : vector<1x1x32xf32> to vector<1x32xf32>
    %c1_188 = arith.constant 1 : index
    %c0_189 = arith.constant 0 : index
    %c0_190 = arith.constant 0 : index
    %288 = vector.load %arg9[%c1_188, %c0_189, %c0_190] : memref<2x1x32xf32, #tpu.memory_space<vmem>>, vector<1x1x32xf32>
    %289 = vector.shape_cast %288 : vector<1x1x32xf32> to vector<1x32xf32>
    %cst_191 = arith.constant dense<0.000000e+00> : vector<8xf32>
    %290 = vector.multi_reduction <add>, %285, %cst_191 [1] : vector<8x32xf32> to vector<8xf32>
    %291 = vector.shape_cast %290 : vector<8xf32> to vector<8x1xf32>
    %cst_192 = arith.constant 3.200000e+01 : f32
    %292 = vector.broadcast %cst_192 : f32 to vector<8x1xf32>
    %293 = arith.divf %291, %292 : vector<8x1xf32>
    %294 = vector.broadcast %293 : vector<8x1xf32> to vector<8x32xf32>
    %295 = arith.subf %285, %294 : vector<8x32xf32>
    %296 = arith.mulf %295, %295 : vector<8x32xf32>
    %cst_193 = arith.constant dense<0.000000e+00> : vector<8xf32>
    %297 = vector.multi_reduction <add>, %296, %cst_193 [1] : vector<8x32xf32> to vector<8xf32>
    %298 = vector.shape_cast %297 : vector<8xf32> to vector<8x1xf32>
    %cst_194 = arith.constant 3.200000e+01 : f32
    %299 = vector.broadcast %cst_194 : f32 to vector<8x1xf32>
    %300 = arith.divf %298, %299 : vector<8x1xf32>
    %301 = vector.broadcast %293 : vector<8x1xf32> to vector<8x32xf32>
    %302 = arith.subf %285, %301 : vector<8x32xf32>
    %cst_195 = arith.constant 9.99999974E-6 : f32
    %303 = vector.broadcast %cst_195 : f32 to vector<8x1xf32>
    %304 = arith.addf %300, %303 : vector<8x1xf32>
    %305 = math.rsqrt %304 : vector<8x1xf32>
    %306 = vector.broadcast %305 : vector<8x1xf32> to vector<8x32xf32>
    %307 = arith.mulf %302, %306 : vector<8x32xf32>
    %308 = vector.broadcast %287 : vector<1x32xf32> to vector<8x32xf32>
    %309 = arith.mulf %307, %308 : vector<8x32xf32>
    %310 = vector.broadcast %289 : vector<1x32xf32> to vector<8x32xf32>
    %311 = arith.addf %309, %310 : vector<8x32xf32>
    %c1_196 = arith.constant 1 : index
    %c0_197 = arith.constant 0 : index
    %c0_198 = arith.constant 0 : index
    %312 = vector.load %arg10[%c1_196, %c0_197, %c0_198] : memref<2x32x64xf32, #tpu.memory_space<vmem>>, vector<1x32x64xf32>
    %313 = vector.shape_cast %312 : vector<1x32x64xf32> to vector<32x64xf32>
    %cst_199 = arith.constant dense<0.000000e+00> : vector<8x64xf32>
    %314 = tpu.matmul %311, %313, %cst_199 {dimension_numbers = #tpu.dot_dimension_numbers<[1], [0], [0], [1], [0, 0, 1, 1], [], []>} : vector<8x32xf32>, vector<32x64xf32>, vector<8x64xf32> -> vector<8x64xf32>
    %c1_200 = arith.constant 1 : index
    %c0_201 = arith.constant 0 : index
    %c0_202 = arith.constant 0 : index
    %315 = vector.load %arg11[%c1_200, %c0_201, %c0_202] : memref<2x1x64xf32, #tpu.memory_space<vmem>>, vector<1x1x64xf32>
    %316 = vector.shape_cast %315 : vector<1x1x64xf32> to vector<1x64xf32>
    %317 = vector.broadcast %316 : vector<1x64xf32> to vector<8x64xf32>
    %318 = arith.addf %314, %317 : vector<8x64xf32>
    %cst_203 = arith.constant 0.000000e+00 : f32
    %319 = vector.broadcast %cst_203 : f32 to vector<8x64xf32>
    %320 = arith.maximumf %318, %319 : vector<8x64xf32>
    %c1_204 = arith.constant 1 : index
    %c0_205 = arith.constant 0 : index
    %c0_206 = arith.constant 0 : index
    %321 = vector.load %arg12[%c1_204, %c0_205, %c0_206] : memref<2x64x32xf32, #tpu.memory_space<vmem>>, vector<1x64x32xf32>
    %322 = vector.shape_cast %321 : vector<1x64x32xf32> to vector<64x32xf32>
    %cst_207 = arith.constant dense<0.000000e+00> : vector<8x32xf32>
    %323 = tpu.matmul %320, %322, %cst_207 {dimension_numbers = #tpu.dot_dimension_numbers<[1], [0], [0], [1], [0, 0, 1, 1], [], []>} : vector<8x64xf32>, vector<64x32xf32>, vector<8x32xf32> -> vector<8x32xf32>
    %324 = arith.addf %285, %323 : vector<8x32xf32>
    %c1_208 = arith.constant 1 : index
    %c0_209 = arith.constant 0 : index
    %c0_210 = arith.constant 0 : index
    %325 = vector.load %arg13[%c1_208, %c0_209, %c0_210] : memref<2x1x32xf32, #tpu.memory_space<vmem>>, vector<1x1x32xf32>
    %326 = vector.shape_cast %325 : vector<1x1x32xf32> to vector<1x32xf32>
    %327 = vector.broadcast %326 : vector<1x32xf32> to vector<8x32xf32>
    %328 = arith.addf %324, %327 : vector<8x32xf32>
    %c0_211 = arith.constant 0 : index
    %c0_212 = arith.constant 0 : index
    %329 = vector.load %arg18[%c0_211, %c0_212] : memref<8x32xf32, #tpu.memory_space<vmem>>, vector<8x32xf32>
    tpu.vector_store %arg18[%c0_211, %c0_212], %328 {strides = array<i32>} : memref<8x32xf32, #tpu.memory_space<vmem>>, vector<8x32xf32>,
    %c7 = arith.constant 7 : index
    %c0_213 = arith.constant 0 : index
    %330 = vector.load %arg18[%c7, %c0_213] : memref<8x32xf32, #tpu.memory_space<vmem>>, vector<1x32xf32>
    %c0_214 = arith.constant 0 : index
    %c0_215 = arith.constant 0 : index
    %331 = vector.load %arg14[%c0_214, %c0_215] : memref<32x64xf32, #tpu.memory_space<vmem>>, vector<32x64xf32>
    %cst_216 = arith.constant dense<0.000000e+00> : vector<1x64xf32>
    %332 = tpu.matmul %330, %331, %cst_216 {dimension_numbers = #tpu.dot_dimension_numbers<[1], [0], [0], [1], [0, 0, 1, 1], [], []>} : vector<1x32xf32>, vector<32x64xf32>, vector<1x64xf32> -> vector<1x64xf32>
    %c0_217 = arith.constant 0 : index
    %c0_218 = arith.constant 0 : index
    %333 = vector.load %arg15[%c0_217, %c0_218] : memref<1x64xf32, #tpu.memory_space<vmem>>, vector<1x64xf32>
    %334 = arith.addf %332, %333 : vector<1x64xf32>
    %cst_219 = arith.constant dense<0xFF800000> : vector<1xf32>
    %335 = vector.multi_reduction <maximumf>, %334, %cst_219 [1] : vector<1x64xf32> to vector<1xf32>
    %336 = vector.shape_cast %335 : vector<1xf32> to vector<1x1xf32>
    %337 = vector.broadcast %336 : vector<1x1xf32> to vector<1x64xf32>
    %338 = arith.subf %334, %337 : vector<1x64xf32>
    %339 = math.exp %338 : vector<1x64xf32>
    %cst_220 = arith.constant dense<0.000000e+00> : vector<1xf32>
    %340 = vector.multi_reduction <add>, %339, %cst_220 [1] : vector<1x64xf32> to vector<1xf32>
    %341 = vector.shape_cast %340 : vector<1xf32> to vector<1x1xf32>
    %342 = vector.broadcast %341 : vector<1x1xf32> to vector<1x64xf32>
    %343 = arith.divf %339, %342 : vector<1x64xf32>
    %c0_221 = arith.constant 0 : index
    %c0_222 = arith.constant 0 : index
    %c0_223 = arith.constant 0 : index
    %344 = vector.load %arg16[%c0_221, %c0_222, %c0_223] : memref<1x1x64xf32, #tpu.memory_space<vmem>>, vector<1x1x64xf32>
    %345 = vector.shape_cast %344 : vector<1x1x64xf32> to vector<1x64xf32>
    %346 = vector.shape_cast %343 : vector<1x64xf32> to vector<1x1x64xf32>
    tpu.vector_store %arg16[%c0_221, %c0_222, %c0_223], %346 {strides = array<i32>} : memref<1x1x64xf32, #tpu.memory_space<vmem>>, vector<1x1x64xf32>,
    return
  }
  func.func @transform_0(%arg0: i32) -> (i32, i32, i32) {
    %c0_i32 = arith.constant 0 : i32
    %c0_i32_0 = arith.constant 0 : i32
    %c0_i32_1 = arith.constant 0 : i32
    return %arg0, %c0_i32, %c0_i32_0 : i32, i32, i32
  }
  func.func @transform_1(%arg0: i32) -> (i32, i32, i32) {
    %c0_i32 = arith.constant 0 : i32
    %c0_i32_0 = arith.constant 0 : i32
    %c0_i32_1 = arith.constant 0 : i32
    %c0_i32_2 = arith.constant 0 : i32
    return %c0_i32, %c0_i32_0, %c0_i32_1 : i32, i32, i32
  }
  func.func @transform_2(%arg0: i32) -> (i32, i32, i32) {
    %c0_i32 = arith.constant 0 : i32
    %c0_i32_0 = arith.constant 0 : i32
    %c0_i32_1 = arith.constant 0 : i32
    %c0_i32_2 = arith.constant 0 : i32
    return %c0_i32, %c0_i32_0, %c0_i32_1 : i32, i32, i32
  }
  func.func @transform_3(%arg0: i32) -> (i32, i32, i32) {
    %c0_i32 = arith.constant 0 : i32
    %c0_i32_0 = arith.constant 0 : i32
    %c0_i32_1 = arith.constant 0 : i32
    %c0_i32_2 = arith.constant 0 : i32
    return %c0_i32, %c0_i32_0, %c0_i32_1 : i32, i32, i32
  }
  func.func @transform_4(%arg0: i32) -> (i32, i32, i32) {
    %c0_i32 = arith.constant 0 : i32
    %c0_i32_0 = arith.constant 0 : i32
    %c0_i32_1 = arith.constant 0 : i32
    %c0_i32_2 = arith.constant 0 : i32
    return %c0_i32, %c0_i32_0, %c0_i32_1 : i32, i32, i32
  }
  func.func @transform_5(%arg0: i32) -> (i32, i32, i32) {
    %c0_i32 = arith.constant 0 : i32
    %c0_i32_0 = arith.constant 0 : i32
    %c0_i32_1 = arith.constant 0 : i32
    %c0_i32_2 = arith.constant 0 : i32
    return %c0_i32, %c0_i32_0, %c0_i32_1 : i32, i32, i32
  }
  func.func @transform_6(%arg0: i32) -> (i32, i32, i32) {
    %c0_i32 = arith.constant 0 : i32
    %c0_i32_0 = arith.constant 0 : i32
    %c0_i32_1 = arith.constant 0 : i32
    %c0_i32_2 = arith.constant 0 : i32
    return %c0_i32, %c0_i32_0, %c0_i32_1 : i32, i32, i32
  }
  func.func @transform_7(%arg0: i32) -> (i32, i32, i32) {
    %c0_i32 = arith.constant 0 : i32
    %c0_i32_0 = arith.constant 0 : i32
    %c0_i32_1 = arith.constant 0 : i32
    %c0_i32_2 = arith.constant 0 : i32
    return %c0_i32, %c0_i32_0, %c0_i32_1 : i32, i32, i32
  }
  func.func @transform_8(%arg0: i32) -> (i32, i32, i32) {
    %c0_i32 = arith.constant 0 : i32
    %c0_i32_0 = arith.constant 0 : i32
    %c0_i32_1 = arith.constant 0 : i32
    %c0_i32_2 = arith.constant 0 : i32
    return %c0_i32, %c0_i32_0, %c0_i32_1 : i32, i32, i32
  }
  func.func @transform_9(%arg0: i32) -> (i32, i32, i32) {
    %c0_i32 = arith.constant 0 : i32
    %c0_i32_0 = arith.constant 0 : i32
    %c0_i32_1 = arith.constant 0 : i32
    %c0_i32_2 = arith.constant 0 : i32
    return %c0_i32, %c0_i32_0, %c0_i32_1 : i32, i32, i32
  }
  func.func @transform_10(%arg0: i32) -> (i32, i32, i32) {
    %c0_i32 = arith.constant 0 : i32
    %c0_i32_0 = arith.constant 0 : i32
    %c0_i32_1 = arith.constant 0 : i32
    %c0_i32_2 = arith.constant 0 : i32
    return %c0_i32, %c0_i32_0, %c0_i32_1 : i32, i32, i32
  }
  func.func @transform_11(%arg0: i32) -> (i32, i32, i32) {
    %c0_i32 = arith.constant 0 : i32
    %c0_i32_0 = arith.constant 0 : i32
    %c0_i32_1 = arith.constant 0 : i32
    %c0_i32_2 = arith.constant 0 : i32
    return %c0_i32, %c0_i32_0, %c0_i32_1 : i32, i32, i32
  }
  func.func @transform_12(%arg0: i32) -> (i32, i32, i32) {
    %c0_i32 = arith.constant 0 : i32
    %c0_i32_0 = arith.constant 0 : i32
    %c0_i32_1 = arith.constant 0 : i32
    %c0_i32_2 = arith.constant 0 : i32
    return %c0_i32, %c0_i32_0, %c0_i32_1 : i32, i32, i32
  }
  func.func @transform_13(%arg0: i32) -> (i32, i32) {
    %c0_i32 = arith.constant 0 : i32
    %c0_i32_0 = arith.constant 0 : i32
    %c0_i32_1 = arith.constant 0 : i32
    return %c0_i32, %c0_i32_0 : i32, i32
  }
  func.func @transform_14(%arg0: i32) -> (i32, i32) {
    %c0_i32 = arith.constant 0 : i32
    %c0_i32_0 = arith.constant 0 : i32
    %c0_i32_1 = arith.constant 0 : i32
    return %c0_i32, %c0_i32_0 : i32, i32
  }
  func.func @transform_15(%arg0: i32) -> (i32, i32, i32) {
    %c0_i32 = arith.constant 0 : i32
    %c0_i32_0 = arith.constant 0 : i32
    %c0_i32_1 = arith.constant 0 : i32
    return %arg0, %c0_i32, %c0_i32_0 : i32, i32, i32
  }
}

</mosaic_0001>

<llo_original>
// kernel: roodecat_lm_forward.1
$region0: #{roodecat_lm_forward.1}
  #allocation0 [shape = 'u32[]', space=smem, size = 0x4, offset = 0x4, fixed_abs, tag = 'smem constant byte address 0x4 - core index']
  #allocation1 [shape = 'u32[144,128]{1,0:T(1,128)}', space=vmem, size = 0x12000, scoped, tag = 'internal scratch']
  #allocation2 [shape = 'f32[8,96]{1,0:T(8,128)}', space=vmem, size = 0x1000, scoped, tag = 'scratch operand']
  #allocation3 [shape = 'f32[8,32]{1,0:T(8,128)}', space=vmem, size = 0x1000, scoped, tag = 'scratch operand']
  %s0 = inlined_call_operand.vmem [shape: f32[2,8,32], index: 0, kind: input, shape index: {}]
  %s1 = inlined_call_operand.vmem [shape: f32[2,1,32], index: 1, kind: input, shape index: {}]
  %s2 = inlined_call_operand.vmem [shape: f32[2,1,32], index: 2, kind: input, shape index: {}]
  %s3 = inlined_call_operand.vmem [shape: f32[2,32,96], index: 3, kind: input, shape index: {}]
  %s4 = inlined_call_operand.vmem [shape: f32[2,1,96], index: 4, kind: input, shape index: {}]
  %s5 = inlined_call_operand.vmem [shape: f32[2,32,32], index: 5, kind: input, shape index: {}]
  %s6 = inlined_call_operand.vmem [shape: f32[2,1,32], index: 6, kind: input, shape index: {}]
  %s7 = inlined_call_operand.vmem [shape: f32[2,1,32], index: 7, kind: input, shape index: {}]
  %s8 = inlined_call_operand.vmem [shape: f32[2,1,32], index: 8, kind: input, shape index: {}]
  %s9 = inlined_call_operand.vmem [shape: f32[2,32,64], index: 9, kind: input, shape index: {}]
  %s10 = inlined_call_operand.vmem [shape: f32[2,1,64], index: 10, kind: input, shape index: {}]
  %s11 = inlined_call_operand.vmem [shape: f32[2,64,32], index: 11, kind: input, shape index: {}]
  %s12 = inlined_call_operand.vmem [shape: f32[2,1,32], index: 12, kind: input, shape index: {}]
  %s13 = inlined_call_operand.vmem [shape: f32[32,64], index: 13, kind: input, shape index: {}]
  %s14 = inlined_call_operand.vmem [shape: f32[1,64], index: 14, kind: input, shape index: {}]
  %s15 = inlined_call_operand.hbm [shape: f32[2,1,64], index: 15, kind: output, shape index: {}]
  %s16 = sld [smem:[#allocation0]]
  $region93: #{roodecat_lm_forward.1} parent=0
    _
  %s18 = ssub.s32 1, %s16
  %s19 = scalar_select 0, %s18, %s16
  $region1: #{roodecat_lm_forward.1} parent=0
    #allocation4 [shape = 'u8[1024]{0}', space=vmem, size = 0x400, scoped, tag = 'output window, operand 0']
    #allocation5 [shape = 's32[2]{0}', space=sflag, size = 0x8, scoped, tag = 'scoped memory for roodecat_lm_forward.1']
    %20 = vsyncpa [#allocation5], 0
    %s21 = scalar_lea.sflag [#allocation5], 1
    %22 = vsyncpa %s21, 0
    loop: start=0, step=1, limit=4
    $region2: #{roodecat_lm_forward.1} parent=1 // loop_pre_header
      _
    $region3: #{roodecat_lm_forward.1} parent=1 // loop_header
      %s24 = sphi 0, %s28
      %p25 = scmp.ge.s32.totalorder %s24, 4
      %s34 = sphi 0, %s36
      %s37 = sphi 0, %s34
      %s38 = sphi 0, %s37
      %s54 = sphi 0, %s38
      %s58 = sphi 0, %s58
      %s60 = sphi 0, %s58
      %s61 = sphi 0, %s60
      %s75 = sphi 0, %s61
      %s79 = sphi 0, %s79
      %s81 = sphi 0, %s79
      %s82 = sphi 0, %s81
      %s96 = sphi 0, %s82
      %s100 = sphi 0, %s100
      %s102 = sphi 0, %s100
      %s103 = sphi 0, %s102
      %s117 = sphi 0, %s103
      %s121 = sphi 0, %s121
      %s123 = sphi 0, %s121
      %s124 = sphi 0, %s123
      %s138 = sphi 0, %s124
      %s142 = sphi 0, %s142
      %s144 = sphi 0, %s142
      %s145 = sphi 0, %s144
      %s159 = sphi 0, %s145
      %s163 = sphi 0, %s163
      %s165 = sphi 0, %s163
      %s166 = sphi 0, %s165
      %s180 = sphi 0, %s166
      %s184 = sphi 0, %s184
      %s186 = sphi 0, %s184
      %s187 = sphi 0, %s186
      %s201 = sphi 0, %s187
      %s205 = sphi 0, %s205
      %s207 = sphi 0, %s205
      %s208 = sphi 0, %s207
      %s222 = sphi 0, %s208
      %s226 = sphi 0, %s226
      %s228 = sphi 0, %s226
      %s229 = sphi 0, %s228
      %s243 = sphi 0, %s229
      %s247 = sphi 0, %s247
      %s249 = sphi 0, %s247
      %s250 = sphi 0, %s249
      %s264 = sphi 0, %s250
      %s268 = sphi 0, %s268
      %s270 = sphi 0, %s268
      %s271 = sphi 0, %s270
      %s285 = sphi 0, %s271
      %s289 = sphi 0, %s289
      %s291 = sphi 0, %s289
      %s292 = sphi 0, %s291
      %s306 = sphi 0, %s292
      %s310 = sphi 0, %s310
      %s312 = sphi 0, %s310
      %s313 = sphi 0, %s312
      %s327 = sphi 0, %s313
      %s331 = sphi 0, %s331
      %s333 = sphi 0, %s331
      %s334 = sphi 0, %s333
      %s348 = sphi 0, %s334
      %s354 = sphi 0, %s356
      %s357 = sphi 0, %s354
      %s358 = sphi 0, %s357
      %s374 = sphi 0, %s358
    $region4: #{roodecat_lm_forward.1} parent=1 // loop_header_branch
      %27 = sbr.rel (%p25) target = $region8
    $region5: #{roodecat_lm_forward.1} parent=1 // loop_body
      %s29 = ssub.s32 %s24, 1
      %s30 = ssub.s32 %s24, 2
      %s31 = sadd.s32 %s24, 1
      %s32 = ssub.s32 %s24, %s31
      %p33 = scmp.eq.s32.totalorder %s32, 0
      %s35 = sadd.s32 %s34, 1
      %s36 = scalar_select %p33, %s34, %s35
      %p39 = pneg %p33
      %p40 = scmp.eq.s32.totalorder %s24, 1
      %p41 = por %p39, %p40
      %p42 = scmp.ne.s32.totalorder %s34, %s37
      %p43 = scmp.eq.s32.totalorder %s24, 0
      %p44 = por %p42, %p43
      %p45 = scmp.ne.s32.totalorder %s34, %s37
      %p46 = scmp.eq.s32.totalorder %s29, 1
      %p47 = por %p45, %p46
      %p48 = scmp.ne.s32.totalorder %s37, %s38
      %p49 = scmp.eq.s32.totalorder %s29, 0
      %p50 = por %p48, %p49
      %p51 = scmp.ne.s32.totalorder %s37, %s38
      %p52 = scmp.eq.s32.totalorder %s30, 1
      %p53 = por %p51, %p52
      %p55 = scmp.ne.s32.totalorder %s38, %s54
      %p56 = scmp.eq.s32.totalorder %s30, 0
      %p57 = por %p55, %p56
      %s59 = sadd.s32 %s58, 1
      %p62 = scmp.eq.s32.totalorder %s24, 1
      %p63 = scmp.ne.s32.totalorder %s58, %s60
      %p64 = scmp.eq.s32.totalorder %s24, 0
      %p65 = por %p63, %p64
      %p66 = scmp.ne.s32.totalorder %s58, %s60
      %p67 = scmp.eq.s32.totalorder %s29, 1
      %p68 = por %p66, %p67
      %p69 = scmp.ne.s32.totalorder %s60, %s61
      %p70 = scmp.eq.s32.totalorder %s29, 0
      %p71 = por %p69, %p70
      %p72 = scmp.ne.s32.totalorder %s60, %s61
      %p73 = scmp.eq.s32.totalorder %s30, 1
      %p74 = por %p72, %p73
      %p76 = scmp.ne.s32.totalorder %s61, %s75
      %p77 = scmp.eq.s32.totalorder %s30, 0
      %p78 = por %p76, %p77
      %s80 = sadd.s32 %s79, 1
      %p83 = scmp.eq.s32.totalorder %s24, 1
      %p84 = scmp.ne.s32.totalorder %s79, %s81
      %p85 = scmp.eq.s32.totalorder %s24, 0
      %p86 = por %p84, %p85
      %p87 = scmp.ne.s32.totalorder %s79, %s81
      %p88 = scmp.eq.s32.totalorder %s29, 1
      %p89 = por %p87, %p88
      %p90 = scmp.ne.s32.totalorder %s81, %s82
      %p91 = scmp.eq.s32.totalorder %s29, 0
      %p92 = por %p90, %p91
      %p93 = scmp.ne.s32.totalorder %s81, %s82
      %p94 = scmp.eq.s32.totalorder %s30, 1
      %p95 = por %p93, %p94
      %p97 = scmp.ne.s32.totalorder %s82, %s96
      %p98 = scmp.eq.s32.totalorder %s30, 0
      %p99 = por %p97, %p98
      %s101 = sadd.s32 %s100, 1
      %p104 = scmp.eq.s32.totalorder %s24, 1
      %p105 = scmp.ne.s32.totalorder %s100, %s102
      %p106 = scmp.eq.s32.totalorder %s24, 0
      %p107 = por %p105, %p106
      %p108 = scmp.ne.s32.totalorder %s100, %s102
      %p109 = scmp.eq.s32.totalorder %s29, 1
      %p110 = por %p108, %p109
      %p111 = scmp.ne.s32.totalorder %s102, %s103
      %p112 = scmp.eq.s32.totalorder %s29, 0
      %p113 = por %p111, %p112
      %p114 = scmp.ne.s32.totalorder %s102, %s103
      %p115 = scmp.eq.s32.totalorder %s30, 1
      %p116 = por %p114, %p115
      %p118 = scmp.ne.s32.totalorder %s103, %s117
      %p119 = scmp.eq.s32.totalorder %s30, 0
      %p120 = por %p118, %p119
      %s122 = sadd.s32 %s121, 1
      %p125 = scmp.eq.s32.totalorder %s24, 1
      %p126 = scmp.ne.s32.totalorder %s121, %s123
      %p127 = scmp.eq.s32.totalorder %s24, 0
      %p128 = por %p126, %p127
      %p129 = scmp.ne.s32.totalorder %s121, %s123
      %p130 = scmp.eq.s32.totalorder %s29, 1
      %p131 = por %p129, %p130
      %p132 = scmp.ne.s32.totalorder %s123, %s124
      %p133 = scmp.eq.s32.totalorder %s29, 0
      %p134 = por %p132, %p133
      %p135 = scmp.ne.s32.totalorder %s123, %s124
      %p136 = scmp.eq.s32.totalorder %s30, 1
      %p137 = por %p135, %p136
      %p139 = scmp.ne.s32.totalorder %s124, %s138
      %p140 = scmp.eq.s32.totalorder %s30, 0
      %p141 = por %p139, %p140
      %s143 = sadd.s32 %s142, 1
      %p146 = scmp.eq.s32.totalorder %s24, 1
      %p147 = scmp.ne.s32.totalorder %s142, %s144
      %p148 = scmp.eq.s32.totalorder %s24, 0
      %p149 = por %p147, %p148
      %p150 = scmp.ne.s32.totalorder %s142, %s144
      %p151 = scmp.eq.s32.totalorder %s29, 1
      %p152 = por %p150, %p151
      %p153 = scmp.ne.s32.totalorder %s144, %s145
      %p154 = scmp.eq.s32.totalorder %s29, 0
      %p155 = por %p153, %p154
      %p156 = scmp.ne.s32.totalorder %s144, %s145
      %p157 = scmp.eq.s32.totalorder %s30, 1
      %p158 = por %p156, %p157
      %p160 = scmp.ne.s32.totalorder %s145, %s159
      %p161 = scmp.eq.s32.totalorder %s30, 0
      %p162 = por %p160, %p161
      %s164 = sadd.s32 %s163, 1
      %p167 = scmp.eq.s32.totalorder %s24, 1
      %p168 = scmp.ne.s32.totalorder %s163, %s165
      %p169 = scmp.eq.s32.totalorder %s24, 0
      %p170 = por %p168, %p169
      %p171 = scmp.ne.s32.totalorder %s163, %s165
      %p172 = scmp.eq.s32.totalorder %s29, 1
      %p173 = por %p171, %p172
      %p174 = scmp.ne.s32.totalorder %s165, %s166
      %p175 = scmp.eq.s32.totalorder %s29, 0
      %p176 = por %p174, %p175
      %p177 = scmp.ne.s32.totalorder %s165, %s166
      %p178 = scmp.eq.s32.totalorder %s30, 1
      %p179 = por %p177, %p178
      %p181 = scmp.ne.s32.totalorder %s166, %s180
      %p182 = scmp.eq.s32.totalorder %s30, 0
      %p183 = por %p181, %p182
      %s185 = sadd.s32 %s184, 1
      %p188 = scmp.eq.s32.totalorder %s24, 1
      %p189 = scmp.ne.s32.totalorder %s184, %s186
      %p190 = scmp.eq.s32.totalorder %s24, 0
      %p191 = por %p189, %p190
      %p192 = scmp.ne.s32.totalorder %s184, %s186
      %p193 = scmp.eq.s32.totalorder %s29, 1
      %p194 = por %p192, %p193
      %p195 = scmp.ne.s32.totalorder %s186, %s187
      %p196 = scmp.eq.s32.totalorder %s29, 0
      %p197 = por %p195, %p196
      %p198 = scmp.ne.s32.totalorder %s186, %s187
      %p199 = scmp.eq.s32.totalorder %s30, 1
      %p200 = por %p198, %p199
      %p202 = scmp.ne.s32.totalorder %s187, %s201
      %p203 = scmp.eq.s32.totalorder %s30, 0
      %p204 = por %p202, %p203
      %s206 = sadd.s32 %s205, 1
      %p209 = scmp.eq.s32.totalorder %s24, 1
      %p210 = scmp.ne.s32.totalorder %s205, %s207
      %p211 = scmp.eq.s32.totalorder %s24, 0
      %p212 = por %p210, %p211
      %p213 = scmp.ne.s32.totalorder %s205, %s207
      %p214 = scmp.eq.s32.totalorder %s29, 1
      %p215 = por %p213, %p214
      %p216 = scmp.ne.s32.totalorder %s207, %s208
      %p217 = scmp.eq.s32.totalorder %s29, 0
      %p218 = por %p216, %p217
      %p219 = scmp.ne.s32.totalorder %s207, %s208
      %p220 = scmp.eq.s32.totalorder %s30, 1
      %p221 = por %p219, %p220
      %p223 = scmp.ne.s32.totalorder %s208, %s222
      %p224 = scmp.eq.s32.totalorder %s30, 0
      %p225 = por %p223, %p224
      %s227 = sadd.s32 %s226, 1
      %p230 = scmp.eq.s32.totalorder %s24, 1
      %p231 = scmp.ne.s32.totalorder %s226, %s228
      %p232 = scmp.eq.s32.totalorder %s24, 0
      %p233 = por %p231, %p232
      %p234 = scmp.ne.s32.totalorder %s226, %s228
      %p235 = scmp.eq.s32.totalorder %s29, 1
      %p236 = por %p234, %p235
      %p237 = scmp.ne.s32.totalorder %s228, %s229
      %p238 = scmp.eq.s32.totalorder %s29, 0
      %p239 = por %p237, %p238
      %p240 = scmp.ne.s32.totalorder %s228, %s229
      %p241 = scmp.eq.s32.totalorder %s30, 1
      %p242 = por %p240, %p241
      %p244 = scmp.ne.s32.totalorder %s229, %s243
      %p245 = scmp.eq.s32.totalorder %s30, 0
      %p246 = por %p244, %p245
      %s248 = sadd.s32 %s247, 1
      %p251 = scmp.eq.s32.totalorder %s24, 1
      %p252 = scmp.ne.s32.totalorder %s247, %s249
      %p253 = scmp.eq.s32.totalorder %s24, 0
      %p254 = por %p252, %p253
      %p255 = scmp.ne.s32.totalorder %s247, %s249
      %p256 = scmp.eq.s32.totalorder %s29, 1
      %p257 = por %p255, %p256
      %p258 = scmp.ne.s32.totalorder %s249, %s250
      %p259 = scmp.eq.s32.totalorder %s29, 0
      %p260 = por %p258, %p259
      %p261 = scmp.ne.s32.totalorder %s249, %s250
      %p262 = scmp.eq.s32.totalorder %s30, 1
      %p263 = por %p261, %p262
      %p265 = scmp.ne.s32.totalorder %s250, %s264
      %p266 = scmp.eq.s32.totalorder %s30, 0
      %p267 = por %p265, %p266
      %s269 = sadd.s32 %s268, 1
      %p272 = scmp.eq.s32.totalorder %s24, 1
      %p273 = scmp.ne.s32.totalorder %s268, %s270
      %p274 = scmp.eq.s32.totalorder %s24, 0
      %p275 = por %p273, %p274
      %p276 = scmp.ne.s32.totalorder %s268, %s270
      %p277 = scmp.eq.s32.totalorder %s29, 1
      %p278 = por %p276, %p277
      %p279 = scmp.ne.s32.totalorder %s270, %s271
      %p280 = scmp.eq.s32.totalorder %s29, 0
      %p281 = por %p279, %p280
      %p282 = scmp.ne.s32.totalorder %s270, %s271
      %p283 = scmp.eq.s32.totalorder %s30, 1
      %p284 = por %p282, %p283
      %p286 = scmp.ne.s32.totalorder %s271, %s285
      %p287 = scmp.eq.s32.totalorder %s30, 0
      %p288 = por %p286, %p287
      %s290 = sadd.s32 %s289, 1
      %p293 = scmp.eq.s32.totalorder %s24, 1
      %p294 = scmp.ne.s32.totalorder %s289, %s291
      %p295 = scmp.eq.s32.totalorder %s24, 0
      %p296 = por %p294, %p295
      %p297 = scmp.ne.s32.totalorder %s289, %s291
      %p298 = scmp.eq.s32.totalorder %s29, 1
      %p299 = por %p297, %p298
      %p300 = scmp.ne.s32.totalorder %s291, %s292
      %p301 = scmp.eq.s32.totalorder %s29, 0
      %p302 = por %p300, %p301
      %p303 = scmp.ne.s32.totalorder %s291, %s292
      %p304 = scmp.eq.s32.totalorder %s30, 1
      %p305 = por %p303, %p304
      %p307 = scmp.ne.s32.totalorder %s292, %s306
      %p308 = scmp.eq.s32.totalorder %s30, 0
      %p309 = por %p307, %p308
      %s311 = sadd.s32 %s310, 1
      %p314 = scmp.eq.s32.totalorder %s24, 1
      %p315 = scmp.ne.s32.totalorder %s310, %s312
      %p316 = scmp.eq.s32.totalorder %s24, 0
      %p317 = por %p315, %p316
      %p318 = scmp.ne.s32.totalorder %s310, %s312
      %p319 = scmp.eq.s32.totalorder %s29, 1
      %p320 = por %p318, %p319
      %p321 = scmp.ne.s32.totalorder %s312, %s313
      %p322 = scmp.eq.s32.totalorder %s29, 0
      %p323 = por %p321, %p322
      %p324 = scmp.ne.s32.totalorder %s312, %s313
      %p325 = scmp.eq.s32.totalorder %s30, 1
      %p326 = por %p324, %p325
      %p328 = scmp.ne.s32.totalorder %s313, %s327
      %p329 = scmp.eq.s32.totalorder %s30, 0
      %p330 = por %p328, %p329
      %s332 = sadd.s32 %s331, 1
      %p335 = scmp.eq.s32.totalorder %s24, 1
      %p336 = scmp.ne.s32.totalorder %s331, %s333
      %p337 = scmp.eq.s32.totalorder %s24, 0
      %p338 = por %p336, %p337
      %p339 = scmp.ne.s32.totalorder %s331, %s333
      %p340 = scmp.eq.s32.totalorder %s29, 1
      %p341 = por %p339, %p340
      %p342 = scmp.ne.s32.totalorder %s333, %s334
      %p343 = scmp.eq.s32.totalorder %s29, 0
      %p344 = por %p342, %p343
      %p345 = scmp.ne.s32.totalorder %s333, %s334
      %p346 = scmp.eq.s32.totalorder %s30, 1
      %p347 = por %p345, %p346
      %p349 = scmp.ne.s32.totalorder %s334, %s348
      %p350 = scmp.eq.s32.totalorder %s30, 0
      %p351 = por %p349, %p350
      %s352 = ssub.s32 %s24, %s31
      %p353 = scmp.eq.s32.totalorder %s352, 0
      %s355 = sadd.s32 %s354, 1
      %s356 = scalar_select %p353, %s354, %s355
      %p359 = pneg %p353
      %p360 = scmp.eq.s32.totalorder %s24, 1
      %p361 = por %p359, %p360
      %p362 = scmp.ne.s32.totalorder %s354, %s357
      %p363 = scmp.eq.s32.totalorder %s24, 0
      %p364 = por %p362, %p363
      %p365 = scmp.ne.s32.totalorder %s354, %s357
      %p366 = scmp.eq.s32.totalorder %s29, 1
      %p367 = por %p365, %p366
      %p368 = scmp.ne.s32.totalorder %s357, %s358
      %p369 = scmp.eq.s32.totalorder %s29, 0
      %p370 = por %p368, %p369
      %p371 = scmp.ne.s32.totalorder %s357, %s358
      %p372 = scmp.eq.s32.totalorder %s30, 1
      %p373 = por %p371, %p372
      %p375 = scmp.ne.s32.totalorder %s358, %s374
      %p376 = scmp.eq.s32.totalorder %s30, 0
      %p377 = por %p375, %p376
      %p378 = scmp.le.s32.totalorder 1, %s24
      %p379 = scmp.lt.s32.totalorder %s24, 3
      %p380 = pnand %p378, %p379
      %p381 = pneg %p380
      // Predicated region
      $region9: #{roodecat_lm_forward.1} parent=5 // pred_check
        _
      $region10: #{roodecat_lm_forward.1} parent=5 // pred_check_branch
        %383 = sbr.rel (%p380) target = $region12
      $region11: #{roodecat_lm_forward.1} parent=5 // pred_region
        %s384 = ssub.s32 %s24, 1
        // Predicated region
        $region13: #{roodecat_lm_forward.1} parent=11 // pred_check
          %p385 = pneg %p71
        $region14: #{roodecat_lm_forward.1} parent=11 // pred_check_branch
          %387 = sbr.rel (%p385) target = $region16
        $region15: #{roodecat_lm_forward.1} parent=11 // pred_region
          _
        $region16: #{roodecat_lm_forward.1} parent=11 // pred_fallthru
          _
        // Predicated region
        $region17: #{roodecat_lm_forward.1} parent=11 // pred_check
          %p388 = pneg %p92
        $region18: #{roodecat_lm_forward.1} parent=11 // pred_check_branch
          %390 = sbr.rel (%p388) target = $region20
        $region19: #{roodecat_lm_forward.1} parent=11 // pred_region
          _
        $region20: #{roodecat_lm_forward.1} parent=11 // pred_fallthru
          _
        // Predicated region
        $region21: #{roodecat_lm_forward.1} parent=11 // pred_check
          %p391 = pneg %p113
        $region22: #{roodecat_lm_forward.1} parent=11 // pred_check_branch
          %393 = sbr.rel (%p391) target = $region24
        $region23: #{roodecat_lm_forward.1} parent=11 // pred_region
          _
        $region24: #{roodecat_lm_forward.1} parent=11 // pred_fallthru
          _
        // Predicated region
        $region25: #{roodecat_lm_forward.1} parent=11 // pred_check
          %p394 = pneg %p134
        $region26: #{roodecat_lm_forward.1} parent=11 // pred_check_branch
          %396 = sbr.rel (%p394) target = $region28
        $region27: #{roodecat_lm_forward.1} parent=11 // pred_region
          _
        $region28: #{roodecat_lm_forward.1} parent=11 // pred_fallthru
          _
        // Predicated region
        $region29: #{roodecat_lm_forward.1} parent=11 // pred_check
          %p397 = pneg %p155
        $region30: #{roodecat_lm_forward.1} parent=11 // pred_check_branch
          %399 = sbr.rel (%p397) target = $region32
        $region31: #{roodecat_lm_forward.1} parent=11 // pred_region
          _
        $region32: #{roodecat_lm_forward.1} parent=11 // pred_fallthru
          _
        // Predicated region
        $region33: #{roodecat_lm_forward.1} parent=11 // pred_check
          %p400 = pneg %p176
        $region34: #{roodecat_lm_forward.1} parent=11 // pred_check_branch
          %402 = sbr.rel (%p400) target = $region36
        $region35: #{roodecat_lm_forward.1} parent=11 // pred_region
          _
        $region36: #{roodecat_lm_forward.1} parent=11 // pred_fallthru
          _
        // Predicated region
        $region37: #{roodecat_lm_forward.1} parent=11 // pred_check
          %p403 = pneg %p197
        $region38: #{roodecat_lm_forward.1} parent=11 // pred_check_branch
          %405 = sbr.rel (%p403) target = $region40
        $region39: #{roodecat_lm_forward.1} parent=11 // pred_region
          _
        $region40: #{roodecat_lm_forward.1} parent=11 // pred_fallthru
          _
        // Predicated region
        $region41: #{roodecat_lm_forward.1} parent=11 // pred_check
          %p406 = pneg %p218
        $region42: #{roodecat_lm_forward.1} parent=11 // pred_check_branch
          %408 = sbr.rel (%p406) target = $region44
        $region43: #{roodecat_lm_forward.1} parent=11 // pred_region
          _
        $region44: #{roodecat_lm_forward.1} parent=11 // pred_fallthru
          _
        // Predicated region
        $region45: #{roodecat_lm_forward.1} parent=11 // pred_check
          %p409 = pneg %p239
        $region46: #{roodecat_lm_forward.1} parent=11 // pred_check_branch
          %411 = sbr.rel (%p409) target = $region48
        $region47: #{roodecat_lm_forward.1} parent=11 // pred_region
          _
        $region48: #{roodecat_lm_forward.1} parent=11 // pred_fallthru
          _
        // Predicated region
        $region49: #{roodecat_lm_forward.1} parent=11 // pred_check
          %p412 = pneg %p260
        $region50: #{roodecat_lm_forward.1} parent=11 // pred_check_branch
          %414 = sbr.rel (%p412) target = $region52
        $region51: #{roodecat_lm_forward.1} parent=11 // pred_region
          _
        $region52: #{roodecat_lm_forward.1} parent=11 // pred_fallthru
          _
        // Predicated region
        $region53: #{roodecat_lm_forward.1} parent=11 // pred_check
          %p415 = pneg %p281
        $region54: #{roodecat_lm_forward.1} parent=11 // pred_check_branch
          %417 = sbr.rel (%p415) target = $region56
        $region55: #{roodecat_lm_forward.1} parent=11 // pred_region
          _
        $region56: #{roodecat_lm_forward.1} parent=11 // pred_fallthru
          _
        // Predicated region
        $region57: #{roodecat_lm_forward.1} parent=11 // pred_check
          %p418 = pneg %p302
        $region58: #{roodecat_lm_forward.1} parent=11 // pred_check_branch
          %420 = sbr.rel (%p418) target = $region60
        $region59: #{roodecat_lm_forward.1} parent=11 // pred_region
          _
        $region60: #{roodecat_lm_forward.1} parent=11 // pred_fallthru
          _
        // Predicated region
        $region61: #{roodecat_lm_forward.1} parent=11 // pred_check
          %p421 = pneg %p323
        $region62: #{roodecat_lm_forward.1} parent=11 // pred_check_branch
          %423 = sbr.rel (%p421) target = $region64
        $region63: #{roodecat_lm_forward.1} parent=11 // pred_region
          _
        $region64: #{roodecat_lm_forward.1} parent=11 // pred_fallthru
          _
        // Predicated region
        $region65: #{roodecat_lm_forward.1} parent=11 // pred_check
          %p424 = pneg %p344
        $region66: #{roodecat_lm_forward.1} parent=11 // pred_check_branch
          %426 = sbr.rel (%p424) target = $region68
        $region67: #{roodecat_lm_forward.1} parent=11 // pred_region
          _
        $region68: #{roodecat_lm_forward.1} parent=11 // pred_fallthru
          _
      $region12: #{roodecat_lm_forward.1} parent=5 // pred_fallthru
        _
      %p427 = scmp.lt.s32.totalorder %s24, 2
      // Predicated region
      $region69: #{roodecat_lm_forward.1} parent=5 // pred_check
        %p428 = pneg %p427
      $region70: #{roodecat_lm_forward.1} parent=5 // pred_check_branch
        %430 = sbr.rel (%p428) target = $region72
      $region71: #{roodecat_lm_forward.1} parent=5 // pred_region
        // Predicated region
        $region73: #{roodecat_lm_forward.1} parent=71 // pred_check
          %p431 = pneg %p44
        $region74: #{roodecat_lm_forward.1} parent=71 // pred_check_branch
          %433 = sbr.rel (%p431) target = $region76
        $region75: #{roodecat_lm_forward.1} parent=71 // pred_region
          %p434 = scmp.lt.s32.totalorder %s24, 1
          %s435 = scalar_select %p434, %s24, 1
          %s436 = smul.addr %s435, 8
          %s437 = scalar_lea.vmem %s0, %s436
        $region76: #{roodecat_lm_forward.1} parent=71 // pred_fallthru
          _
      $region72: #{roodecat_lm_forward.1} parent=5 // pred_fallthru
        _
      %p438 = scmp.le.s32.totalorder 1, %s24
      %p439 = scmp.lt.s32.totalorder %s24, 3
      %p440 = pnand %p438, %p439
      %p441 = pneg %p440
      // Predicated region
      $region77: #{roodecat_lm_forward.1} parent=5 // pred_check
        _
      $region78: #{roodecat_lm_forward.1} parent=5 // pred_check_branch
        %443 = sbr.rel (%p440) target = $region80
      $region79: #{roodecat_lm_forward.1} parent=5 // pred_region
        %s444 = ssub.s32 %s24, 1
        %p445 = scmp.lt.s32.totalorder %s29, 1
        %s446 = scalar_select %p445, %s29, 1
        %s447 = smul.addr %s446, 8
        %s448 = scalar_lea.vmem %s0, %s447
        %p449 = pneg %p50
        %p450 = pneg %p47
        %p451 = pneg %p71
        %p452 = pneg %p68
        %p453 = pneg %p92
        %p454 = pneg %p89
        %p455 = pneg %p113
        %p456 = pneg %p110
        %p457 = pneg %p134
        %p458 = pneg %p131
        %p459 = pneg %p155
        %p460 = pneg %p152
        %p461 = pneg %p176
        %p462 = pneg %p173
        %p463 = pneg %p197
        %p464 = pneg %p194
        %p465 = pneg %p218
        %p466 = pneg %p215
        %p467 = pneg %p239
        %p468 = pneg %p236
        %p469 = pneg %p260
        %p470 = pneg %p257
        %p471 = pneg %p281
        %p472 = pneg %p278
        %p473 = pneg %p302
        %p474 = pneg %p299
        %p475 = pneg %p323
        %p476 = pneg %p320
        %p477 = pneg %p344
        %p478 = pneg %p341
        %p479 = pneg %p370
        %p480 = pneg %p367
        %s481 = sand.u32 %s357, 1
        %s482 = scalar_lea.sflag [#allocation5], %s481
        %s483 = sand.u32 %s357, 1
        %s484 = scalar_lea.vmem [#allocation4], %s483
        %p485 = scmp.lt.s32.totalorder %s29, 1
        %s486 = scalar_select %p485, %s29, 1
        %s487 = smul.addr %s486, 8
        %s488 = scalar_lea.vmem %s0, %s487
        %v489 = vld [vmem:[%s488] sm:$0xff]
        %v490 = vlaneseq
        %v491 = vshrl.u32 %v490, 7
        %v492 = vlaneseq
        %v493 = vand.u32 %v492, 127
        %vm494 = vcmp.le.s32.totalorder %v493, %v491
        %v495 = vld [vmem:[%s1] sm:$0x1]
        %v496 = vld [vmem:[%s2] sm:$0x1]
        %vm497 = vcmask 261120
        %v498 = vsel %vm497, %v489, 0.0
        %499 = vadd.xlane.f32.xlu0 %v498
        %v500 = vpop.xlane.xlu0 %499
        %v501 = vrcp.pop 32.0
        %v502 = vmul.f32 %v500, %v501
        %v503 = vsub.f32 %v489, %v502
        %v504 = vmul.f32 %v503, %v503
        %v505 = vsel %vm497, %v504, 0.0
        %506 = vadd.xlane.f32.xlu0 %v505
        %v507 = vpop.xlane.xlu0 %506
        %v508 = vmul.f32 %v507, %v501
        %v509 = vadd.f32 %v508, 1e-05
        %v510 = vrsqrt.pop %v509
        %v511 = vmul.f32 %v503, %v510
        %v513 = vlaneseq
        %v514 = vshrl.u32 %v513, 7
        %v515 = vsub.s32 0, %v514
        %v516 = vrot.slane %v495, %v515
        %v518 = vmul.f32 %v511, %v516
        %v520 = vlaneseq
        %v521 = vshrl.u32 %v520, 7
        %v522 = vsub.s32 0, %v521
        %v523 = vrot.slane %v496, %v522
        %v525 = vadd.f32 %v518, %v523
        %v526 = vld [vmem:[%s3] sm:$0xff]
        %v527 = vld [vmem:[%s3 + $0x8] sm:$0xff]
        %v528 = vld [vmem:[%s3 + $0x10] sm:$0xff]
        %v529 = vld [vmem:[%s3 + $0x18] sm:$0xff]
        %v530 = vld [vmem:[%s4] sm:$0x1]
        %v532 = vlaneseq
        %v533 = vshrl.u32 %v532, 7
        %v534 = vsub.s32 0, %v533
        %v535 = vrot.slane %v530, %v534
        %v538 = vsel %vm497, %v525, 0
        %540 = vmatprep.subr.mxu0 0.0
        %541 = vmatpush1.msra.mxu0 0.0
        %542 = vmatprep.subr.mxu0 0.0
        %543 = vmatpush1.msra.mxu0 0.0
        %544 = vmatprep.subr.mxu0 0.0
        %545 = vmatpush1.msra.mxu0 0.0
        %546 = vmatprep.subr.mxu0 0.0
        %547 = vmatpush1.msra.mxu0 0.0
        %548 = vmatprep.subr.mxu0 0.0
        %549 = vmatpush1.msra.mxu0 0.0
        %550 = vmatprep.subr.mxu0 0.0
        %551 = vmatpush1.msra.mxu0 0.0
        %552 = vmatprep.subr.mxu0 0.0
        %553 = vmatpush1.msra.mxu0 0.0
        %554 = vmatprep.subr.mxu0 0.0
        %555 = vmatpush1.msra.mxu0 0.0
        %556 = vmatprep.subr.mxu0 0.0
        %557 = vmatpush1.msra.mxu0 0.0
        %558 = vmatprep.subr.mxu0 0.0
        %559 = vmatpush1.msra.mxu0 0.0
        %560 = vmatprep.subr.mxu0 0.0
        %561 = vmatpush1.msra.mxu0 0.0
        %562 = vmatprep.subr.mxu0 0.0
        %563 = vmatpush1.msra.mxu0 0.0
        %564 = vmatprep.subr.mxu0 0.0
        %565 = vmatpush1.msra.mxu0 %v529
        %566 = vmatprep.subr.mxu0 0.0
        %567 = vmatpush1.msra.mxu0 %v528
        %568 = vmatprep.subr.mxu0 0.0
        %569 = vmatpush1.msra.mxu0 %v527
        %570 = vmatprep.subr.mxu0 0.0
        %571 = vmatpush1.msra.mxu0 %v526
        %572 = vmatprep.subr.mxu0 0.0
        %573 = vmatpush2.msra.mxu0 0.0
        %574 = vmatprep.subr.mxu0 0.0
        %575 = vmatpush2.msra.mxu0 0.0
        %576 = vmatprep.subr.mxu0 0.0
        %577 = vmatpush2.msra.mxu0 0.0
        %578 = vmatprep.subr.mxu0 0.0
        %579 = vmatpush2.msra.mxu0 0.0
        %580 = vmatprep.subr.mxu0 0.0
        %581 = vmatpush2.msra.mxu0 0.0
        %582 = vmatprep.subr.mxu0 0.0
        %583 = vmatpush2.msra.mxu0 0.0
        %584 = vmatprep.subr.mxu0 0.0
        %585 = vmatpush2.msra.mxu0 0.0
        %586 = vmatprep.subr.mxu0 0.0
        %587 = vmatpush2.msra.mxu0 0.0
        %588 = vmatprep.subr.mxu0 0.0
        %589 = vmatpush2.msra.mxu0 0.0
        %590 = vmatprep.subr.mxu0 0.0
        %591 = vmatpush2.msra.mxu0 0.0
        %592 = vmatprep.subr.mxu0 0.0
        %593 = vmatpush2.msra.mxu0 0.0
        %594 = vmatprep.subr.mxu0 0.0
        %595 = vmatpush2.msra.mxu0 0.0
        %596 = vmatprep.subr.mxu0 0.0
        %597 = vmatpush2.msra.mxu0 0.0
        %598 = vmatprep.subr.mxu0 0.0
        %599 = vmatpush2.msra.mxu0 0.0
        %600 = vmatprep.subr.mxu0 0.0
        %601 = vmatpush2.msra.mxu0 0.0
        %602 = vmatprep.subr.mxu0 0.0
        %603 = vmatpush2.msra.mxu0 0.0
        %604 = vmatprep.mubr.f32.mxu0 0.0
        %605 = vmatmul.mubr.f32.gmra.mxu0 %v538
        %v606 = vpop.f32.mrf.mxu0
        %v607 = vadd.f32 %v535, %v606
        %v608 = vpop.f32.mrf.mxu0
        %609 = vdwg.mxu0
        %vm610 = vcmask 785408
        %611 = vst.msk [vmem:[#allocation2] sm:$0xff] %vm610, %v607
        %v612 = vld [vmem:[#allocation2] sm:$0xff]
        %614 = vrot.lane.b32.xlu0 %v612, 96
        %v615 = vpop.permute.xlu0 %614
        %vm616 = vcmask 64512
        %v617 = vsel %vm616, %v612, 0
        %v619 = vsel %vm616, %v615, 0
        %621 = vmatprep.subr.mxu0 0.0
        %622 = vmatpush1.xpose.msra.mxu0 0.0
        %623 = vmatprep.subr.mxu0 0.0
        %624 = vmatpush1.xpose.msra.mxu0 0.0
        %625 = vmatprep.subr.mxu0 0.0
        %626 = vmatpush1.xpose.msra.mxu0 0.0
        %627 = vmatprep.subr.mxu0 0.0
        %628 = vmatpush1.xpose.msra.mxu0 0.0
        %629 = vmatprep.subr.mxu0 0.0
        %630 = vmatpush1.xpose.msra.mxu0 0.0
        %631 = vmatprep.subr.mxu0 0.0
        %632 = vmatpush1.xpose.msra.mxu0 0.0
        %633 = vmatprep.subr.mxu0 0.0
        %634 = vmatpush1.xpose.msra.mxu0 0.0
        %635 = vmatprep.subr.mxu0 0.0
        %636 = vmatpush1.xpose.msra.mxu0 0.0
        %637 = vmatprep.subr.mxu0 0.0
        %638 = vmatpush1.xpose.msra.mxu0 0.0
        %639 = vmatprep.subr.mxu0 0.0
        %640 = vmatpush1.xpose.msra.mxu0 0.0
        %641 = vmatprep.subr.mxu0 0.0
        %642 = vmatpush1.xpose.msra.mxu0 0.0
        %643 = vmatprep.subr.mxu0 0.0
        %644 = vmatpush1.xpose.msra.mxu0 0.0
        %645 = vmatprep.subr.mxu0 0.0
        %646 = vmatpush1.xpose.msra.mxu0 0.0
        %647 = vmatprep.subr.mxu0 0.0
        %648 = vmatpush1.xpose.msra.mxu0 0.0
        %649 = vmatprep.subr.mxu0 0.0
        %650 = vmatpush1.xpose.msra.mxu0 0.0
        %651 = vmatprep.subr.mxu0 0.0
        %652 = vmatpush1.xpose.msra.mxu0 %v619
        %653 = vmatprep.subr.mxu0 0.0
        %654 = vmatpush2.xpose.msra.mxu0 0.0
        %655 = vmatprep.subr.mxu0 0.0
        %656 = vmatpush2.xpose.msra.mxu0 0.0
        %657 = vmatprep.subr.mxu0 0.0
        %658 = vmatpush2.xpose.msra.mxu0 0.0
        %659 = vmatprep.subr.mxu0 0.0
        %660 = vmatpush2.xpose.msra.mxu0 0.0
        %661 = vmatprep.subr.mxu0 0.0
        %662 = vmatpush2.xpose.msra.mxu0 0.0
        %663 = vmatprep.subr.mxu0 0.0
        %664 = vmatpush2.xpose.msra.mxu0 0.0
        %665 = vmatprep.subr.mxu0 0.0
        %666 = vmatpush2.xpose.msra.mxu0 0.0
        %667 = vmatprep.subr.mxu0 0.0
        %668 = vmatpush2.xpose.msra.mxu0 0.0
        %669 = vmatprep.subr.mxu0 0.0
        %670 = vmatpush2.xpose.msra.mxu0 0.0
        %671 = vmatprep.subr.mxu0 0.0
        %672 = vmatpush2.xpose.msra.mxu0 0.0
        %673 = vmatprep.subr.mxu0 0.0
        %674 = vmatpush2.xpose.msra.mxu0 0.0
        %675 = vmatprep.subr.mxu0 0.0
        %676 = vmatpush2.xpose.msra.mxu0 0.0
        %677 = vmatprep.subr.mxu0 0.0
        %678 = vmatpush2.xpose.msra.mxu0 0.0
        %679 = vmatprep.subr.mxu0 0.0
        %680 = vmatpush2.xpose.msra.mxu0 0.0
        %681 = vmatprep.subr.mxu0 0.0
        %682 = vmatpush2.xpose.msra.mxu0 0.0
        %683 = vmatprep.subr.mxu0 0.0
        %684 = vmatpush2.xpose.msra.mxu0 0.0
        %685 = vmatprep.mubr.f32.mxu0 0.0
        %686 = vmatmul.mubr.f32.gmra.mxu0 %v617
        %v687 = vpop.f32.mrf.mxu0
        %v688 = vadd.f32 0.0, %v687
        %v689 = vpop.f32.mrf.mxu0
        %690 = vdwg.mxu0
        %v691 = vmul.f32 %v688, 0.35355338
        %v692 = vsel %vm494, %v691, -1e+30
        %v693 = vsel %vm616, %v692, -inf
        %694 = vmax.xlane.f32.xlu0 %v693
        %v695 = vpop.xlane.xlu0 %694
        %v696 = vsub.f32 %v692, %v695
        %v697 = vmul.f32 %v696, 1.442695
        %v698 = vpow.pop %v697
        %v699 = vsel %vm616, %v698, 0.0
        %700 = vadd.xlane.f32.xlu0 %v699
        %v701 = vpop.xlane.xlu0 %700
        %v702 = vrcp.pop %v701
        %v703 = vmul.f32 %v698, %v702
        %704 = vrot.lane.b32.xlu0 %v612, 64
        %v705 = vpop.permute.xlu0 %704
        %v708 = vsel %vm616, %v703, 0
        %710 = vmatprep.subr.mxu0 0.0
        %711 = vmatpush1.msra.mxu0 0.0
        %712 = vmatprep.subr.mxu0 0.0
        %713 = vmatpush1.msra.mxu0 0.0
        %714 = vmatprep.subr.mxu0 0.0
        %715 = vmatpush1.msra.mxu0 0.0
        %716 = vmatprep.subr.mxu0 0.0
        %717 = vmatpush1.msra.mxu0 0.0
        %718 = vmatprep.subr.mxu0 0.0
        %719 = vmatpush1.msra.mxu0 0.0
        %720 = vmatprep.subr.mxu0 0.0
        %721 = vmatpush1.msra.mxu0 0.0
        %722 = vmatprep.subr.mxu0 0.0
        %723 = vmatpush1.msra.mxu0 0.0
        %724 = vmatprep.subr.mxu0 0.0
        %725 = vmatpush1.msra.mxu0 0.0
        %726 = vmatprep.subr.mxu0 0.0
        %727 = vmatpush1.msra.mxu0 0.0
        %728 = vmatprep.subr.mxu0 0.0
        %729 = vmatpush1.msra.mxu0 0.0
        %730 = vmatprep.subr.mxu0 0.0
        %731 = vmatpush1.msra.mxu0 0.0
        %732 = vmatprep.subr.mxu0 0.0
        %733 = vmatpush1.msra.mxu0 0.0
        %734 = vmatprep.subr.mxu0 0.0
        %735 = vmatpush1.msra.mxu0 0.0
        %736 = vmatprep.subr.mxu0 0.0
        %737 = vmatpush1.msra.mxu0 0.0
        %738 = vmatprep.subr.mxu0 0.0
        %739 = vmatpush1.msra.mxu0 0.0
        %740 = vmatprep.subr.mxu0 0.0
        %741 = vmatpush1.msra.mxu0 %v705
        %742 = vmatprep.subr.mxu0 0.0
        %743 = vmatpush2.msra.mxu0 0.0
        %744 = vmatprep.subr.mxu0 0.0
        %745 = vmatpush2.msra.mxu0 0.0
        %746 = vmatprep.subr.mxu0 0.0
        %747 = vmatpush2.msra.mxu0 0.0
        %748 = vmatprep.subr.mxu0 0.0
        %749 = vmatpush2.msra.mxu0 0.0
        %750 = vmatprep.subr.mxu0 0.0
        %751 = vmatpush2.msra.mxu0 0.0
        %752 = vmatprep.subr.mxu0 0.0
        %753 = vmatpush2.msra.mxu0 0.0
        %754 = vmatprep.subr.mxu0 0.0
        %755 = vmatpush2.msra.mxu0 0.0
        %756 = vmatprep.subr.mxu0 0.0
        %757 = vmatpush2.msra.mxu0 0.0
        %758 = vmatprep.subr.mxu0 0.0
        %759 = vmatpush2.msra.mxu0 0.0
        %760 = vmatprep.subr.mxu0 0.0
        %761 = vmatpush2.msra.mxu0 0.0
        %762 = vmatprep.subr.mxu0 0.0
        %763 = vmatpush2.msra.mxu0 0.0
        %764 = vmatprep.subr.mxu0 0.0
        %765 = vmatpush2.msra.mxu0 0.0
        %766 = vmatprep.subr.mxu0 0.0
        %767 = vmatpush2.msra.mxu0 0.0
        %768 = vmatprep.subr.mxu0 0.0
        %769 = vmatpush2.msra.mxu0 0.0
        %770 = vmatprep.subr.mxu0 0.0
        %771 = vmatpush2.msra.mxu0 0.0
        %772 = vmatprep.subr.mxu0 0.0
        %773 = vmatpush2.msra.mxu0 0.0
        %774 = vmatprep.mubr.f32.mxu0 0.0
        %775 = vmatmul.mubr.f32.gmra.mxu0 %v708
        %v776 = vpop.f32.mrf.mxu0
        %v777 = vadd.f32 0.0, %v776
        %v778 = vpop.f32.mrf.mxu0
        %779 = vdwg.mxu0
        %780 = vst.msk [vmem:[#allocation3] sm:$0xff] %vm616, %v777
        %v781 = vld [vmem:[#allocation2] sm:$0xff]
        %783 = vrot.lane.b32.xlu0 %v781, 120
        %v784 = vpop.permute.xlu0 %783
        %785 = vrot.lane.b32.xlu0 %v781, 88
        %v786 = vpop.permute.xlu0 %785
        %v787 = vsel %vm616, %v784, 0
        %v789 = vsel %vm616, %v786, 0
        %791 = vmatprep.subr.mxu0 0.0
        %792 = vmatpush1.xpose.msra.mxu0 0.0
        %793 = vmatprep.subr.mxu0 0.0
        %794 = vmatpush1.xpose.msra.mxu0 0.0
        %795 = vmatprep.subr.mxu0 0.0
        %796 = vmatpush1.xpose.msra.mxu0 0.0
        %797 = vmatprep.subr.mxu0 0.0
        %798 = vmatpush1.xpose.msra.mxu0 0.0
        %799 = vmatprep.subr.mxu0 0.0
        %800 = vmatpush1.xpose.msra.mxu0 0.0
        %801 = vmatprep.subr.mxu0 0.0
        %802 = vmatpush1.xpose.msra.mxu0 0.0
        %803 = vmatprep.subr.mxu0 0.0
        %804 = vmatpush1.xpose.msra.mxu0 0.0
        %805 = vmatprep.subr.mxu0 0.0
        %806 = vmatpush1.xpose.msra.mxu0 0.0
        %807 = vmatprep.subr.mxu0 0.0
        %808 = vmatpush1.xpose.msra.mxu0 0.0
        %809 = vmatprep.subr.mxu0 0.0
        %810 = vmatpush1.xpose.msra.mxu0 0.0
        %811 = vmatprep.subr.mxu0 0.0
        %812 = vmatpush1.xpose.msra.mxu0 0.0
        %813 = vmatprep.subr.mxu0 0.0
        %814 = vmatpush1.xpose.msra.mxu0 0.0
        %815 = vmatprep.subr.mxu0 0.0
        %816 = vmatpush1.xpose.msra.mxu0 0.0
        %817 = vmatprep.subr.mxu0 0.0
        %818 = vmatpush1.xpose.msra.mxu0 0.0
        %819 = vmatprep.subr.mxu0 0.0
        %820 = vmatpush1.xpose.msra.mxu0 0.0
        %821 = vmatprep.subr.mxu0 0.0
        %822 = vmatpush1.xpose.msra.mxu0 %v789
        %823 = vmatprep.subr.mxu0 0.0
        %824 = vmatpush2.xpose.msra.mxu0 0.0
        %825 = vmatprep.subr.mxu0 0.0
        %826 = vmatpush2.xpose.msra.mxu0 0.0
        %827 = vmatprep.subr.mxu0 0.0
        %828 = vmatpush2.xpose.msra.mxu0 0.0
        %829 = vmatprep.subr.mxu0 0.0
        %830 = vmatpush2.xpose.msra.mxu0 0.0
        %831 = vmatprep.subr.mxu0 0.0
        %832 = vmatpush2.xpose.msra.mxu0 0.0
        %833 = vmatprep.subr.mxu0 0.0
        %834 = vmatpush2.xpose.msra.mxu0 0.0
        %835 = vmatprep.subr.mxu0 0.0
        %836 = vmatpush2.xpose.msra.mxu0 0.0
        %837 = vmatprep.subr.mxu0 0.0
        %838 = vmatpush2.xpose.msra.mxu0 0.0
        %839 = vmatprep.subr.mxu0 0.0
        %840 = vmatpush2.xpose.msra.mxu0 0.0
        %841 = vmatprep.subr.mxu0 0.0
        %842 = vmatpush2.xpose.msra.mxu0 0.0
        %843 = vmatprep.subr.mxu0 0.0
        %844 = vmatpush2.xpose.msra.mxu0 0.0
        %845 = vmatprep.subr.mxu0 0.0
        %846 = vmatpush2.xpose.msra.mxu0 0.0
        %847 = vmatprep.subr.mxu0 0.0
        %848 = vmatpush2.xpose.msra.mxu0 0.0
        %849 = vmatprep.subr.mxu0 0.0
        %850 = vmatpush2.xpose.msra.mxu0 0.0
        %851 = vmatprep.subr.mxu0 0.0
        %852 = vmatpush2.xpose.msra.mxu0 0.0
        %853 = vmatprep.subr.mxu0 0.0
        %854 = vmatpush2.xpose.msra.mxu0 0.0
        %855 = vmatprep.mubr.f32.mxu0 0.0
        %856 = vmatmul.mubr.f32.gmra.mxu0 %v787
        %v857 = vpop.f32.mrf.mxu0
        %v858 = vadd.f32 0.0, %v857
        %v859 = vpop.f32.mrf.mxu0
        %860 = vdwg.mxu0
        %v861 = vmul.f32 %v858, 0.35355338
        %v862 = vsel %vm494, %v861, -1e+30
        %v863 = vsel %vm616, %v862, -inf
        %864 = vmax.xlane.f32.xlu0 %v863
        %v865 = vpop.xlane.xlu0 %864
        %v866 = vsub.f32 %v862, %v865
        %v867 = vmul.f32 %v866, 1.442695
        %v868 = vpow.pop %v867
        %v869 = vsel %vm616, %v868, 0.0
        %870 = vadd.xlane.f32.xlu0 %v869
        %v871 = vpop.xlane.xlu0 %870
        %v872 = vrcp.pop %v871
        %v873 = vmul.f32 %v868, %v872
        %874 = vrot.lane.b32.xlu0 %v781, 56
        %v875 = vpop.permute.xlu0 %874
        %v878 = vsel %vm616, %v873, 0
        %880 = vmatprep.subr.mxu0 0.0
        %881 = vmatpush1.msra.mxu0 0.0
        %882 = vmatprep.subr.mxu0 0.0
        %883 = vmatpush1.msra.mxu0 0.0
        %884 = vmatprep.subr.mxu0 0.0
        %885 = vmatpush1.msra.mxu0 0.0
        %886 = vmatprep.subr.mxu0 0.0
        %887 = vmatpush1.msra.mxu0 0.0
        %888 = vmatprep.subr.mxu0 0.0
        %889 = vmatpush1.msra.mxu0 0.0
        %890 = vmatprep.subr.mxu0 0.0
        %891 = vmatpush1.msra.mxu0 0.0
        %892 = vmatprep.subr.mxu0 0.0
        %893 = vmatpush1.msra.mxu0 0.0
        %894 = vmatprep.subr.mxu0 0.0
        %895 = vmatpush1.msra.mxu0 0.0
        %896 = vmatprep.subr.mxu0 0.0
        %897 = vmatpush1.msra.mxu0 0.0
        %898 = vmatprep.subr.mxu0 0.0
        %899 = vmatpush1.msra.mxu0 0.0
        %900 = vmatprep.subr.mxu0 0.0
        %901 = vmatpush1.msra.mxu0 0.0
        %902 = vmatprep.subr.mxu0 0.0
        %903 = vmatpush1.msra.mxu0 0.0
        %904 = vmatprep.subr.mxu0 0.0
        %905 = vmatpush1.msra.mxu0 0.0
        %906 = vmatprep.subr.mxu0 0.0
        %907 = vmatpush1.msra.mxu0 0.0
        %908 = vmatprep.subr.mxu0 0.0
        %909 = vmatpush1.msra.mxu0 0.0
        %910 = vmatprep.subr.mxu0 0.0
        %911 = vmatpush1.msra.mxu0 %v875
        %912 = vmatprep.subr.mxu0 0.0
        %913 = vmatpush2.msra.mxu0 0.0
        %914 = vmatprep.subr.mxu0 0.0
        %915 = vmatpush2.msra.mxu0 0.0
        %916 = vmatprep.subr.mxu0 0.0
        %917 = vmatpush2.msra.mxu0 0.0
        %918 = vmatprep.subr.mxu0 0.0
        %919 = vmatpush2.msra.mxu0 0.0
        %920 = vmatprep.subr.mxu0 0.0
        %921 = vmatpush2.msra.mxu0 0.0
        %922 = vmatprep.subr.mxu0 0.0
        %923 = vmatpush2.msra.mxu0 0.0
        %924 = vmatprep.subr.mxu0 0.0
        %925 = vmatpush2.msra.mxu0 0.0
        %926 = vmatprep.subr.mxu0 0.0
        %927 = vmatpush2.msra.mxu0 0.0
        %928 = vmatprep.subr.mxu0 0.0
        %929 = vmatpush2.msra.mxu0 0.0
        %930 = vmatprep.subr.mxu0 0.0
        %931 = vmatpush2.msra.mxu0 0.0
        %932 = vmatprep.subr.mxu0 0.0
        %933 = vmatpush2.msra.mxu0 0.0
        %934 = vmatprep.subr.mxu0 0.0
        %935 = vmatpush2.msra.mxu0 0.0
        %936 = vmatprep.subr.mxu0 0.0
        %937 = vmatpush2.msra.mxu0 0.0
        %938 = vmatprep.subr.mxu0 0.0
        %939 = vmatpush2.msra.mxu0 0.0
        %940 = vmatprep.subr.mxu0 0.0
        %941 = vmatpush2.msra.mxu0 0.0
        %942 = vmatprep.subr.mxu0 0.0
        %943 = vmatpush2.msra.mxu0 0.0
        %944 = vmatprep.mubr.f32.mxu0 0.0
        %945 = vmatmul.mubr.f32.gmra.mxu0 %v878
        %v946 = vpop.f32.mrf.mxu0
        %v947 = vadd.f32 0.0, %v946
        %v948 = vpop.f32.mrf.mxu0
        %949 = vdwg.mxu0
        %951 = vrot.lane.b32.xlu0 %v947, 8
        %v952 = vpop.permute.xlu0 %951
        %vm954 = vcmask 130112
        %955 = vst.msk [vmem:[#allocation3] sm:$0xff] %vm954, %v952
        %v956 = vld [vmem:[#allocation2] sm:$0xff]
        %958 = vrot.lane.b32.xlu0 %v956, 112
        %v959 = vpop.permute.xlu0 %958
        %960 = vrot.lane.b32.xlu0 %v956, 80
        %v961 = vpop.permute.xlu0 %960
        %v962 = vsel %vm616, %v959, 0
        %v964 = vsel %vm616, %v961, 0
        %966 = vmatprep.subr.mxu0 0.0
        %967 = vmatpush1.xpose.msra.mxu0 0.0
        %968 = vmatprep.subr.mxu0 0.0
        %969 = vmatpush1.xpose.msra.mxu0 0.0
        %970 = vmatprep.subr.mxu0 0.0
        %971 = vmatpush1.xpose.msra.mxu0 0.0
        %972 = vmatprep.subr.mxu0 0.0
        %973 = vmatpush1.xpose.msra.mxu0 0.0
        %974 = vmatprep.subr.mxu0 0.0
        %975 = vmatpush1.xpose.msra.mxu0 0.0
        %976 = vmatprep.subr.mxu0 0.0
        %977 = vmatpush1.xpose.msra.mxu0 0.0
        %978 = vmatprep.subr.mxu0 0.0
        %979 = vmatpush1.xpose.msra.mxu0 0.0
        %980 = vmatprep.subr.mxu0 0.0
        %981 = vmatpush1.xpose.msra.mxu0 0.0
        %982 = vmatprep.subr.mxu0 0.0
        %983 = vmatpush1.xpose.msra.mxu0 0.0
        %984 = vmatprep.subr.mxu0 0.0
        %985 = vmatpush1.xpose.msra.mxu0 0.0
        %986 = vmatprep.subr.mxu0 0.0
        %987 = vmatpush1.xpose.msra.mxu0 0.0
        %988 = vmatprep.subr.mxu0 0.0
        %989 = vmatpush1.xpose.msra.mxu0 0.0
        %990 = vmatprep.subr.mxu0 0.0
        %991 = vmatpush1.xpose.msra.mxu0 0.0
        %992 = vmatprep.subr.mxu0 0.0
        %993 = vmatpush1.xpose.msra.mxu0 0.0
        %994 = vmatprep.subr.mxu0 0.0
        %995 = vmatpush1.xpose.msra.mxu0 0.0
        %996 = vmatprep.subr.mxu0 0.0
        %997 = vmatpush1.xpose.msra.mxu0 %v964
        %998 = vmatprep.subr.mxu0 0.0
        %999 = vmatpush2.xpose.msra.mxu0 0.0
        %1000 = vmatprep.subr.mxu0 0.0
        %1001 = vmatpush2.xpose.msra.mxu0 0.0
        %1002 = vmatprep.subr.mxu0 0.0
        %1003 = vmatpush2.xpose.msra.mxu0 0.0
        %1004 = vmatprep.subr.mxu0 0.0
        %1005 = vmatpush2.xpose.msra.mxu0 0.0
        %1006 = vmatprep.subr.mxu0 0.0
        %1007 = vmatpush2.xpose.msra.mxu0 0.0
        %1008 = vmatprep.subr.mxu0 0.0
        %1009 = vmatpush2.xpose.msra.mxu0 0.0
        %1010 = vmatprep.subr.mxu0 0.0
        %1011 = vmatpush2.xpose.msra.mxu0 0.0
        %1012 = vmatprep.subr.mxu0 0.0
        %1013 = vmatpush2.xpose.msra.mxu0 0.0
        %1014 = vmatprep.subr.mxu0 0.0
        %1015 = vmatpush2.xpose.msra.mxu0 0.0
        %1016 = vmatprep.subr.mxu0 0.0
        %1017 = vmatpush2.xpose.msra.mxu0 0.0
        %1018 = vmatprep.subr.mxu0 0.0
        %1019 = vmatpush2.xpose.msra.mxu0 0.0
        %1020 = vmatprep.subr.mxu0 0.0
        %1021 = vmatpush2.xpose.msra.mxu0 0.0
        %1022 = vmatprep.subr.mxu0 0.0
        %1023 = vmatpush2.xpose.msra.mxu0 0.0
        %1024 = vmatprep.subr.mxu0 0.0
        %1025 = vmatpush2.xpose.msra.mxu0 0.0
        %1026 = vmatprep.subr.mxu0 0.0
        %1027 = vmatpush2.xpose.msra.mxu0 0.0
        %1028 = vmatprep.subr.mxu0 0.0
        %1029 = vmatpush2.xpose.msra.mxu0 0.0
        %1030 = vmatprep.mubr.f32.mxu0 0.0
        %1031 = vmatmul.mubr.f32.gmra.mxu0 %v962
        %v1032 = vpop.f32.mrf.mxu0
        %v1033 = vadd.f32 0.0, %v1032
        %v1034 = vpop.f32.mrf.mxu0
        %1035 = vdwg.mxu0
        %v1036 = vmul.f32 %v1033, 0.35355338
        %v1037 = vsel %vm494, %v1036, -1e+30
        %v1038 = vsel %vm616, %v1037, -inf
        %1039 = vmax.xlane.f32.xlu0 %v1038
        %v1040 = vpop.xlane.xlu0 %1039
        %v1041 = vsub.f32 %v1037, %v1040
        %v1042 = vmul.f32 %v1041, 1.442695
        %v1043 = vpow.pop %v1042
        %v1044 = vsel %vm616, %v1043, 0.0
        %1045 = vadd.xlane.f32.xlu0 %v1044
        %v1046 = vpop.xlane.xlu0 %1045
        %v1047 = vrcp.pop %v1046
        %v1048 = vmul.f32 %v1043, %v1047
        %1049 = vrot.lane.b32.xlu0 %v956, 48
        %v1050 = vpop.permute.xlu0 %1049
        %v1053 = vsel %vm616, %v1048, 0
        %1055 = vmatprep.subr.mxu0 0.0
        %1056 = vmatpush1.msra.mxu0 0.0
        %1057 = vmatprep.subr.mxu0 0.0
        %1058 = vmatpush1.msra.mxu0 0.0
        %1059 = vmatprep.subr.mxu0 0.0
        %1060 = vmatpush1.msra.mxu0 0.0
        %1061 = vmatprep.subr.mxu0 0.0
        %1062 = vmatpush1.msra.mxu0 0.0
        %1063 = vmatprep.subr.mxu0 0.0
        %1064 = vmatpush1.msra.mxu0 0.0
        %1065 = vmatprep.subr.mxu0 0.0
        %1066 = vmatpush1.msra.mxu0 0.0
        %1067 = vmatprep.subr.mxu0 0.0
        %1068 = vmatpush1.msra.mxu0 0.0
        %1069 = vmatprep.subr.mxu0 0.0
        %1070 = vmatpush1.msra.mxu0 0.0
        %1071 = vmatprep.subr.mxu0 0.0
        %1072 = vmatpush1.msra.mxu0 0.0
        %1073 = vmatprep.subr.mxu0 0.0
        %1074 = vmatpush1.msra.mxu0 0.0
        %1075 = vmatprep.subr.mxu0 0.0
        %1076 = vmatpush1.msra.mxu0 0.0
        %1077 = vmatprep.subr.mxu0 0.0
        %1078 = vmatpush1.msra.mxu0 0.0
        %1079 = vmatprep.subr.mxu0 0.0
        %1080 = vmatpush1.msra.mxu0 0.0
        %1081 = vmatprep.subr.mxu0 0.0
        %1082 = vmatpush1.msra.mxu0 0.0
        %1083 = vmatprep.subr.mxu0 0.0
        %1084 = vmatpush1.msra.mxu0 0.0
        %1085 = vmatprep.subr.mxu0 0.0
        %1086 = vmatpush1.msra.mxu0 %v1050
        %1087 = vmatprep.subr.mxu0 0.0
        %1088 = vmatpush2.msra.mxu0 0.0
        %1089 = vmatprep.subr.mxu0 0.0
        %1090 = vmatpush2.msra.mxu0 0.0
        %1091 = vmatprep.subr.mxu0 0.0
        %1092 = vmatpush2.msra.mxu0 0.0
        %1093 = vmatprep.subr.mxu0 0.0
        %1094 = vmatpush2.msra.mxu0 0.0
        %1095 = vmatprep.subr.mxu0 0.0
        %1096 = vmatpush2.msra.mxu0 0.0
        %1097 = vmatprep.subr.mxu0 0.0
        %1098 = vmatpush2.msra.mxu0 0.0
        %1099 = vmatprep.subr.mxu0 0.0
        %1100 = vmatpush2.msra.mxu0 0.0
        %1101 = vmatprep.subr.mxu0 0.0
        %1102 = vmatpush2.msra.mxu0 0.0
        %1103 = vmatprep.subr.mxu0 0.0
        %1104 = vmatpush2.msra.mxu0 0.0
        %1105 = vmatprep.subr.mxu0 0.0
        %1106 = vmatpush2.msra.mxu0 0.0
        %1107 = vmatprep.subr.mxu0 0.0
        %1108 = vmatpush2.msra.mxu0 0.0
        %1109 = vmatprep.subr.mxu0 0.0
        %1110 = vmatpush2.msra.mxu0 0.0
        %1111 = vmatprep.subr.mxu0 0.0
        %1112 = vmatpush2.msra.mxu0 0.0
        %1113 = vmatprep.subr.mxu0 0.0
        %1114 = vmatpush2.msra.mxu0 0.0
        %1115 = vmatprep.subr.mxu0 0.0
        %1116 = vmatpush2.msra.mxu0 0.0
        %1117 = vmatprep.subr.mxu0 0.0
        %1118 = vmatpush2.msra.mxu0 0.0
        %1119 = vmatprep.mubr.f32.mxu0 0.0
        %1120 = vmatmul.mubr.f32.gmra.mxu0 %v1053
        %v1121 = vpop.f32.mrf.mxu0
        %v1122 = vadd.f32 0.0, %v1121
        %v1123 = vpop.f32.mrf.mxu0
        %1124 = vdwg.mxu0
        %1126 = vrot.lane.b32.xlu0 %v1122, 16
        %v1127 = vpop.permute.xlu0 %1126
        %vm1129 = vcmask 195712
        %1130 = vst.msk [vmem:[#allocation3] sm:$0xff] %vm1129, %v1127
        %v1131 = vld [vmem:[#allocation2] sm:$0xff]
        %1133 = vrot.lane.b32.xlu0 %v1131, 104
        %v1134 = vpop.permute.xlu0 %1133
        %1135 = vrot.lane.b32.xlu0 %v1131, 72
        %v1136 = vpop.permute.xlu0 %1135
        %v1137 = vsel %vm616, %v1134, 0
        %v1139 = vsel %vm616, %v1136, 0
        %1141 = vmatprep.subr.mxu0 0.0
        %1142 = vmatpush1.xpose.msra.mxu0 0.0
        %1143 = vmatprep.subr.mxu0 0.0
        %1144 = vmatpush1.xpose.msra.mxu0 0.0
        %1145 = vmatprep.subr.mxu0 0.0
        %1146 = vmatpush1.xpose.msra.mxu0 0.0
        %1147 = vmatprep.subr.mxu0 0.0
        %1148 = vmatpush1.xpose.msra.mxu0 0.0
        %1149 = vmatprep.subr.mxu0 0.0
        %1150 = vmatpush1.xpose.msra.mxu0 0.0
        %1151 = vmatprep.subr.mxu0 0.0
        %1152 = vmatpush1.xpose.msra.mxu0 0.0
        %1153 = vmatprep.subr.mxu0 0.0
        %1154 = vmatpush1.xpose.msra.mxu0 0.0
        %1155 = vmatprep.subr.mxu0 0.0
        %1156 = vmatpush1.xpose.msra.mxu0 0.0
        %1157 = vmatprep.subr.mxu0 0.0
        %1158 = vmatpush1.xpose.msra.mxu0 0.0
        %1159 = vmatprep.subr.mxu0 0.0
        %1160 = vmatpush1.xpose.msra.mxu0 0.0
        %1161 = vmatprep.subr.mxu0 0.0
        %1162 = vmatpush1.xpose.msra.mxu0 0.0
        %1163 = vmatprep.subr.mxu0 0.0
        %1164 = vmatpush1.xpose.msra.mxu0 0.0
        %1165 = vmatprep.subr.mxu0 0.0
        %1166 = vmatpush1.xpose.msra.mxu0 0.0
        %1167 = vmatprep.subr.mxu0 0.0
        %1168 = vmatpush1.xpose.msra.mxu0 0.0
        %1169 = vmatprep.subr.mxu0 0.0
        %1170 = vmatpush1.xpose.msra.mxu0 0.0
        %1171 = vmatprep.subr.mxu0 0.0
        %1172 = vmatpush1.xpose.msra.mxu0 %v1139
        %1173 = vmatprep.subr.mxu0 0.0
        %1174 = vmatpush2.xpose.msra.mxu0 0.0
        %1175 = vmatprep.subr.mxu0 0.0
        %1176 = vmatpush2.xpose.msra.mxu0 0.0
        %1177 = vmatprep.subr.mxu0 0.0
        %1178 = vmatpush2.xpose.msra.mxu0 0.0
        %1179 = vmatprep.subr.mxu0 0.0
        %1180 = vmatpush2.xpose.msra.mxu0 0.0
        %1181 = vmatprep.subr.mxu0 0.0
        %1182 = vmatpush2.xpose.msra.mxu0 0.0
        %1183 = vmatprep.subr.mxu0 0.0
        %1184 = vmatpush2.xpose.msra.mxu0 0.0
        %1185 = vmatprep.subr.mxu0 0.0
        %1186 = vmatpush2.xpose.msra.mxu0 0.0
        %1187 = vmatprep.subr.mxu0 0.0
        %1188 = vmatpush2.xpose.msra.mxu0 0.0
        %1189 = vmatprep.subr.mxu0 0.0
        %1190 = vmatpush2.xpose.msra.mxu0 0.0
        %1191 = vmatprep.subr.mxu0 0.0
        %1192 = vmatpush2.xpose.msra.mxu0 0.0
        %1193 = vmatprep.subr.mxu0 0.0
        %1194 = vmatpush2.xpose.msra.mxu0 0.0
        %1195 = vmatprep.subr.mxu0 0.0
        %1196 = vmatpush2.xpose.msra.mxu0 0.0
        %1197 = vmatprep.subr.mxu0 0.0
        %1198 = vmatpush2.xpose.msra.mxu0 0.0
        %1199 = vmatprep.subr.mxu0 0.0
        %1200 = vmatpush2.xpose.msra.mxu0 0.0
        %1201 = vmatprep.subr.mxu0 0.0
        %1202 = vmatpush2.xpose.msra.mxu0 0.0
        %1203 = vmatprep.subr.mxu0 0.0
        %1204 = vmatpush2.xpose.msra.mxu0 0.0
        %1205 = vmatprep.mubr.f32.mxu0 0.0
        %1206 = vmatmul.mubr.f32.gmra.mxu0 %v1137
        %v1207 = vpop.f32.mrf.mxu0
        %v1208 = vadd.f32 0.0, %v1207
        %v1209 = vpop.f32.mrf.mxu0
        %1210 = vdwg.mxu0
        %v1211 = vmul.f32 %v1208, 0.35355338
        %v1212 = vsel %vm494, %v1211, -1e+30
        %v1213 = vsel %vm616, %v1212, -inf
        %1214 = vmax.xlane.f32.xlu0 %v1213
        %v1215 = vpop.xlane.xlu0 %1214
        %v1216 = vsub.f32 %v1212, %v1215
        %v1217 = vmul.f32 %v1216, 1.442695
        %v1218 = vpow.pop %v1217
        %v1219 = vsel %vm616, %v1218, 0.0
        %1220 = vadd.xlane.f32.xlu0 %v1219
        %v1221 = vpop.xlane.xlu0 %1220
        %v1222 = vrcp.pop %v1221
        %v1223 = vmul.f32 %v1218, %v1222
        %1224 = vrot.lane.b32.xlu0 %v1131, 40
        %v1225 = vpop.permute.xlu0 %1224
        %v1228 = vsel %vm616, %v1223, 0
        %1230 = vmatprep.subr.mxu0 0.0
        %1231 = vmatpush1.msra.mxu0 0.0
        %1232 = vmatprep.subr.mxu0 0.0
        %1233 = vmatpush1.msra.mxu0 0.0
        %1234 = vmatprep.subr.mxu0 0.0
        %1235 = vmatpush1.msra.mxu0 0.0
        %1236 = vmatprep.subr.mxu0 0.0
        %1237 = vmatpush1.msra.mxu0 0.0
        %1238 = vmatprep.subr.mxu0 0.0
        %1239 = vmatpush1.msra.mxu0 0.0
        %1240 = vmatprep.subr.mxu0 0.0
        %1241 = vmatpush1.msra.mxu0 0.0
        %1242 = vmatprep.subr.mxu0 0.0
        %1243 = vmatpush1.msra.mxu0 0.0
        %1244 = vmatprep.subr.mxu0 0.0
        %1245 = vmatpush1.msra.mxu0 0.0
        %1246 = vmatprep.subr.mxu0 0.0
        %1247 = vmatpush1.msra.mxu0 0.0
        %1248 = vmatprep.subr.mxu0 0.0
        %1249 = vmatpush1.msra.mxu0 0.0
        %1250 = vmatprep.subr.mxu0 0.0
        %1251 = vmatpush1.msra.mxu0 0.0
        %1252 = vmatprep.subr.mxu0 0.0
        %1253 = vmatpush1.msra.mxu0 0.0
        %1254 = vmatprep.subr.mxu0 0.0
        %1255 = vmatpush1.msra.mxu0 0.0
        %1256 = vmatprep.subr.mxu0 0.0
        %1257 = vmatpush1.msra.mxu0 0.0
        %1258 = vmatprep.subr.mxu0 0.0
        %1259 = vmatpush1.msra.mxu0 0.0
        %1260 = vmatprep.subr.mxu0 0.0
        %1261 = vmatpush1.msra.mxu0 %v1225
        %1262 = vmatprep.subr.mxu0 0.0
        %1263 = vmatpush2.msra.mxu0 0.0
        %1264 = vmatprep.subr.mxu0 0.0
        %1265 = vmatpush2.msra.mxu0 0.0
        %1266 = vmatprep.subr.mxu0 0.0
        %1267 = vmatpush2.msra.mxu0 0.0
        %1268 = vmatprep.subr.mxu0 0.0
        %1269 = vmatpush2.msra.mxu0 0.0
        %1270 = vmatprep.subr.mxu0 0.0
        %1271 = vmatpush2.msra.mxu0 0.0
        %1272 = vmatprep.subr.mxu0 0.0
        %1273 = vmatpush2.msra.mxu0 0.0
        %1274 = vmatprep.subr.mxu0 0.0
        %1275 = vmatpush2.msra.mxu0 0.0
        %1276 = vmatprep.subr.mxu0 0.0
        %1277 = vmatpush2.msra.mxu0 0.0
        %1278 = vmatprep.subr.mxu0 0.0
        %1279 = vmatpush2.msra.mxu0 0.0
        %1280 = vmatprep.subr.mxu0 0.0
        %1281 = vmatpush2.msra.mxu0 0.0
        %1282 = vmatprep.subr.mxu0 0.0
        %1283 = vmatpush2.msra.mxu0 0.0
        %1284 = vmatprep.subr.mxu0 0.0
        %1285 = vmatpush2.msra.mxu0 0.0
        %1286 = vmatprep.subr.mxu0 0.0
        %1287 = vmatpush2.msra.mxu0 0.0
        %1288 = vmatprep.subr.mxu0 0.0
        %1289 = vmatpush2.msra.mxu0 0.0
        %1290 = vmatprep.subr.mxu0 0.0
        %1291 = vmatpush2.msra.mxu0 0.0
        %1292 = vmatprep.subr.mxu0 0.0
        %1293 = vmatpush2.msra.mxu0 0.0
        %1294 = vmatprep.mubr.f32.mxu0 0.0
        %1295 = vmatmul.mubr.f32.gmra.mxu0 %v1228
        %v1296 = vpop.f32.mrf.mxu0
        %v1297 = vadd.f32 0.0, %v1296
        %v1298 = vpop.f32.mrf.mxu0
        %1299 = vdwg.mxu0
        %1301 = vrot.lane.b32.xlu0 %v1297, 24
        %v1302 = vpop.permute.xlu0 %1301
        %vm1304 = vcmask 261312
        %1305 = vst.msk [vmem:[#allocation3] sm:$0xff] %vm1304, %v1302
        %v1306 = vld [vmem:[#allocation3] sm:$0xff]
        %v1307 = vld [vmem:[%s5] sm:$0xff]
        %v1308 = vld [vmem:[%s5 + $0x8] sm:$0xff]
        %v1309 = vld [vmem:[%s5 + $0x10] sm:$0xff]
        %v1310 = vld [vmem:[%s5 + $0x18] sm:$0xff]
        %v1312 = vsel %vm497, %v1306, 0
        %1314 = vmatprep.subr.mxu0 0.0
        %1315 = vmatpush1.msra.mxu0 0.0
        %1316 = vmatprep.subr.mxu0 0.0
        %1317 = vmatpush1.msra.mxu0 0.0
        %1318 = vmatprep.subr.mxu0 0.0
        %1319 = vmatpush1.msra.mxu0 0.0
        %1320 = vmatprep.subr.mxu0 0.0
        %1321 = vmatpush1.msra.mxu0 0.0
        %1322 = vmatprep.subr.mxu0 0.0
        %1323 = vmatpush1.msra.mxu0 0.0
        %1324 = vmatprep.subr.mxu0 0.0
        %1325 = vmatpush1.msra.mxu0 0.0
        %1326 = vmatprep.subr.mxu0 0.0
        %1327 = vmatpush1.msra.mxu0 0.0
        %1328 = vmatprep.subr.mxu0 0.0
        %1329 = vmatpush1.msra.mxu0 0.0
        %1330 = vmatprep.subr.mxu0 0.0
        %1331 = vmatpush1.msra.mxu0 0.0
        %1332 = vmatprep.subr.mxu0 0.0
        %1333 = vmatpush1.msra.mxu0 0.0
        %1334 = vmatprep.subr.mxu0 0.0
        %1335 = vmatpush1.msra.mxu0 0.0
        %1336 = vmatprep.subr.mxu0 0.0
        %1337 = vmatpush1.msra.mxu0 0.0
        %1338 = vmatprep.subr.mxu0 0.0
        %1339 = vmatpush1.msra.mxu0 %v1310
        %1340 = vmatprep.subr.mxu0 0.0
        %1341 = vmatpush1.msra.mxu0 %v1309
        %1342 = vmatprep.subr.mxu0 0.0
        %1343 = vmatpush1.msra.mxu0 %v1308
        %1344 = vmatprep.subr.mxu0 0.0
        %1345 = vmatpush1.msra.mxu0 %v1307
        %1346 = vmatprep.subr.mxu0 0.0
        %1347 = vmatpush2.msra.mxu0 0.0
        %1348 = vmatprep.subr.mxu0 0.0
        %1349 = vmatpush2.msra.mxu0 0.0
        %1350 = vmatprep.subr.mxu0 0.0
        %1351 = vmatpush2.msra.mxu0 0.0
        %1352 = vmatprep.subr.mxu0 0.0
        %1353 = vmatpush2.msra.mxu0 0.0
        %1354 = vmatprep.subr.mxu0 0.0
        %1355 = vmatpush2.msra.mxu0 0.0
        %1356 = vmatprep.subr.mxu0 0.0
        %1357 = vmatpush2.msra.mxu0 0.0
        %1358 = vmatprep.subr.mxu0 0.0
        %1359 = vmatpush2.msra.mxu0 0.0
        %1360 = vmatprep.subr.mxu0 0.0
        %1361 = vmatpush2.msra.mxu0 0.0
        %1362 = vmatprep.subr.mxu0 0.0
        %1363 = vmatpush2.msra.mxu0 0.0
        %1364 = vmatprep.subr.mxu0 0.0
        %1365 = vmatpush2.msra.mxu0 0.0
        %1366 = vmatprep.subr.mxu0 0.0
        %1367 = vmatpush2.msra.mxu0 0.0
        %1368 = vmatprep.subr.mxu0 0.0
        %1369 = vmatpush2.msra.mxu0 0.0
        %1370 = vmatprep.subr.mxu0 0.0
        %1371 = vmatpush2.msra.mxu0 0.0
        %1372 = vmatprep.subr.mxu0 0.0
        %1373 = vmatpush2.msra.mxu0 0.0
        %1374 = vmatprep.subr.mxu0 0.0
        %1375 = vmatpush2.msra.mxu0 0.0
        %1376 = vmatprep.subr.mxu0 0.0
        %1377 = vmatpush2.msra.mxu0 0.0
        %1378 = vmatprep.mubr.f32.mxu0 0.0
        %1379 = vmatmul.mubr.f32.gmra.mxu0 %v1312
        %v1380 = vpop.f32.mrf.mxu0
        %v1381 = vadd.f32 0.0, %v1380
        %v1382 = vpop.f32.mrf.mxu0
        %1383 = vdwg.mxu0
        %v1384 = vadd.f32 %v489, %v1381
        %v1385 = vld [vmem:[%s6] sm:$0x1]
        %v1387 = vlaneseq
        %v1388 = vshrl.u32 %v1387, 7
        %v1389 = vsub.s32 0, %v1388
        %v1390 = vrot.slane %v1385, %v1389
        %v1392 = vadd.f32 %v1384, %v1390
        %v1393 = vld [vmem:[%s7] sm:$0x1]
        %v1394 = vld [vmem:[%s8] sm:$0x1]
        %v1395 = vsel %vm497, %v1392, 0.0
        %1396 = vadd.xlane.f32.xlu0 %v1395
        %v1397 = vpop.xlane.xlu0 %1396
        %v1398 = vmul.f32 %v1397, %v501
        %v1399 = vsub.f32 %v1392, %v1398
        %v1400 = vmul.f32 %v1399, %v1399
        %v1401 = vsel %vm497, %v1400, 0.0
        %1402 = vadd.xlane.f32.xlu0 %v1401
        %v1403 = vpop.xlane.xlu0 %1402
        %v1404 = vmul.f32 %v1403, %v501
        %v1405 = vadd.f32 %v1404, 1e-05
        %v1406 = vrsqrt.pop %v1405
        %v1407 = vmul.f32 %v1399, %v1406
        %v1409 = vlaneseq
        %v1410 = vshrl.u32 %v1409, 7
        %v1411 = vsub.s32 0, %v1410
        %v1412 = vrot.slane %v1393, %v1411
        %v1414 = vmul.f32 %v1407, %v1412
        %v1416 = vlaneseq
        %v1417 = vshrl.u32 %v1416, 7
        %v1418 = vsub.s32 0, %v1417
        %v1419 = vrot.slane %v1394, %v1418
        %v1421 = vadd.f32 %v1414, %v1419
        %v1422 = vld [vmem:[%s9] sm:$0xff]
        %v1423 = vld [vmem:[%s9 + $0x8] sm:$0xff]
        %v1424 = vld [vmem:[%s9 + $0x10] sm:$0xff]
        %v1425 = vld [vmem:[%s9 + $0x18] sm:$0xff]
        %v1426 = vld [vmem:[%s10] sm:$0x1]
        %v1428 = vlaneseq
        %v1429 = vshrl.u32 %v1428, 7
        %v1430 = vsub.s32 0, %v1429
        %v1431 = vrot.slane %v1426, %v1430
        %v1434 = vsel %vm497, %v1421, 0
        %1436 = vmatprep.subr.mxu0 0.0
        %1437 = vmatpush1.msra.mxu0 0.0
        %1438 = vmatprep.subr.mxu0 0.0
        %1439 = vmatpush1.msra.mxu0 0.0
        %1440 = vmatprep.subr.mxu0 0.0
        %1441 = vmatpush1.msra.mxu0 0.0
        %1442 = vmatprep.subr.mxu0 0.0
        %1443 = vmatpush1.msra.mxu0 0.0
        %1444 = vmatprep.subr.mxu0 0.0
        %1445 = vmatpush1.msra.mxu0 0.0
        %1446 = vmatprep.subr.mxu0 0.0
        %1447 = vmatpush1.msra.mxu0 0.0
        %1448 = vmatprep.subr.mxu0 0.0
        %1449 = vmatpush1.msra.mxu0 0.0
        %1450 = vmatprep.subr.mxu0 0.0
        %1451 = vmatpush1.msra.mxu0 0.0
        %1452 = vmatprep.subr.mxu0 0.0
        %1453 = vmatpush1.msra.mxu0 0.0
        %1454 = vmatprep.subr.mxu0 0.0
        %1455 = vmatpush1.msra.mxu0 0.0
        %1456 = vmatprep.subr.mxu0 0.0
        %1457 = vmatpush1.msra.mxu0 0.0
        %1458 = vmatprep.subr.mxu0 0.0
        %1459 = vmatpush1.msra.mxu0 0.0
        %1460 = vmatprep.subr.mxu0 0.0
        %1461 = vmatpush1.msra.mxu0 %v1425
        %1462 = vmatprep.subr.mxu0 0.0
        %1463 = vmatpush1.msra.mxu0 %v1424
        %1464 = vmatprep.subr.mxu0 0.0
        %1465 = vmatpush1.msra.mxu0 %v1423
        %1466 = vmatprep.subr.mxu0 0.0
        %1467 = vmatpush1.msra.mxu0 %v1422
        %1468 = vmatprep.subr.mxu0 0.0
        %1469 = vmatpush2.msra.mxu0 0.0
        %1470 = vmatprep.subr.mxu0 0.0
        %1471 = vmatpush2.msra.mxu0 0.0
        %1472 = vmatprep.subr.mxu0 0.0
        %1473 = vmatpush2.msra.mxu0 0.0
        %1474 = vmatprep.subr.mxu0 0.0
        %1475 = vmatpush2.msra.mxu0 0.0
        %1476 = vmatprep.subr.mxu0 0.0
        %1477 = vmatpush2.msra.mxu0 0.0
        %1478 = vmatprep.subr.mxu0 0.0
        %1479 = vmatpush2.msra.mxu0 0.0
        %1480 = vmatprep.subr.mxu0 0.0
        %1481 = vmatpush2.msra.mxu0 0.0
        %1482 = vmatprep.subr.mxu0 0.0
        %1483 = vmatpush2.msra.mxu0 0.0
        %1484 = vmatprep.subr.mxu0 0.0
        %1485 = vmatpush2.msra.mxu0 0.0
        %1486 = vmatprep.subr.mxu0 0.0
        %1487 = vmatpush2.msra.mxu0 0.0
        %1488 = vmatprep.subr.mxu0 0.0
        %1489 = vmatpush2.msra.mxu0 0.0
        %1490 = vmatprep.subr.mxu0 0.0
        %1491 = vmatpush2.msra.mxu0 0.0
        %1492 = vmatprep.subr.mxu0 0.0
        %1493 = vmatpush2.msra.mxu0 0.0
        %1494 = vmatprep.subr.mxu0 0.0
        %1495 = vmatpush2.msra.mxu0 0.0
        %1496 = vmatprep.subr.mxu0 0.0
        %1497 = vmatpush2.msra.mxu0 0.0
        %1498 = vmatprep.subr.mxu0 0.0
        %1499 = vmatpush2.msra.mxu0 0.0
        %1500 = vmatprep.mubr.f32.mxu0 0.0
        %1501 = vmatmul.mubr.f32.gmra.mxu0 %v1434
        %v1502 = vpop.f32.mrf.mxu0
        %v1503 = vadd.f32 %v1431, %v1502
        %v1504 = vpop.f32.mrf.mxu0
        %1505 = vdwg.mxu0
        %v1506 = vmax.f32 %v1503, 0.0
        %v1507 = vld [vmem:[%s11] sm:$0xff]
        %v1508 = vld [vmem:[%s11 + $0x8] sm:$0xff]
        %v1509 = vld [vmem:[%s11 + $0x10] sm:$0xff]
        %v1510 = vld [vmem:[%s11 + $0x18] sm:$0xff]
        %v1511 = vld [vmem:[%s11 + $0x20] sm:$0xff]
        %v1512 = vld [vmem:[%s11 + $0x28] sm:$0xff]
        %v1513 = vld [vmem:[%s11 + $0x30] sm:$0xff]
        %v1514 = vld [vmem:[%s11 + $0x38] sm:$0xff]
        %vm1515 = vcmask 523264
        %v1517 = vsel %vm1515, %v1506, 0
        %1519 = vmatprep.subr.mxu0 0.0
        %1520 = vmatpush1.msra.mxu0 0.0
        %1521 = vmatprep.subr.mxu0 0.0
        %1522 = vmatpush1.msra.mxu0 0.0
        %1523 = vmatprep.subr.mxu0 0.0
        %1524 = vmatpush1.msra.mxu0 0.0
        %1525 = vmatprep.subr.mxu0 0.0
        %1526 = vmatpush1.msra.mxu0 0.0
        %1527 = vmatprep.subr.mxu0 0.0
        %1528 = vmatpush1.msra.mxu0 0.0
        %1529 = vmatprep.subr.mxu0 0.0
        %1530 = vmatpush1.msra.mxu0 0.0
        %1531 = vmatprep.subr.mxu0 0.0
        %1532 = vmatpush1.msra.mxu0 0.0
        %1533 = vmatprep.subr.mxu0 0.0
        %1534 = vmatpush1.msra.mxu0 0.0
        %1535 = vmatprep.subr.mxu0 0.0
        %1536 = vmatpush1.msra.mxu0 %v1514
        %1537 = vmatprep.subr.mxu0 0.0
        %1538 = vmatpush1.msra.mxu0 %v1513
        %1539 = vmatprep.subr.mxu0 0.0
        %1540 = vmatpush1.msra.mxu0 %v1512
        %1541 = vmatprep.subr.mxu0 0.0
        %1542 = vmatpush1.msra.mxu0 %v1511
        %1543 = vmatprep.subr.mxu0 0.0
        %1544 = vmatpush1.msra.mxu0 %v1510
        %1545 = vmatprep.subr.mxu0 0.0
        %1546 = vmatpush1.msra.mxu0 %v1509
        %1547 = vmatprep.subr.mxu0 0.0
        %1548 = vmatpush1.msra.mxu0 %v1508
        %1549 = vmatprep.subr.mxu0 0.0
        %1550 = vmatpush1.msra.mxu0 %v1507
        %1551 = vmatprep.subr.mxu0 0.0
        %1552 = vmatpush2.msra.mxu0 0.0
        %1553 = vmatprep.subr.mxu0 0.0
        %1554 = vmatpush2.msra.mxu0 0.0
        %1555 = vmatprep.subr.mxu0 0.0
        %1556 = vmatpush2.msra.mxu0 0.0
        %1557 = vmatprep.subr.mxu0 0.0
        %1558 = vmatpush2.msra.mxu0 0.0
        %1559 = vmatprep.subr.mxu0 0.0
        %1560 = vmatpush2.msra.mxu0 0.0
        %1561 = vmatprep.subr.mxu0 0.0
        %1562 = vmatpush2.msra.mxu0 0.0
        %1563 = vmatprep.subr.mxu0 0.0
        %1564 = vmatpush2.msra.mxu0 0.0
        %1565 = vmatprep.subr.mxu0 0.0
        %1566 = vmatpush2.msra.mxu0 0.0
        %1567 = vmatprep.subr.mxu0 0.0
        %1568 = vmatpush2.msra.mxu0 0.0
        %1569 = vmatprep.subr.mxu0 0.0
        %1570 = vmatpush2.msra.mxu0 0.0
        %1571 = vmatprep.subr.mxu0 0.0
        %1572 = vmatpush2.msra.mxu0 0.0
        %1573 = vmatprep.subr.mxu0 0.0
        %1574 = vmatpush2.msra.mxu0 0.0
        %1575 = vmatprep.subr.mxu0 0.0
        %1576 = vmatpush2.msra.mxu0 0.0
        %1577 = vmatprep.subr.mxu0 0.0
        %1578 = vmatpush2.msra.mxu0 0.0
        %1579 = vmatprep.subr.mxu0 0.0
        %1580 = vmatpush2.msra.mxu0 0.0
        %1581 = vmatprep.subr.mxu0 0.0
        %1582 = vmatpush2.msra.mxu0 0.0
        %1583 = vmatprep.mubr.f32.mxu0 0.0
        %1584 = vmatmul.mubr.f32.gmra.mxu0 %v1517
        %v1585 = vpop.f32.mrf.mxu0
        %v1586 = vadd.f32 0.0, %v1585
        %v1587 = vpop.f32.mrf.mxu0
        %1588 = vdwg.mxu0
        %v1589 = vadd.f32 %v1392, %v1586
        %v1590 = vld [vmem:[%s12] sm:$0x1]
        %v1592 = vlaneseq
        %v1593 = vshrl.u32 %v1592, 7
        %v1594 = vsub.s32 0, %v1593
        %v1595 = vrot.slane %v1590, %v1594
        %v1597 = vadd.f32 %v1589, %v1595
        %s1598 = scalar_lea.vmem %s1, 1
        %v1599 = vld [vmem:[%s1598] sm:$0x1]
        %s1600 = scalar_lea.vmem %s2, 1
        %v1601 = vld [vmem:[%s1600] sm:$0x1]
        %v1602 = vsel %vm497, %v1597, 0.0
        %1603 = vadd.xlane.f32.xlu0 %v1602
        %v1604 = vpop.xlane.xlu0 %1603
        %v1605 = vmul.f32 %v1604, %v501
        %v1606 = vsub.f32 %v1597, %v1605
        %v1607 = vmul.f32 %v1606, %v1606
        %v1608 = vsel %vm497, %v1607, 0.0
        %1609 = vadd.xlane.f32.xlu0 %v1608
        %v1610 = vpop.xlane.xlu0 %1609
        %v1611 = vmul.f32 %v1610, %v501
        %v1612 = vadd.f32 %v1611, 1e-05
        %v1613 = vrsqrt.pop %v1612
        %v1614 = vmul.f32 %v1606, %v1613
        %v1616 = vlaneseq
        %v1617 = vshrl.u32 %v1616, 7
        %v1618 = vsub.s32 0, %v1617
        %v1619 = vrot.slane %v1599, %v1618
        %v1621 = vmul.f32 %v1614, %v1619
        %v1623 = vlaneseq
        %v1624 = vshrl.u32 %v1623, 7
        %v1625 = vsub.s32 0, %v1624
        %v1626 = vrot.slane %v1601, %v1625
        %v1628 = vadd.f32 %v1621, %v1626
        %s1629 = scalar_lea.vmem %s3, 32
        %v1630 = vld [vmem:[%s1629] sm:$0xff]
        %v1631 = vld [vmem:[%s1629 + $0x8] sm:$0xff]
        %v1632 = vld [vmem:[%s1629 + $0x10] sm:$0xff]
        %v1633 = vld [vmem:[%s1629 + $0x18] sm:$0xff]
        %s1634 = scalar_lea.vmem %s4, 1
        %v1635 = vld [vmem:[%s1634] sm:$0x1]
        %v1637 = vlaneseq
        %v1638 = vshrl.u32 %v1637, 7
        %v1639 = vsub.s32 0, %v1638
        %v1640 = vrot.slane %v1635, %v1639
        %v1643 = vsel %vm497, %v1628, 0
        %1645 = vmatprep.subr.mxu0 0.0
        %1646 = vmatpush1.msra.mxu0 0.0
        %1647 = vmatprep.subr.mxu0 0.0
        %1648 = vmatpush1.msra.mxu0 0.0
        %1649 = vmatprep.subr.mxu0 0.0
        %1650 = vmatpush1.msra.mxu0 0.0
        %1651 = vmatprep.subr.mxu0 0.0
        %1652 = vmatpush1.msra.mxu0 0.0
        %1653 = vmatprep.subr.mxu0 0.0
        %1654 = vmatpush1.msra.mxu0 0.0
        %1655 = vmatprep.subr.mxu0 0.0
        %1656 = vmatpush1.msra.mxu0 0.0
        %1657 = vmatprep.subr.mxu0 0.0
        %1658 = vmatpush1.msra.mxu0 0.0
        %1659 = vmatprep.subr.mxu0 0.0
        %1660 = vmatpush1.msra.mxu0 0.0
        %1661 = vmatprep.subr.mxu0 0.0
        %1662 = vmatpush1.msra.mxu0 0.0
        %1663 = vmatprep.subr.mxu0 0.0
        %1664 = vmatpush1.msra.mxu0 0.0
        %1665 = vmatprep.subr.mxu0 0.0
        %1666 = vmatpush1.msra.mxu0 0.0
        %1667 = vmatprep.subr.mxu0 0.0
        %1668 = vmatpush1.msra.mxu0 0.0
        %1669 = vmatprep.subr.mxu0 0.0
        %1670 = vmatpush1.msra.mxu0 %v1633
        %1671 = vmatprep.subr.mxu0 0.0
        %1672 = vmatpush1.msra.mxu0 %v1632
        %1673 = vmatprep.subr.mxu0 0.0
        %1674 = vmatpush1.msra.mxu0 %v1631
        %1675 = vmatprep.subr.mxu0 0.0
        %1676 = vmatpush1.msra.mxu0 %v1630
        %1677 = vmatprep.subr.mxu0 0.0
        %1678 = vmatpush2.msra.mxu0 0.0
        %1679 = vmatprep.subr.mxu0 0.0
        %1680 = vmatpush2.msra.mxu0 0.0
        %1681 = vmatprep.subr.mxu0 0.0
        %1682 = vmatpush2.msra.mxu0 0.0
        %1683 = vmatprep.subr.mxu0 0.0
        %1684 = vmatpush2.msra.mxu0 0.0
        %1685 = vmatprep.subr.mxu0 0.0
        %1686 = vmatpush2.msra.mxu0 0.0
        %1687 = vmatprep.subr.mxu0 0.0
        %1688 = vmatpush2.msra.mxu0 0.0
        %1689 = vmatprep.subr.mxu0 0.0
        %1690 = vmatpush2.msra.mxu0 0.0
        %1691 = vmatprep.subr.mxu0 0.0
        %1692 = vmatpush2.msra.mxu0 0.0
        %1693 = vmatprep.subr.mxu0 0.0
        %1694 = vmatpush2.msra.mxu0 0.0
        %1695 = vmatprep.subr.mxu0 0.0
        %1696 = vmatpush2.msra.mxu0 0.0
        %1697 = vmatprep.subr.mxu0 0.0
        %1698 = vmatpush2.msra.mxu0 0.0
        %1699 = vmatprep.subr.mxu0 0.0
        %1700 = vmatpush2.msra.mxu0 0.0
        %1701 = vmatprep.subr.mxu0 0.0
        %1702 = vmatpush2.msra.mxu0 0.0
        %1703 = vmatprep.subr.mxu0 0.0
        %1704 = vmatpush2.msra.mxu0 0.0
        %1705 = vmatprep.subr.mxu0 0.0
        %1706 = vmatpush2.msra.mxu0 0.0
        %1707 = vmatprep.subr.mxu0 0.0
        %1708 = vmatpush2.msra.mxu0 0.0
        %1709 = vmatprep.mubr.f32.mxu0 0.0
        %1710 = vmatmul.mubr.f32.gmra.mxu0 %v1643
        %v1711 = vpop.f32.mrf.mxu0
        %v1712 = vadd.f32 %v1640, %v1711
        %v1713 = vpop.f32.mrf.mxu0
        %1714 = vdwg.mxu0
        %1715 = vst.msk [vmem:[#allocation2] sm:$0xff] %vm610, %v1712
        %v1716 = vld [vmem:[#allocation2] sm:$0xff]
        %1718 = vrot.lane.b32.xlu0 %v1716, 96
        %v1719 = vpop.permute.xlu0 %1718
        %v1720 = vsel %vm616, %v1716, 0
        %v1722 = vsel %vm616, %v1719, 0
        %1724 = vmatprep.subr.mxu0 0.0
        %1725 = vmatpush1.xpose.msra.mxu0 0.0
        %1726 = vmatprep.subr.mxu0 0.0
        %1727 = vmatpush1.xpose.msra.mxu0 0.0
        %1728 = vmatprep.subr.mxu0 0.0
        %1729 = vmatpush1.xpose.msra.mxu0 0.0
        %1730 = vmatprep.subr.mxu0 0.0
        %1731 = vmatpush1.xpose.msra.mxu0 0.0
        %1732 = vmatprep.subr.mxu0 0.0
        %1733 = vmatpush1.xpose.msra.mxu0 0.0
        %1734 = vmatprep.subr.mxu0 0.0
        %1735 = vmatpush1.xpose.msra.mxu0 0.0
        %1736 = vmatprep.subr.mxu0 0.0
        %1737 = vmatpush1.xpose.msra.mxu0 0.0
        %1738 = vmatprep.subr.mxu0 0.0
        %1739 = vmatpush1.xpose.msra.mxu0 0.0
        %1740 = vmatprep.subr.mxu0 0.0
        %1741 = vmatpush1.xpose.msra.mxu0 0.0
        %1742 = vmatprep.subr.mxu0 0.0
        %1743 = vmatpush1.xpose.msra.mxu0 0.0
        %1744 = vmatprep.subr.mxu0 0.0
        %1745 = vmatpush1.xpose.msra.mxu0 0.0
        %1746 = vmatprep.subr.mxu0 0.0
        %1747 = vmatpush1.xpose.msra.mxu0 0.0
        %1748 = vmatprep.subr.mxu0 0.0
        %1749 = vmatpush1.xpose.msra.mxu0 0.0
        %1750 = vmatprep.subr.mxu0 0.0
        %1751 = vmatpush1.xpose.msra.mxu0 0.0
        %1752 = vmatprep.subr.mxu0 0.0
        %1753 = vmatpush1.xpose.msra.mxu0 0.0
        %1754 = vmatprep.subr.mxu0 0.0
        %1755 = vmatpush1.xpose.msra.mxu0 %v1722
        %1756 = vmatprep.subr.mxu0 0.0
        %1757 = vmatpush2.xpose.msra.mxu0 0.0
        %1758 = vmatprep.subr.mxu0 0.0
        %1759 = vmatpush2.xpose.msra.mxu0 0.0
        %1760 = vmatprep.subr.mxu0 0.0
        %1761 = vmatpush2.xpose.msra.mxu0 0.0
        %1762 = vmatprep.subr.mxu0 0.0
        %1763 = vmatpush2.xpose.msra.mxu0 0.0
        %1764 = vmatprep.subr.mxu0 0.0
        %1765 = vmatpush2.xpose.msra.mxu0 0.0
        %1766 = vmatprep.subr.mxu0 0.0
        %1767 = vmatpush2.xpose.msra.mxu0 0.0
        %1768 = vmatprep.subr.mxu0 0.0
        %1769 = vmatpush2.xpose.msra.mxu0 0.0
        %1770 = vmatprep.subr.mxu0 0.0
        %1771 = vmatpush2.xpose.msra.mxu0 0.0
        %1772 = vmatprep.subr.mxu0 0.0
        %1773 = vmatpush2.xpose.msra.mxu0 0.0
        %1774 = vmatprep.subr.mxu0 0.0
        %1775 = vmatpush2.xpose.msra.mxu0 0.0
        %1776 = vmatprep.subr.mxu0 0.0
        %1777 = vmatpush2.xpose.msra.mxu0 0.0
        %1778 = vmatprep.subr.mxu0 0.0
        %1779 = vmatpush2.xpose.msra.mxu0 0.0
        %1780 = vmatprep.subr.mxu0 0.0
        %1781 = vmatpush2.xpose.msra.mxu0 0.0
        %1782 = vmatprep.subr.mxu0 0.0
        %1783 = vmatpush2.xpose.msra.mxu0 0.0
        %1784 = vmatprep.subr.mxu0 0.0
        %1785 = vmatpush2.xpose.msra.mxu0 0.0
        %1786 = vmatprep.subr.mxu0 0.0
        %1787 = vmatpush2.xpose.msra.mxu0 0.0
        %1788 = vmatprep.mubr.f32.mxu0 0.0
        %1789 = vmatmul.mubr.f32.gmra.mxu0 %v1720
        %v1790 = vpop.f32.mrf.mxu0
        %v1791 = vadd.f32 0.0, %v1790
        %v1792 = vpop.f32.mrf.mxu0
        %1793 = vdwg.mxu0
        %v1794 = vmul.f32 %v1791, 0.35355338
        %v1795 = vsel %vm494, %v1794, -1e+30
        %v1796 = vsel %vm616, %v1795, -inf
        %1797 = vmax.xlane.f32.xlu0 %v1796
        %v1798 = vpop.xlane.xlu0 %1797
        %v1799 = vsub.f32 %v1795, %v1798
        %v1800 = vmul.f32 %v1799, 1.442695
        %v1801 = vpow.pop %v1800
        %v1802 = vsel %vm616, %v1801, 0.0
        %1803 = vadd.xlane.f32.xlu0 %v1802
        %v1804 = vpop.xlane.xlu0 %1803
        %v1805 = vrcp.pop %v1804
        %v1806 = vmul.f32 %v1801, %v1805
        %1807 = vrot.lane.b32.xlu0 %v1716, 64
        %v1808 = vpop.permute.xlu0 %1807
        %v1811 = vsel %vm616, %v1806, 0
        %1813 = vmatprep.subr.mxu0 0.0
        %1814 = vmatpush1.msra.mxu0 0.0
        %1815 = vmatprep.subr.mxu0 0.0
        %1816 = vmatpush1.msra.mxu0 0.0
        %1817 = vmatprep.subr.mxu0 0.0
        %1818 = vmatpush1.msra.mxu0 0.0
        %1819 = vmatprep.subr.mxu0 0.0
        %1820 = vmatpush1.msra.mxu0 0.0
        %1821 = vmatprep.subr.mxu0 0.0
        %1822 = vmatpush1.msra.mxu0 0.0
        %1823 = vmatprep.subr.mxu0 0.0
        %1824 = vmatpush1.msra.mxu0 0.0
        %1825 = vmatprep.subr.mxu0 0.0
        %1826 = vmatpush1.msra.mxu0 0.0
        %1827 = vmatprep.subr.mxu0 0.0
        %1828 = vmatpush1.msra.mxu0 0.0
        %1829 = vmatprep.subr.mxu0 0.0
        %1830 = vmatpush1.msra.mxu0 0.0
        %1831 = vmatprep.subr.mxu0 0.0
        %1832 = vmatpush1.msra.mxu0 0.0
        %1833 = vmatprep.subr.mxu0 0.0
        %1834 = vmatpush1.msra.mxu0 0.0
        %1835 = vmatprep.subr.mxu0 0.0
        %1836 = vmatpush1.msra.mxu0 0.0
        %1837 = vmatprep.subr.mxu0 0.0
        %1838 = vmatpush1.msra.mxu0 0.0
        %1839 = vmatprep.subr.mxu0 0.0
        %1840 = vmatpush1.msra.mxu0 0.0
        %1841 = vmatprep.subr.mxu0 0.0
        %1842 = vmatpush1.msra.mxu0 0.0
        %1843 = vmatprep.subr.mxu0 0.0
        %1844 = vmatpush1.msra.mxu0 %v1808
        %1845 = vmatprep.subr.mxu0 0.0
        %1846 = vmatpush2.msra.mxu0 0.0
        %1847 = vmatprep.subr.mxu0 0.0
        %1848 = vmatpush2.msra.mxu0 0.0
        %1849 = vmatprep.subr.mxu0 0.0
        %1850 = vmatpush2.msra.mxu0 0.0
        %1851 = vmatprep.subr.mxu0 0.0
        %1852 = vmatpush2.msra.mxu0 0.0
        %1853 = vmatprep.subr.mxu0 0.0
        %1854 = vmatpush2.msra.mxu0 0.0
        %1855 = vmatprep.subr.mxu0 0.0
        %1856 = vmatpush2.msra.mxu0 0.0
        %1857 = vmatprep.subr.mxu0 0.0
        %1858 = vmatpush2.msra.mxu0 0.0
        %1859 = vmatprep.subr.mxu0 0.0
        %1860 = vmatpush2.msra.mxu0 0.0
        %1861 = vmatprep.subr.mxu0 0.0
        %1862 = vmatpush2.msra.mxu0 0.0
        %1863 = vmatprep.subr.mxu0 0.0
        %1864 = vmatpush2.msra.mxu0 0.0
        %1865 = vmatprep.subr.mxu0 0.0
        %1866 = vmatpush2.msra.mxu0 0.0
        %1867 = vmatprep.subr.mxu0 0.0
        %1868 = vmatpush2.msra.mxu0 0.0
        %1869 = vmatprep.subr.mxu0 0.0
        %1870 = vmatpush2.msra.mxu0 0.0
        %1871 = vmatprep.subr.mxu0 0.0
        %1872 = vmatpush2.msra.mxu0 0.0
        %1873 = vmatprep.subr.mxu0 0.0
        %1874 = vmatpush2.msra.mxu0 0.0
        %1875 = vmatprep.subr.mxu0 0.0
        %1876 = vmatpush2.msra.mxu0 0.0
        %1877 = vmatprep.mubr.f32.mxu0 0.0
        %1878 = vmatmul.mubr.f32.gmra.mxu0 %v1811
        %v1879 = vpop.f32.mrf.mxu0
        %v1880 = vadd.f32 0.0, %v1879
        %v1881 = vpop.f32.mrf.mxu0
        %1882 = vdwg.mxu0
        %1883 = vst.msk [vmem:[#allocation3] sm:$0xff] %vm616, %v1880
        %v1884 = vld [vmem:[#allocation2] sm:$0xff]
        %1886 = vrot.lane.b32.xlu0 %v1884, 120
        %v1887 = vpop.permute.xlu0 %1886
        %1888 = vrot.lane.b32.xlu0 %v1884, 88
        %v1889 = vpop.permute.xlu0 %1888
        %v1890 = vsel %vm616, %v1887, 0
        %v1892 = vsel %vm616, %v1889, 0
        %1894 = vmatprep.subr.mxu0 0.0
        %1895 = vmatpush1.xpose.msra.mxu0 0.0
        %1896 = vmatprep.subr.mxu0 0.0
        %1897 = vmatpush1.xpose.msra.mxu0 0.0
        %1898 = vmatprep.subr.mxu0 0.0
        %1899 = vmatpush1.xpose.msra.mxu0 0.0
        %1900 = vmatprep.subr.mxu0 0.0
        %1901 = vmatpush1.xpose.msra.mxu0 0.0
        %1902 = vmatprep.subr.mxu0 0.0
        %1903 = vmatpush1.xpose.msra.mxu0 0.0
        %1904 = vmatprep.subr.mxu0 0.0
        %1905 = vmatpush1.xpose.msra.mxu0 0.0
        %1906 = vmatprep.subr.mxu0 0.0
        %1907 = vmatpush1.xpose.msra.mxu0 0.0
        %1908 = vmatprep.subr.mxu0 0.0
        %1909 = vmatpush1.xpose.msra.mxu0 0.0
        %1910 = vmatprep.subr.mxu0 0.0
        %1911 = vmatpush1.xpose.msra.mxu0 0.0
        %1912 = vmatprep.subr.mxu0 0.0
        %1913 = vmatpush1.xpose.msra.mxu0 0.0
        %1914 = vmatprep.subr.mxu0 0.0
        %1915 = vmatpush1.xpose.msra.mxu0 0.0
        %1916 = vmatprep.subr.mxu0 0.0
        %1917 = vmatpush1.xpose.msra.mxu0 0.0
        %1918 = vmatprep.subr.mxu0 0.0
        %1919 = vmatpush1.xpose.msra.mxu0 0.0
        %1920 = vmatprep.subr.mxu0 0.0
        %1921 = vmatpush1.xpose.msra.mxu0 0.0
        %1922 = vmatprep.subr.mxu0 0.0
        %1923 = vmatpush1.xpose.msra.mxu0 0.0
        %1924 = vmatprep.subr.mxu0 0.0
        %1925 = vmatpush1.xpose.msra.mxu0 %v1892
        %1926 = vmatprep.subr.mxu0 0.0
        %1927 = vmatpush2.xpose.msra.mxu0 0.0
        %1928 = vmatprep.subr.mxu0 0.0
        %1929 = vmatpush2.xpose.msra.mxu0 0.0
        %1930 = vmatprep.subr.mxu0 0.0
        %1931 = vmatpush2.xpose.msra.mxu0 0.0
        %1932 = vmatprep.subr.mxu0 0.0
        %1933 = vmatpush2.xpose.msra.mxu0 0.0
        %1934 = vmatprep.subr.mxu0 0.0
        %1935 = vmatpush2.xpose.msra.mxu0 0.0
        %1936 = vmatprep.subr.mxu0 0.0
        %1937 = vmatpush2.xpose.msra.mxu0 0.0
        %1938 = vmatprep.subr.mxu0 0.0
        %1939 = vmatpush2.xpose.msra.mxu0 0.0
        %1940 = vmatprep.subr.mxu0 0.0
        %1941 = vmatpush2.xpose.msra.mxu0 0.0
        %1942 = vmatprep.subr.mxu0 0.0
        %1943 = vmatpush2.xpose.msra.mxu0 0.0
        %1944 = vmatprep.subr.mxu0 0.0
        %1945 = vmatpush2.xpose.msra.mxu0 0.0
        %1946 = vmatprep.subr.mxu0 0.0
        %1947 = vmatpush2.xpose.msra.mxu0 0.0
        %1948 = vmatprep.subr.mxu0 0.0
        %1949 = vmatpush2.xpose.msra.mxu0 0.0
        %1950 = vmatprep.subr.mxu0 0.0
        %1951 = vmatpush2.xpose.msra.mxu0 0.0
        %1952 = vmatprep.subr.mxu0 0.0
        %1953 = vmatpush2.xpose.msra.mxu0 0.0
        %1954 = vmatprep.subr.mxu0 0.0
        %1955 = vmatpush2.xpose.msra.mxu0 0.0
        %1956 = vmatprep.subr.mxu0 0.0
        %1957 = vmatpush2.xpose.msra.mxu0 0.0
        %1958 = vmatprep.mubr.f32.mxu0 0.0
        %1959 = vmatmul.mubr.f32.gmra.mxu0 %v1890
        %v1960 = vpop.f32.mrf.mxu0
        %v1961 = vadd.f32 0.0, %v1960
        %v1962 = vpop.f32.mrf.mxu0
        %1963 = vdwg.mxu0
        %v1964 = vmul.f32 %v1961, 0.35355338
        %v1965 = vsel %vm494, %v1964, -1e+30
        %v1966 = vsel %vm616, %v1965, -inf
        %1967 = vmax.xlane.f32.xlu0 %v1966
        %v1968 = vpop.xlane.xlu0 %1967
        %v1969 = vsub.f32 %v1965, %v1968
        %v1970 = vmul.f32 %v1969, 1.442695
        %v1971 = vpow.pop %v1970
        %v1972 = vsel %vm616, %v1971, 0.0
        %1973 = vadd.xlane.f32.xlu0 %v1972
        %v1974 = vpop.xlane.xlu0 %1973
        %v1975 = vrcp.pop %v1974
        %v1976 = vmul.f32 %v1971, %v1975
        %1977 = vrot.lane.b32.xlu0 %v1884, 56
        %v1978 = vpop.permute.xlu0 %1977
        %v1981 = vsel %vm616, %v1976, 0
        %1983 = vmatprep.subr.mxu0 0.0
        %1984 = vmatpush1.msra.mxu0 0.0
        %1985 = vmatprep.subr.mxu0 0.0
        %1986 = vmatpush1.msra.mxu0 0.0
        %1987 = vmatprep.subr.mxu0 0.0
        %1988 = vmatpush1.msra.mxu0 0.0
        %1989 = vmatprep.subr.mxu0 0.0
        %1990 = vmatpush1.msra.mxu0 0.0
        %1991 = vmatprep.subr.mxu0 0.0
        %1992 = vmatpush1.msra.mxu0 0.0
        %1993 = vmatprep.subr.mxu0 0.0
        %1994 = vmatpush1.msra.mxu0 0.0
        %1995 = vmatprep.subr.mxu0 0.0
        %1996 = vmatpush1.msra.mxu0 0.0
        %1997 = vmatprep.subr.mxu0 0.0
        %1998 = vmatpush1.msra.mxu0 0.0
        %1999 = vmatprep.subr.mxu0 0.0
        %2000 = vmatpush1.msra.mxu0 0.0
        %2001 = vmatprep.subr.mxu0 0.0
        %2002 = vmatpush1.msra.mxu0 0.0
        %2003 = vmatprep.subr.mxu0 0.0
        %2004 = vmatpush1.msra.mxu0 0.0
        %2005 = vmatprep.subr.mxu0 0.0
        %2006 = vmatpush1.msra.mxu0 0.0
        %2007 = vmatprep.subr.mxu0 0.0
        %2008 = vmatpush1.msra.mxu0 0.0
        %2009 = vmatprep.subr.mxu0 0.0
        %2010 = vmatpush1.msra.mxu0 0.0
        %2011 = vmatprep.subr.mxu0 0.0
        %2012 = vmatpush1.msra.mxu0 0.0
        %2013 = vmatprep.subr.mxu0 0.0
        %2014 = vmatpush1.msra.mxu0 %v1978
        %2015 = vmatprep.subr.mxu0 0.0
        %2016 = vmatpush2.msra.mxu0 0.0
        %2017 = vmatprep.subr.mxu0 0.0
        %2018 = vmatpush2.msra.mxu0 0.0
        %2019 = vmatprep.subr.mxu0 0.0
        %2020 = vmatpush2.msra.mxu0 0.0
        %2021 = vmatprep.subr.mxu0 0.0
        %2022 = vmatpush2.msra.mxu0 0.0
        %2023 = vmatprep.subr.mxu0 0.0
        %2024 = vmatpush2.msra.mxu0 0.0
        %2025 = vmatprep.subr.mxu0 0.0
        %2026 = vmatpush2.msra.mxu0 0.0
        %2027 = vmatprep.subr.mxu0 0.0
        %2028 = vmatpush2.msra.mxu0 0.0
        %2029 = vmatprep.subr.mxu0 0.0
        %2030 = vmatpush2.msra.mxu0 0.0
        %2031 = vmatprep.subr.mxu0 0.0
        %2032 = vmatpush2.msra.mxu0 0.0
        %2033 = vmatprep.subr.mxu0 0.0
        %2034 = vmatpush2.msra.mxu0 0.0
        %2035 = vmatprep.subr.mxu0 0.0
        %2036 = vmatpush2.msra.mxu0 0.0
        %2037 = vmatprep.subr.mxu0 0.0
        %2038 = vmatpush2.msra.mxu0 0.0
        %2039 = vmatprep.subr.mxu0 0.0
        %2040 = vmatpush2.msra.mxu0 0.0
        %2041 = vmatprep.subr.mxu0 0.0
        %2042 = vmatpush2.msra.mxu0 0.0
        %2043 = vmatprep.subr.mxu0 0.0
        %2044 = vmatpush2.msra.mxu0 0.0
        %2045 = vmatprep.subr.mxu0 0.0
        %2046 = vmatpush2.msra.mxu0 0.0
        %2047 = vmatprep.mubr.f32.mxu0 0.0
        %2048 = vmatmul.mubr.f32.gmra.mxu0 %v1981
        %v2049 = vpop.f32.mrf.mxu0
        %v2050 = vadd.f32 0.0, %v2049
        %v2051 = vpop.f32.mrf.mxu0
        %2052 = vdwg.mxu0
        %2054 = vrot.lane.b32.xlu0 %v2050, 8
        %v2055 = vpop.permute.xlu0 %2054
        %2057 = vst.msk [vmem:[#allocation3] sm:$0xff] %vm954, %v2055
        %v2058 = vld [vmem:[#allocation2] sm:$0xff]
        %2060 = vrot.lane.b32.xlu0 %v2058, 112
        %v2061 = vpop.permute.xlu0 %2060
        %2062 = vrot.lane.b32.xlu0 %v2058, 80
        %v2063 = vpop.permute.xlu0 %2062
        %v2064 = vsel %vm616, %v2061, 0
        %v2066 = vsel %vm616, %v2063, 0
        %2068 = vmatprep.subr.mxu0 0.0
        %2069 = vmatpush1.xpose.msra.mxu0 0.0
        %2070 = vmatprep.subr.mxu0 0.0
        %2071 = vmatpush1.xpose.msra.mxu0 0.0
        %2072 = vmatprep.subr.mxu0 0.0
        %2073 = vmatpush1.xpose.msra.mxu0 0.0
        %2074 = vmatprep.subr.mxu0 0.0
        %2075 = vmatpush1.xpose.msra.mxu0 0.0
        %2076 = vmatprep.subr.mxu0 0.0
        %2077 = vmatpush1.xpose.msra.mxu0 0.0
        %2078 = vmatprep.subr.mxu0 0.0
        %2079 = vmatpush1.xpose.msra.mxu0 0.0
        %2080 = vmatprep.subr.mxu0 0.0
        %2081 = vmatpush1.xpose.msra.mxu0 0.0
        %2082 = vmatprep.subr.mxu0 0.0
        %2083 = vmatpush1.xpose.msra.mxu0 0.0
        %2084 = vmatprep.subr.mxu0 0.0
        %2085 = vmatpush1.xpose.msra.mxu0 0.0
        %2086 = vmatprep.subr.mxu0 0.0
        %2087 = vmatpush1.xpose.msra.mxu0 0.0
        %2088 = vmatprep.subr.mxu0 0.0
        %2089 = vmatpush1.xpose.msra.mxu0 0.0
        %2090 = vmatprep.subr.mxu0 0.0
        %2091 = vmatpush1.xpose.msra.mxu0 0.0
        %2092 = vmatprep.subr.mxu0 0.0
        %2093 = vmatpush1.xpose.msra.mxu0 0.0
        %2094 = vmatprep.subr.mxu0 0.0
        %2095 = vmatpush1.xpose.msra.mxu0 0.0
        %2096 = vmatprep.subr.mxu0 0.0
        %2097 = vmatpush1.xpose.msra.mxu0 0.0
        %2098 = vmatprep.subr.mxu0 0.0
        %2099 = vmatpush1.xpose.msra.mxu0 %v2066
        %2100 = vmatprep.subr.mxu0 0.0
        %2101 = vmatpush2.xpose.msra.mxu0 0.0
        %2102 = vmatprep.subr.mxu0 0.0
        %2103 = vmatpush2.xpose.msra.mxu0 0.0
        %2104 = vmatprep.subr.mxu0 0.0
        %2105 = vmatpush2.xpose.msra.mxu0 0.0
        %2106 = vmatprep.subr.mxu0 0.0
        %2107 = vmatpush2.xpose.msra.mxu0 0.0
        %2108 = vmatprep.subr.mxu0 0.0
        %2109 = vmatpush2.xpose.msra.mxu0 0.0
        %2110 = vmatprep.subr.mxu0 0.0
        %2111 = vmatpush2.xpose.msra.mxu0 0.0
        %2112 = vmatprep.subr.mxu0 0.0
        %2113 = vmatpush2.xpose.msra.mxu0 0.0
        %2114 = vmatprep.subr.mxu0 0.0
        %2115 = vmatpush2.xpose.msra.mxu0 0.0
        %2116 = vmatprep.subr.mxu0 0.0
        %2117 = vmatpush2.xpose.msra.mxu0 0.0
        %2118 = vmatprep.subr.mxu0 0.0
        %2119 = vmatpush2.xpose.msra.mxu0 0.0
        %2120 = vmatprep.subr.mxu0 0.0
        %2121 = vmatpush2.xpose.msra.mxu0 0.0
        %2122 = vmatprep.subr.mxu0 0.0
        %2123 = vmatpush2.xpose.msra.mxu0 0.0
        %2124 = vmatprep.subr.mxu0 0.0
        %2125 = vmatpush2.xpose.msra.mxu0 0.0
        %2126 = vmatprep.subr.mxu0 0.0
        %2127 = vmatpush2.xpose.msra.mxu0 0.0
        %2128 = vmatprep.subr.mxu0 0.0
        %2129 = vmatpush2.xpose.msra.mxu0 0.0
        %2130 = vmatprep.subr.mxu0 0.0
        %2131 = vmatpush2.xpose.msra.mxu0 0.0
        %2132 = vmatprep.mubr.f32.mxu0 0.0
        %2133 = vmatmul.mubr.f32.gmra.mxu0 %v2064
        %v2134 = vpop.f32.mrf.mxu0
        %v2135 = vadd.f32 0.0, %v2134
        %v2136 = vpop.f32.mrf.mxu0
        %2137 = vdwg.mxu0
        %v2138 = vmul.f32 %v2135, 0.35355338
        %v2139 = vsel %vm494, %v2138, -1e+30
        %v2140 = vsel %vm616, %v2139, -inf
        %2141 = vmax.xlane.f32.xlu0 %v2140
        %v2142 = vpop.xlane.xlu0 %2141
        %v2143 = vsub.f32 %v2139, %v2142
        %v2144 = vmul.f32 %v2143, 1.442695
        %v2145 = vpow.pop %v2144
        %v2146 = vsel %vm616, %v2145, 0.0
        %2147 = vadd.xlane.f32.xlu0 %v2146
        %v2148 = vpop.xlane.xlu0 %2147
        %v2149 = vrcp.pop %v2148
        %v2150 = vmul.f32 %v2145, %v2149
        %2151 = vrot.lane.b32.xlu0 %v2058, 48
        %v2152 = vpop.permute.xlu0 %2151
        %v2155 = vsel %vm616, %v2150, 0
        %2157 = vmatprep.subr.mxu0 0.0
        %2158 = vmatpush1.msra.mxu0 0.0
        %2159 = vmatprep.subr.mxu0 0.0
        %2160 = vmatpush1.msra.mxu0 0.0
        %2161 = vmatprep.subr.mxu0 0.0
        %2162 = vmatpush1.msra.mxu0 0.0
        %2163 = vmatprep.subr.mxu0 0.0
        %2164 = vmatpush1.msra.mxu0 0.0
        %2165 = vmatprep.subr.mxu0 0.0
        %2166 = vmatpush1.msra.mxu0 0.0
        %2167 = vmatprep.subr.mxu0 0.0
        %2168 = vmatpush1.msra.mxu0 0.0
        %2169 = vmatprep.subr.mxu0 0.0
        %2170 = vmatpush1.msra.mxu0 0.0
        %2171 = vmatprep.subr.mxu0 0.0
        %2172 = vmatpush1.msra.mxu0 0.0
        %2173 = vmatprep.subr.mxu0 0.0
        %2174 = vmatpush1.msra.mxu0 0.0
        %2175 = vmatprep.subr.mxu0 0.0
        %2176 = vmatpush1.msra.mxu0 0.0
        %2177 = vmatprep.subr.mxu0 0.0
        %2178 = vmatpush1.msra.mxu0 0.0
        %2179 = vmatprep.subr.mxu0 0.0
        %2180 = vmatpush1.msra.mxu0 0.0
        %2181 = vmatprep.subr.mxu0 0.0
        %2182 = vmatpush1.msra.mxu0 0.0
        %2183 = vmatprep.subr.mxu0 0.0
        %2184 = vmatpush1.msra.mxu0 0.0
        %2185 = vmatprep.subr.mxu0 0.0
        %2186 = vmatpush1.msra.mxu0 0.0
        %2187 = vmatprep.subr.mxu0 0.0
        %2188 = vmatpush1.msra.mxu0 %v2152
        %2189 = vmatprep.subr.mxu0 0.0
        %2190 = vmatpush2.msra.mxu0 0.0
        %2191 = vmatprep.subr.mxu0 0.0
        %2192 = vmatpush2.msra.mxu0 0.0
        %2193 = vmatprep.subr.mxu0 0.0
        %2194 = vmatpush2.msra.mxu0 0.0
        %2195 = vmatprep.subr.mxu0 0.0
        %2196 = vmatpush2.msra.mxu0 0.0
        %2197 = vmatprep.subr.mxu0 0.0
        %2198 = vmatpush2.msra.mxu0 0.0
        %2199 = vmatprep.subr.mxu0 0.0
        %2200 = vmatpush2.msra.mxu0 0.0
        %2201 = vmatprep.subr.mxu0 0.0
        %2202 = vmatpush2.msra.mxu0 0.0
        %2203 = vmatprep.subr.mxu0 0.0
        %2204 = vmatpush2.msra.mxu0 0.0
        %2205 = vmatprep.subr.mxu0 0.0
        %2206 = vmatpush2.msra.mxu0 0.0
        %2207 = vmatprep.subr.mxu0 0.0
        %2208 = vmatpush2.msra.mxu0 0.0
        %2209 = vmatprep.subr.mxu0 0.0
        %2210 = vmatpush2.msra.mxu0 0.0
        %2211 = vmatprep.subr.mxu0 0.0
        %2212 = vmatpush2.msra.mxu0 0.0
        %2213 = vmatprep.subr.mxu0 0.0
        %2214 = vmatpush2.msra.mxu0 0.0
        %2215 = vmatprep.subr.mxu0 0.0
        %2216 = vmatpush2.msra.mxu0 0.0
        %2217 = vmatprep.subr.mxu0 0.0
        %2218 = vmatpush2.msra.mxu0 0.0
        %2219 = vmatprep.subr.mxu0 0.0
        %2220 = vmatpush2.msra.mxu0 0.0
        %2221 = vmatprep.mubr.f32.mxu0 0.0
        %2222 = vmatmul.mubr.f32.gmra.mxu0 %v2155
        %v2223 = vpop.f32.mrf.mxu0
        %v2224 = vadd.f32 0.0, %v2223
        %v2225 = vpop.f32.mrf.mxu0
        %2226 = vdwg.mxu0
        %2228 = vrot.lane.b32.xlu0 %v2224, 16
        %v2229 = vpop.permute.xlu0 %2228
        %2231 = vst.msk [vmem:[#allocation3] sm:$0xff] %vm1129, %v2229
        %v2232 = vld [vmem:[#allocation2] sm:$0xff]
        %2234 = vrot.lane.b32.xlu0 %v2232, 104
        %v2235 = vpop.permute.xlu0 %2234
        %2236 = vrot.lane.b32.xlu0 %v2232, 72
        %v2237 = vpop.permute.xlu0 %2236
        %v2238 = vsel %vm616, %v2235, 0
        %v2240 = vsel %vm616, %v2237, 0
        %2242 = vmatprep.subr.mxu0 0.0
        %2243 = vmatpush1.xpose.msra.mxu0 0.0
        %2244 = vmatprep.subr.mxu0 0.0
        %2245 = vmatpush1.xpose.msra.mxu0 0.0
        %2246 = vmatprep.subr.mxu0 0.0
        %2247 = vmatpush1.xpose.msra.mxu0 0.0
        %2248 = vmatprep.subr.mxu0 0.0
        %2249 = vmatpush1.xpose.msra.mxu0 0.0
        %2250 = vmatprep.subr.mxu0 0.0
        %2251 = vmatpush1.xpose.msra.mxu0 0.0
        %2252 = vmatprep.subr.mxu0 0.0
        %2253 = vmatpush1.xpose.msra.mxu0 0.0
        %2254 = vmatprep.subr.mxu0 0.0
        %2255 = vmatpush1.xpose.msra.mxu0 0.0
        %2256 = vmatprep.subr.mxu0 0.0
        %2257 = vmatpush1.xpose.msra.mxu0 0.0
        %2258 = vmatprep.subr.mxu0 0.0
        %2259 = vmatpush1.xpose.msra.mxu0 0.0
        %2260 = vmatprep.subr.mxu0 0.0
        %2261 = vmatpush1.xpose.msra.mxu0 0.0
        %2262 = vmatprep.subr.mxu0 0.0
        %2263 = vmatpush1.xpose.msra.mxu0 0.0
        %2264 = vmatprep.subr.mxu0 0.0
        %2265 = vmatpush1.xpose.msra.mxu0 0.0
        %2266 = vmatprep.subr.mxu0 0.0
        %2267 = vmatpush1.xpose.msra.mxu0 0.0
        %2268 = vmatprep.subr.mxu0 0.0
        %2269 = vmatpush1.xpose.msra.mxu0 0.0
        %2270 = vmatprep.subr.mxu0 0.0
        %2271 = vmatpush1.xpose.msra.mxu0 0.0
        %2272 = vmatprep.subr.mxu0 0.0
        %2273 = vmatpush1.xpose.msra.mxu0 %v2240
        %2274 = vmatprep.subr.mxu0 0.0
        %2275 = vmatpush2.xpose.msra.mxu0 0.0
        %2276 = vmatprep.subr.mxu0 0.0
        %2277 = vmatpush2.xpose.msra.mxu0 0.0
        %2278 = vmatprep.subr.mxu0 0.0
        %2279 = vmatpush2.xpose.msra.mxu0 0.0
        %2280 = vmatprep.subr.mxu0 0.0
        %2281 = vmatpush2.xpose.msra.mxu0 0.0
        %2282 = vmatprep.subr.mxu0 0.0
        %2283 = vmatpush2.xpose.msra.mxu0 0.0
        %2284 = vmatprep.subr.mxu0 0.0
        %2285 = vmatpush2.xpose.msra.mxu0 0.0
        %2286 = vmatprep.subr.mxu0 0.0
        %2287 = vmatpush2.xpose.msra.mxu0 0.0
        %2288 = vmatprep.subr.mxu0 0.0
        %2289 = vmatpush2.xpose.msra.mxu0 0.0
        %2290 = vmatprep.subr.mxu0 0.0
        %2291 = vmatpush2.xpose.msra.mxu0 0.0
        %2292 = vmatprep.subr.mxu0 0.0
        %2293 = vmatpush2.xpose.msra.mxu0 0.0
        %2294 = vmatprep.subr.mxu0 0.0
        %2295 = vmatpush2.xpose.msra.mxu0 0.0
        %2296 = vmatprep.subr.mxu0 0.0
        %2297 = vmatpush2.xpose.msra.mxu0 0.0
        %2298 = vmatprep.subr.mxu0 0.0
        %2299 = vmatpush2.xpose.msra.mxu0 0.0
        %2300 = vmatprep.subr.mxu0 0.0
        %2301 = vmatpush2.xpose.msra.mxu0 0.0
        %2302 = vmatprep.subr.mxu0 0.0
        %2303 = vmatpush2.xpose.msra.mxu0 0.0
        %2304 = vmatprep.subr.mxu0 0.0
        %2305 = vmatpush2.xpose.msra.mxu0 0.0
        %2306 = vmatprep.mubr.f32.mxu0 0.0
        %2307 = vmatmul.mubr.f32.gmra.mxu0 %v2238
        %v2308 = vpop.f32.mrf.mxu0
        %v2309 = vadd.f32 0.0, %v2308
        %v2310 = vpop.f32.mrf.mxu0
        %2311 = vdwg.mxu0
        %v2312 = vmul.f32 %v2309, 0.35355338
        %v2313 = vsel %vm494, %v2312, -1e+30
        %v2314 = vsel %vm616, %v2313, -inf
        %2315 = vmax.xlane.f32.xlu0 %v2314
        %v2316 = vpop.xlane.xlu0 %2315
        %v2317 = vsub.f32 %v2313, %v2316
        %v2318 = vmul.f32 %v2317, 1.442695
        %v2319 = vpow.pop %v2318
        %v2320 = vsel %vm616, %v2319, 0.0
        %2321 = vadd.xlane.f32.xlu0 %v2320
        %v2322 = vpop.xlane.xlu0 %2321
        %v2323 = vrcp.pop %v2322
        %v2324 = vmul.f32 %v2319, %v2323
        %2325 = vrot.lane.b32.xlu0 %v2232, 40
        %v2326 = vpop.permute.xlu0 %2325
        %v2329 = vsel %vm616, %v2324, 0
        %2331 = vmatprep.subr.mxu0 0.0
        %2332 = vmatpush1.msra.mxu0 0.0
        %2333 = vmatprep.subr.mxu0 0.0
        %2334 = vmatpush1.msra.mxu0 0.0
        %2335 = vmatprep.subr.mxu0 0.0
        %2336 = vmatpush1.msra.mxu0 0.0
        %2337 = vmatprep.subr.mxu0 0.0
        %2338 = vmatpush1.msra.mxu0 0.0
        %2339 = vmatprep.subr.mxu0 0.0
        %2340 = vmatpush1.msra.mxu0 0.0
        %2341 = vmatprep.subr.mxu0 0.0
        %2342 = vmatpush1.msra.mxu0 0.0
        %2343 = vmatprep.subr.mxu0 0.0
        %2344 = vmatpush1.msra.mxu0 0.0
        %2345 = vmatprep.subr.mxu0 0.0
        %2346 = vmatpush1.msra.mxu0 0.0
        %2347 = vmatprep.subr.mxu0 0.0
        %2348 = vmatpush1.msra.mxu0 0.0
        %2349 = vmatprep.subr.mxu0 0.0
        %2350 = vmatpush1.msra.mxu0 0.0
        %2351 = vmatprep.subr.mxu0 0.0
        %2352 = vmatpush1.msra.mxu0 0.0
        %2353 = vmatprep.subr.mxu0 0.0
        %2354 = vmatpush1.msra.mxu0 0.0
        %2355 = vmatprep.subr.mxu0 0.0
        %2356 = vmatpush1.msra.mxu0 0.0
        %2357 = vmatprep.subr.mxu0 0.0
        %2358 = vmatpush1.msra.mxu0 0.0
        %2359 = vmatprep.subr.mxu0 0.0
        %2360 = vmatpush1.msra.mxu0 0.0
        %2361 = vmatprep.subr.mxu0 0.0
        %2362 = vmatpush1.msra.mxu0 %v2326
        %2363 = vmatprep.subr.mxu0 0.0
        %2364 = vmatpush2.msra.mxu0 0.0
        %2365 = vmatprep.subr.mxu0 0.0
        %2366 = vmatpush2.msra.mxu0 0.0
        %2367 = vmatprep.subr.mxu0 0.0
        %2368 = vmatpush2.msra.mxu0 0.0
        %2369 = vmatprep.subr.mxu0 0.0
        %2370 = vmatpush2.msra.mxu0 0.0
        %2371 = vmatprep.subr.mxu0 0.0
        %2372 = vmatpush2.msra.mxu0 0.0
        %2373 = vmatprep.subr.mxu0 0.0
        %2374 = vmatpush2.msra.mxu0 0.0
        %2375 = vmatprep.subr.mxu0 0.0
        %2376 = vmatpush2.msra.mxu0 0.0
        %2377 = vmatprep.subr.mxu0 0.0
        %2378 = vmatpush2.msra.mxu0 0.0
        %2379 = vmatprep.subr.mxu0 0.0
        %2380 = vmatpush2.msra.mxu0 0.0
        %2381 = vmatprep.subr.mxu0 0.0
        %2382 = vmatpush2.msra.mxu0 0.0
        %2383 = vmatprep.subr.mxu0 0.0
        %2384 = vmatpush2.msra.mxu0 0.0
        %2385 = vmatprep.subr.mxu0 0.0
        %2386 = vmatpush2.msra.mxu0 0.0
        %2387 = vmatprep.subr.mxu0 0.0
        %2388 = vmatpush2.msra.mxu0 0.0
        %2389 = vmatprep.subr.mxu0 0.0
        %2390 = vmatpush2.msra.mxu0 0.0
        %2391 = vmatprep.subr.mxu0 0.0
        %2392 = vmatpush2.msra.mxu0 0.0
        %2393 = vmatprep.subr.mxu0 0.0
        %2394 = vmatpush2.msra.mxu0 0.0
        %2395 = vmatprep.mubr.f32.mxu0 0.0
        %2396 = vmatmul.mubr.f32.gmra.mxu0 %v2329
        %v2397 = vpop.f32.mrf.mxu0
        %v2398 = vadd.f32 0.0, %v2397
        %v2399 = vpop.f32.mrf.mxu0
        %2400 = vdwg.mxu0
        %2402 = vrot.lane.b32.xlu0 %v2398, 24
        %v2403 = vpop.permute.xlu0 %2402
        %2405 = vst.msk [vmem:[#allocation3] sm:$0xff] %vm1304, %v2403
        %v2406 = vld [vmem:[#allocation3] sm:$0xff]
        %s2407 = scalar_lea.vmem %s5, 32
        %v2408 = vld [vmem:[%s2407] sm:$0xff]
        %v2409 = vld [vmem:[%s2407 + $0x8] sm:$0xff]
        %v2410 = vld [vmem:[%s2407 + $0x10] sm:$0xff]
        %v2411 = vld [vmem:[%s2407 + $0x18] sm:$0xff]
        %v2413 = vsel %vm497, %v2406, 0
        %2415 = vmatprep.subr.mxu0 0.0
        %2416 = vmatpush1.msra.mxu0 0.0
        %2417 = vmatprep.subr.mxu0 0.0
        %2418 = vmatpush1.msra.mxu0 0.0
        %2419 = vmatprep.subr.mxu0 0.0
        %2420 = vmatpush1.msra.mxu0 0.0
        %2421 = vmatprep.subr.mxu0 0.0
        %2422 = vmatpush1.msra.mxu0 0.0
        %2423 = vmatprep.subr.mxu0 0.0
        %2424 = vmatpush1.msra.mxu0 0.0
        %2425 = vmatprep.subr.mxu0 0.0
        %2426 = vmatpush1.msra.mxu0 0.0
        %2427 = vmatprep.subr.mxu0 0.0
        %2428 = vmatpush1.msra.mxu0 0.0
        %2429 = vmatprep.subr.mxu0 0.0
        %2430 = vmatpush1.msra.mxu0 0.0
        %2431 = vmatprep.subr.mxu0 0.0
        %2432 = vmatpush1.msra.mxu0 0.0
        %2433 = vmatprep.subr.mxu0 0.0
        %2434 = vmatpush1.msra.mxu0 0.0
        %2435 = vmatprep.subr.mxu0 0.0
        %2436 = vmatpush1.msra.mxu0 0.0
        %2437 = vmatprep.subr.mxu0 0.0
        %2438 = vmatpush1.msra.mxu0 0.0
        %2439 = vmatprep.subr.mxu0 0.0
        %2440 = vmatpush1.msra.mxu0 %v2411
        %2441 = vmatprep.subr.mxu0 0.0
        %2442 = vmatpush1.msra.mxu0 %v2410
        %2443 = vmatprep.subr.mxu0 0.0
        %2444 = vmatpush1.msra.mxu0 %v2409
        %2445 = vmatprep.subr.mxu0 0.0
        %2446 = vmatpush1.msra.mxu0 %v2408
        %2447 = vmatprep.subr.mxu0 0.0
        %2448 = vmatpush2.msra.mxu0 0.0
        %2449 = vmatprep.subr.mxu0 0.0
        %2450 = vmatpush2.msra.mxu0 0.0
        %2451 = vmatprep.subr.mxu0 0.0
        %2452 = vmatpush2.msra.mxu0 0.0
        %2453 = vmatprep.subr.mxu0 0.0
        %2454 = vmatpush2.msra.mxu0 0.0
        %2455 = vmatprep.subr.mxu0 0.0
        %2456 = vmatpush2.msra.mxu0 0.0
        %2457 = vmatprep.subr.mxu0 0.0
        %2458 = vmatpush2.msra.mxu0 0.0
        %2459 = vmatprep.subr.mxu0 0.0
        %2460 = vmatpush2.msra.mxu0 0.0
        %2461 = vmatprep.subr.mxu0 0.0
        %2462 = vmatpush2.msra.mxu0 0.0
        %2463 = vmatprep.subr.mxu0 0.0
        %2464 = vmatpush2.msra.mxu0 0.0
        %2465 = vmatprep.subr.mxu0 0.0
        %2466 = vmatpush2.msra.mxu0 0.0
        %2467 = vmatprep.subr.mxu0 0.0
        %2468 = vmatpush2.msra.mxu0 0.0
        %2469 = vmatprep.subr.mxu0 0.0
        %2470 = vmatpush2.msra.mxu0 0.0
        %2471 = vmatprep.subr.mxu0 0.0
        %2472 = vmatpush2.msra.mxu0 0.0
        %2473 = vmatprep.subr.mxu0 0.0
        %2474 = vmatpush2.msra.mxu0 0.0
        %2475 = vmatprep.subr.mxu0 0.0
        %2476 = vmatpush2.msra.mxu0 0.0
        %2477 = vmatprep.subr.mxu0 0.0
        %2478 = vmatpush2.msra.mxu0 0.0
        %2479 = vmatprep.mubr.f32.mxu0 0.0
        %2480 = vmatmul.mubr.f32.gmra.mxu0 %v2413
        %v2481 = vpop.f32.mrf.mxu0
        %v2482 = vadd.f32 0.0, %v2481
        %v2483 = vpop.f32.mrf.mxu0
        %2484 = vdwg.mxu0
        %v2485 = vadd.f32 %v1597, %v2482
        %s2486 = scalar_lea.vmem %s6, 1
        %v2487 = vld [vmem:[%s2486] sm:$0x1]
        %v2489 = vlaneseq
        %v2490 = vshrl.u32 %v2489, 7
        %v2491 = vsub.s32 0, %v2490
        %v2492 = vrot.slane %v2487, %v2491
        %v2494 = vadd.f32 %v2485, %v2492
        %s2495 = scalar_lea.vmem %s7, 1
        %v2496 = vld [vmem:[%s2495] sm:$0x1]
        %s2497 = scalar_lea.vmem %s8, 1
        %v2498 = vld [vmem:[%s2497] sm:$0x1]
        %v2499 = vsel %vm497, %v2494, 0.0
        %2500 = vadd.xlane.f32.xlu0 %v2499
        %v2501 = vpop.xlane.xlu0 %2500
        %v2502 = vmul.f32 %v2501, %v501
        %v2503 = vsub.f32 %v2494, %v2502
        %v2504 = vmul.f32 %v2503, %v2503
        %v2505 = vsel %vm497, %v2504, 0.0
        %2506 = vadd.xlane.f32.xlu0 %v2505
        %v2507 = vpop.xlane.xlu0 %2506
        %v2508 = vmul.f32 %v2507, %v501
        %v2509 = vadd.f32 %v2508, 1e-05
        %v2510 = vrsqrt.pop %v2509
        %v2511 = vmul.f32 %v2503, %v2510
        %v2513 = vlaneseq
        %v2514 = vshrl.u32 %v2513, 7
        %v2515 = vsub.s32 0, %v2514
        %v2516 = vrot.slane %v2496, %v2515
        %v2518 = vmul.f32 %v2511, %v2516
        %v2520 = vlaneseq
        %v2521 = vshrl.u32 %v2520, 7
        %v2522 = vsub.s32 0, %v2521
        %v2523 = vrot.slane %v2498, %v2522
        %v2525 = vadd.f32 %v2518, %v2523
        %s2526 = scalar_lea.vmem %s9, 32
        %v2527 = vld [vmem:[%s2526] sm:$0xff]
        %v2528 = vld [vmem:[%s2526 + $0x8] sm:$0xff]
        %v2529 = vld [vmem:[%s2526 + $0x10] sm:$0xff]
        %v2530 = vld [vmem:[%s2526 + $0x18] sm:$0xff]
        %s2531 = scalar_lea.vmem %s10, 1
        %v2532 = vld [vmem:[%s2531] sm:$0x1]
        %v2534 = vlaneseq
        %v2535 = vshrl.u32 %v2534, 7
        %v2536 = vsub.s32 0, %v2535
        %v2537 = vrot.slane %v2532, %v2536
        %v2540 = vsel %vm497, %v2525, 0
        %2542 = vmatprep.subr.mxu0 0.0
        %2543 = vmatpush1.msra.mxu0 0.0
        %2544 = vmatprep.subr.mxu0 0.0
        %2545 = vmatpush1.msra.mxu0 0.0
        %2546 = vmatprep.subr.mxu0 0.0
        %2547 = vmatpush1.msra.mxu0 0.0
        %2548 = vmatprep.subr.mxu0 0.0
        %2549 = vmatpush1.msra.mxu0 0.0
        %2550 = vmatprep.subr.mxu0 0.0
        %2551 = vmatpush1.msra.mxu0 0.0
        %2552 = vmatprep.subr.mxu0 0.0
        %2553 = vmatpush1.msra.mxu0 0.0
        %2554 = vmatprep.subr.mxu0 0.0
        %2555 = vmatpush1.msra.mxu0 0.0
        %2556 = vmatprep.subr.mxu0 0.0
        %2557 = vmatpush1.msra.mxu0 0.0
        %2558 = vmatprep.subr.mxu0 0.0
        %2559 = vmatpush1.msra.mxu0 0.0
        %2560 = vmatprep.subr.mxu0 0.0
        %2561 = vmatpush1.msra.mxu0 0.0
        %2562 = vmatprep.subr.mxu0 0.0
        %2563 = vmatpush1.msra.mxu0 0.0
        %2564 = vmatprep.subr.mxu0 0.0
        %2565 = vmatpush1.msra.mxu0 0.0
        %2566 = vmatprep.subr.mxu0 0.0
        %2567 = vmatpush1.msra.mxu0 %v2530
        %2568 = vmatprep.subr.mxu0 0.0
        %2569 = vmatpush1.msra.mxu0 %v2529
        %2570 = vmatprep.subr.mxu0 0.0
        %2571 = vmatpush1.msra.mxu0 %v2528
        %2572 = vmatprep.subr.mxu0 0.0
        %2573 = vmatpush1.msra.mxu0 %v2527
        %2574 = vmatprep.subr.mxu0 0.0
        %2575 = vmatpush2.msra.mxu0 0.0
        %2576 = vmatprep.subr.mxu0 0.0
        %2577 = vmatpush2.msra.mxu0 0.0
        %2578 = vmatprep.subr.mxu0 0.0
        %2579 = vmatpush2.msra.mxu0 0.0
        %2580 = vmatprep.subr.mxu0 0.0
        %2581 = vmatpush2.msra.mxu0 0.0
        %2582 = vmatprep.subr.mxu0 0.0
        %2583 = vmatpush2.msra.mxu0 0.0
        %2584 = vmatprep.subr.mxu0 0.0
        %2585 = vmatpush2.msra.mxu0 0.0
        %2586 = vmatprep.subr.mxu0 0.0
        %2587 = vmatpush2.msra.mxu0 0.0
        %2588 = vmatprep.subr.mxu0 0.0
        %2589 = vmatpush2.msra.mxu0 0.0
        %2590 = vmatprep.subr.mxu0 0.0
        %2591 = vmatpush2.msra.mxu0 0.0
        %2592 = vmatprep.subr.mxu0 0.0
        %2593 = vmatpush2.msra.mxu0 0.0
        %2594 = vmatprep.subr.mxu0 0.0
        %2595 = vmatpush2.msra.mxu0 0.0
        %2596 = vmatprep.subr.mxu0 0.0
        %2597 = vmatpush2.msra.mxu0 0.0
        %2598 = vmatprep.subr.mxu0 0.0
        %2599 = vmatpush2.msra.mxu0 0.0
        %2600 = vmatprep.subr.mxu0 0.0
        %2601 = vmatpush2.msra.mxu0 0.0
        %2602 = vmatprep.subr.mxu0 0.0
        %2603 = vmatpush2.msra.mxu0 0.0
        %2604 = vmatprep.subr.mxu0 0.0
        %2605 = vmatpush2.msra.mxu0 0.0
        %2606 = vmatprep.mubr.f32.mxu0 0.0
        %2607 = vmatmul.mubr.f32.gmra.mxu0 %v2540
        %v2608 = vpop.f32.mrf.mxu0
        %v2609 = vadd.f32 %v2537, %v2608
        %v2610 = vpop.f32.mrf.mxu0
        %2611 = vdwg.mxu0
        %v2612 = vmax.f32 %v2609, 0.0
        %s2613 = scalar_lea.vmem %s11, 64
        %v2614 = vld [vmem:[%s2613] sm:$0xff]
        %v2615 = vld [vmem:[%s2613 + $0x8] sm:$0xff]
        %v2616 = vld [vmem:[%s2613 + $0x10] sm:$0xff]
        %v2617 = vld [vmem:[%s2613 + $0x18] sm:$0xff]
        %v2618 = vld [vmem:[%s2613 + $0x20] sm:$0xff]
        %v2619 = vld [vmem:[%s2613 + $0x28] sm:$0xff]
        %v2620 = vld [vmem:[%s2613 + $0x30] sm:$0xff]
        %v2621 = vld [vmem:[%s2613 + $0x38] sm:$0xff]
        %v2623 = vsel %vm1515, %v2612, 0
        %2625 = vmatprep.subr.mxu0 0.0
        %2626 = vmatpush1.msra.mxu0 0.0
        %2627 = vmatprep.subr.mxu0 0.0
        %2628 = vmatpush1.msra.mxu0 0.0
        %2629 = vmatprep.subr.mxu0 0.0
        %2630 = vmatpush1.msra.mxu0 0.0
        %2631 = vmatprep.subr.mxu0 0.0
        %2632 = vmatpush1.msra.mxu0 0.0
        %2633 = vmatprep.subr.mxu0 0.0
        %2634 = vmatpush1.msra.mxu0 0.0
        %2635 = vmatprep.subr.mxu0 0.0
        %2636 = vmatpush1.msra.mxu0 0.0
        %2637 = vmatprep.subr.mxu0 0.0
        %2638 = vmatpush1.msra.mxu0 0.0
        %2639 = vmatprep.subr.mxu0 0.0
        %2640 = vmatpush1.msra.mxu0 0.0
        %2641 = vmatprep.subr.mxu0 0.0
        %2642 = vmatpush1.msra.mxu0 %v2621
        %2643 = vmatprep.subr.mxu0 0.0
        %2644 = vmatpush1.msra.mxu0 %v2620
        %2645 = vmatprep.subr.mxu0 0.0
        %2646 = vmatpush1.msra.mxu0 %v2619
        %2647 = vmatprep.subr.mxu0 0.0
        %2648 = vmatpush1.msra.mxu0 %v2618
        %2649 = vmatprep.subr.mxu0 0.0
        %2650 = vmatpush1.msra.mxu0 %v2617
        %2651 = vmatprep.subr.mxu0 0.0
        %2652 = vmatpush1.msra.mxu0 %v2616
        %2653 = vmatprep.subr.mxu0 0.0
        %2654 = vmatpush1.msra.mxu0 %v2615
        %2655 = vmatprep.subr.mxu0 0.0
        %2656 = vmatpush1.msra.mxu0 %v2614
        %2657 = vmatprep.subr.mxu0 0.0
        %2658 = vmatpush2.msra.mxu0 0.0
        %2659 = vmatprep.subr.mxu0 0.0
        %2660 = vmatpush2.msra.mxu0 0.0
        %2661 = vmatprep.subr.mxu0 0.0
        %2662 = vmatpush2.msra.mxu0 0.0
        %2663 = vmatprep.subr.mxu0 0.0
        %2664 = vmatpush2.msra.mxu0 0.0
        %2665 = vmatprep.subr.mxu0 0.0
        %2666 = vmatpush2.msra.mxu0 0.0
        %2667 = vmatprep.subr.mxu0 0.0
        %2668 = vmatpush2.msra.mxu0 0.0
        %2669 = vmatprep.subr.mxu0 0.0
        %2670 = vmatpush2.msra.mxu0 0.0
        %2671 = vmatprep.subr.mxu0 0.0
        %2672 = vmatpush2.msra.mxu0 0.0
        %2673 = vmatprep.subr.mxu0 0.0
        %2674 = vmatpush2.msra.mxu0 0.0
        %2675 = vmatprep.subr.mxu0 0.0
        %2676 = vmatpush2.msra.mxu0 0.0
        %2677 = vmatprep.subr.mxu0 0.0
        %2678 = vmatpush2.msra.mxu0 0.0
        %2679 = vmatprep.subr.mxu0 0.0
        %2680 = vmatpush2.msra.mxu0 0.0
        %2681 = vmatprep.subr.mxu0 0.0
        %2682 = vmatpush2.msra.mxu0 0.0
        %2683 = vmatprep.subr.mxu0 0.0
        %2684 = vmatpush2.msra.mxu0 0.0
        %2685 = vmatprep.subr.mxu0 0.0
        %2686 = vmatpush2.msra.mxu0 0.0
        %2687 = vmatprep.subr.mxu0 0.0
        %2688 = vmatpush2.msra.mxu0 0.0
        %2689 = vmatprep.mubr.f32.mxu0 0.0
        %2690 = vmatmul.mubr.f32.gmra.mxu0 %v2623
        %v2691 = vpop.f32.mrf.mxu0
        %v2692 = vadd.f32 0.0, %v2691
        %v2693 = vpop.f32.mrf.mxu0
        %2694 = vdwg.mxu0
        %v2695 = vadd.f32 %v2494, %v2692
        %s2696 = scalar_lea.vmem %s12, 1
        %v2697 = vld [vmem:[%s2696] sm:$0x1]
        %v2699 = vlaneseq
        %v2700 = vshrl.u32 %v2699, 7
        %v2701 = vsub.s32 0, %v2700
        %v2702 = vrot.slane %v2697, %v2701
        %v2704 = vadd.f32 %v2695, %v2702
        %2705 = vst.msk [vmem:[#allocation3] sm:$0xff] %vm497, %v2704
        %v2706 = vld [vmem:[#allocation3 + $0x7] sm:$0x1]
        %v2707 = vld [vmem:[%s13] sm:$0xff]
        %v2708 = vld [vmem:[%s13 + $0x8] sm:$0xff]
        %v2709 = vld [vmem:[%s13 + $0x10] sm:$0xff]
        %v2710 = vld [vmem:[%s13 + $0x18] sm:$0xff]
        %v2711 = vld [vmem:[%s14] sm:$0x1]
        %v2713 = vsel %vm497, %v2706, 0
        %2715 = vmatprep.subr.mxu0 0.0
        %2716 = vmatpush1.msra.mxu0 0.0
        %2717 = vmatprep.subr.mxu0 0.0
        %2718 = vmatpush1.msra.mxu0 0.0
        %2719 = vmatprep.subr.mxu0 0.0
        %2720 = vmatpush1.msra.mxu0 0.0
        %2721 = vmatprep.subr.mxu0 0.0
        %2722 = vmatpush1.msra.mxu0 0.0
        %2723 = vmatprep.subr.mxu0 0.0
        %2724 = vmatpush1.msra.mxu0 0.0
        %2725 = vmatprep.subr.mxu0 0.0
        %2726 = vmatpush1.msra.mxu0 0.0
        %2727 = vmatprep.subr.mxu0 0.0
        %2728 = vmatpush1.msra.mxu0 0.0
        %2729 = vmatprep.subr.mxu0 0.0
        %2730 = vmatpush1.msra.mxu0 0.0
        %2731 = vmatprep.subr.mxu0 0.0
        %2732 = vmatpush1.msra.mxu0 0.0
        %2733 = vmatprep.subr.mxu0 0.0
        %2734 = vmatpush1.msra.mxu0 0.0
        %2735 = vmatprep.subr.mxu0 0.0
        %2736 = vmatpush1.msra.mxu0 0.0
        %2737 = vmatprep.subr.mxu0 0.0
        %2738 = vmatpush1.msra.mxu0 0.0
        %2739 = vmatprep.subr.mxu0 0.0
        %2740 = vmatpush1.msra.mxu0 %v2710
        %2741 = vmatprep.subr.mxu0 0.0
        %2742 = vmatpush1.msra.mxu0 %v2709
        %2743 = vmatprep.subr.mxu0 0.0
        %2744 = vmatpush1.msra.mxu0 %v2708
        %2745 = vmatprep.subr.mxu0 0.0
        %2746 = vmatpush1.msra.mxu0 %v2707
        %2747 = vmatprep.subr.mxu0 0.0
        %2748 = vmatpush2.msra.mxu0 0.0
        %2749 = vmatprep.subr.mxu0 0.0
        %2750 = vmatpush2.msra.mxu0 0.0
        %2751 = vmatprep.subr.mxu0 0.0
        %2752 = vmatpush2.msra.mxu0 0.0
        %2753 = vmatprep.subr.mxu0 0.0
        %2754 = vmatpush2.msra.mxu0 0.0
        %2755 = vmatprep.subr.mxu0 0.0
        %2756 = vmatpush2.msra.mxu0 0.0
        %2757 = vmatprep.subr.mxu0 0.0
        %2758 = vmatpush2.msra.mxu0 0.0
        %2759 = vmatprep.subr.mxu0 0.0
        %2760 = vmatpush2.msra.mxu0 0.0
        %2761 = vmatprep.subr.mxu0 0.0
        %2762 = vmatpush2.msra.mxu0 0.0
        %2763 = vmatprep.subr.mxu0 0.0
        %2764 = vmatpush2.msra.mxu0 0.0
        %2765 = vmatprep.subr.mxu0 0.0
        %2766 = vmatpush2.msra.mxu0 0.0
        %2767 = vmatprep.subr.mxu0 0.0
        %2768 = vmatpush2.msra.mxu0 0.0
        %2769 = vmatprep.subr.mxu0 0.0
        %2770 = vmatpush2.msra.mxu0 0.0
        %2771 = vmatprep.subr.mxu0 0.0
        %2772 = vmatpush2.msra.mxu0 0.0
        %2773 = vmatprep.subr.mxu0 0.0
        %2774 = vmatpush2.msra.mxu0 0.0
        %2775 = vmatprep.subr.mxu0 0.0
        %2776 = vmatpush2.msra.mxu0 0.0
        %2777 = vmatprep.subr.mxu0 0.0
        %2778 = vmatpush2.msra.mxu0 0.0
        %2779 = vmatprep.mubr.f32.mxu0 0.0
        %2780 = vmatmul.mubr.f32.gmra.mxu0 %v2713
        %v2781 = vpop.f32.mrf.mxu0
        %v2782 = vadd.f32 %v2711, %v2781
        %v2783 = vpop.f32.mrf.mxu0
        %2784 = vdwg.mxu0
        %vm2785 = vcmask 516096
        %v2786 = vsel %vm2785, %v2782, -inf
        %2787 = vmax.xlane.f32.xlu0 %v2786
        %v2788 = vpop.xlane.xlu0 %2787
        %v2789 = vsub.f32 %v2782, %v2788
        %v2790 = vmul.f32 %v2789, 1.442695
        %v2791 = vpow.pop %v2790
        %v2792 = vsel %vm2785, %v2791, 0.0
        %2793 = vadd.xlane.f32.xlu0 %v2792
        %v2794 = vpop.xlane.xlu0 %2793
        %v2795 = vrcp.pop %v2794
        %v2796 = vmul.f32 %v2791, %v2795
        %2797 = vst.msk [vmem:[%s484] sm:$0x1] %vm2785, %v2796
        %s2798 = sand.u32 %s357, 1
        %s2799 = scalar_lea.sflag [#allocation5], %s2798
        %s2800 = sand.u32 %s357, 1
        %s2801 = scalar_lea.vmem [#allocation4], %s2800
        // Predicated region
        $region81: #{roodecat_lm_forward.1} parent=79 // pred_check
          %p2802 = pneg %p367
        $region82: #{roodecat_lm_forward.1} parent=79 // pred_check_branch
          %2804 = sbr.rel (%p2802) target = $region84
        $region83: #{roodecat_lm_forward.1} parent=79 // pred_region
          %s2806 = ssub.s32 16, 16
          %2807 = vsyncadd %s2799, %s2806
          %s2808 = smul.addr %s29, 16
          %s2809 = scalar_lea.hbm %s15, %s2808
          %s2811 = sshll.u32 %s2801, 4
          %s2812 = int_to_ptr.vmem [resolvable:$true] %s2811
          %2814 = dma.vmem_to_hbm [thread:$0]  %s2812, 16, %s2809, %s2799
        $region84: #{roodecat_lm_forward.1} parent=79 // pred_fallthru
          _
      $region80: #{roodecat_lm_forward.1} parent=5 // pred_fallthru
        _
      %p2815 = scmp.le.s32.totalorder 2, %s24
      // Predicated region
      $region85: #{roodecat_lm_forward.1} parent=5 // pred_check
        %p2816 = pneg %p2815
      $region86: #{roodecat_lm_forward.1} parent=5 // pred_check_branch
        %2818 = sbr.rel (%p2816) target = $region88
      $region87: #{roodecat_lm_forward.1} parent=5 // pred_region
        %s2819 = ssub.s32 %s24, 2
        // Predicated region
        $region89: #{roodecat_lm_forward.1} parent=87 // pred_check
          %p2820 = pneg %p373
        $region90: #{roodecat_lm_forward.1} parent=87 // pred_check_branch
          %2822 = sbr.rel (%p2820) target = $region92
        $region91: #{roodecat_lm_forward.1} parent=87 // pred_region
          %s2823 = sand.u32 %s358, 1
          %s2824 = scalar_lea.sflag [#allocation5], %s2823
          %s2825 = sand.u32 %s358, 1
          %s2826 = scalar_lea.vmem [#allocation4], %s2825
          %2827 = dma.done %s2824, 16
        $region92: #{roodecat_lm_forward.1} parent=87 // pred_fallthru
          _
      $region88: #{roodecat_lm_forward.1} parent=5 // pred_fallthru
        _
    $region6: #{roodecat_lm_forward.1} parent=1 // loop_footer
      %s28 = sadd.s32 1, %s24
    $region7: #{roodecat_lm_forward.1} parent=1 // loop_footer_branch
      %23 = sbr.rel target = $region3
    $region8: #{roodecat_lm_forward.1} parent=1 // loop_exit
      _
    %2828 = vsyncpa [#allocation5], 1
    %s2829 = scalar_lea.sflag [#allocation5], 1
    %2830 = vsyncpa %s2829, 1

</llo_original>
